<compile_context>
chip_gen: v7x
topology: tpu7x:2x2x1
jax: 0.10.0
libtpu: 0.0.40
codegen_flags: <defaults>
</compile_context>

<pallas_src>
import numpy as np
import jax
import jax.numpy as jnp
from jax.experimental import pallas as pl
from jax.experimental.pallas import tpu as pltpu

LANE = 128


# ------------------------------ fused kernel ------------------------------- #

def _lenet_kernel(x_ref, w1_ref, b1_ref, s1e_ref, s1o_ref,
                  w2_ref, b2_ref, s2e_ref, s2o_ref,
                  wf1_ref, bf1_ref, wf2_ref, bf2_ref, wf3_ref, bf3_ref,
                  out_ref):
    f32 = jnp.float32

    # conv1 (+bias+ReLU): 3 (C_in) x 5 (kh) row-shifted matmuls, Toeplitz RHS.
    acc1 = None
    for ci in range(3):
        for i in range(5):
            lhs = x_ref[0, ci, i:i + 28, :]                        # (28, 32)
            t = jnp.dot(lhs, w1_ref[ci, i], preferred_element_type=f32)
            acc1 = t if acc1 is None else acc1 + t
    acc1 = jnp.maximum(acc1 + b1_ref[...], 0.0)                    # (28, 256)

    # pool1: width pairs live in the two 128-lane halves; height pairs via
    # 0/1 selection matmuls (keeps everything on the MXU, no strided loads).
    cm1 = jnp.maximum(acc1[:, :LANE], acc1[:, LANE:])              # (28, 128)
    p1 = jnp.maximum(jnp.dot(s1e_ref[...], cm1, preferred_element_type=f32),
                     jnp.dot(s1o_ref[...], cm1, preferred_element_type=f32))
    # p1: (14, 128), cols = w*6 + c (84 real, rest zero)

    # conv2 (+bias+ReLU): 5 row-shifted matmuls.
    acc2 = None
    for i in range(5):
        t = jnp.dot(p1[i:i + 10, :], w2_ref[i], preferred_element_type=f32)
        acc2 = t if acc2 is None else acc2 + t
    acc2 = jnp.maximum(acc2 + b2_ref[...], 0.0)                    # (10, 256)

    # pool2
    cm2 = jnp.maximum(acc2[:, :LANE], acc2[:, LANE:])              # (10, 128)
    p2 = jnp.maximum(jnp.dot(s2e_ref[...], cm2, preferred_element_type=f32),
                     jnp.dot(s2o_ref[...], cm2, preferred_element_type=f32))
    # p2: (5, 128), cols = w*16 + c (80 real, rest zero)

    # fc1: torch flatten(C,H,W) order is baked into wf1; contract row by row.
    y = None
    for h in range(5):
        t = jnp.dot(p2[h:h + 1, :], wf1_ref[h], preferred_element_type=f32)
        y = t if y is None else y + t
    y = jnp.maximum(y + bf1_ref[...], 0.0)                         # (1, 128)

    # fc2 + ReLU, fc3 (lane-padded to 128; pad lanes stay exactly zero).
    y = jnp.maximum(jnp.dot(y, wf2_ref[...], preferred_element_type=f32)
                    + bf2_ref[...], 0.0)
    y = jnp.dot(y, wf3_ref[...], preferred_element_type=f32) + bf3_ref[...]

    out_ref[0] = y                                                 # (1, 128)


def net_forward(packed, x_nchw):
    """Fused Pallas forward. x_nchw: (B, 3, 32, 32) f32 -> (B, 10) logits."""
    B = x_nchw.shape[0]
    c2 = lambda b: (0, 0)
    c3 = lambda b: (0, 0, 0)
    c4 = lambda b: (0, 0, 0, 0)

    out = pl.pallas_call(
        _lenet_kernel,
        out_shape=jax.ShapeDtypeStruct((B, 1, LANE), jnp.float32),
        grid=(B,),
        in_specs=[
            pl.BlockSpec((1, 3, 32, 32), lambda b: (b, 0, 0, 0)),   # image b
            pl.BlockSpec((3, 5, 32, 2 * LANE), c4),                 # conv1 W
            pl.BlockSpec((1, 2 * LANE), c2),                        # conv1 b
            pl.BlockSpec((14, 28), c2),                             # pool1 even
            pl.BlockSpec((14, 28), c2),                             # pool1 odd
            pl.BlockSpec((5, LANE, 2 * LANE), c3),                  # conv2 W
            pl.BlockSpec((1, 2 * LANE), c2),                        # conv2 b
            pl.BlockSpec((5, 10), c2),                              # pool2 even
            pl.BlockSpec((5, 10), c2),                              # pool2 odd
            pl.BlockSpec((5, LANE, LANE), c3),                      # fc1 W
            pl.BlockSpec((1, LANE), c2),                            # fc1 b
            pl.BlockSpec((LANE, LANE), c2),                         # fc2 W
            pl.BlockSpec((1, LANE), c2),                            # fc2 b
            pl.BlockSpec((LANE, LANE), c2),                         # fc3 W
            pl.BlockSpec((1, LANE), c2),                            # fc3 b
        ],
        out_specs=pl.BlockSpec((1, 1, LANE), lambda b: (b, 0, 0)),
        compiler_params=pltpu.CompilerParams(
            dimension_semantics=("parallel",)),
    )(x_nchw, packed["W1"], packed["B1"], packed["S1e"], packed["S1o"],
      packed["W2"], packed["B2"], packed["S2e"], packed["S2o"],
      packed["WF1"], packed["BF1"], packed["WF2"], packed["BF2"],
      packed["WF3"], packed["BF3"])
    return out[:, 0, :10]


# ------------------------- one-time weight packing -------------------------- #

def pack_params(params):
    """Repack PyTorch-layout weights into lane-dense (128-padded), Toeplitz /
    pre-permuted slabs consumed by the fused kernel. Done once at init."""
    f32 = np.float32
    w1 = np.asarray(params["conv1_w"], f32)    # (6, 3, 5, 5)   OIHW
    b1 = np.asarray(params["conv1_b"], f32)
    w2 = np.asarray(params["conv2_w"], f32)    # (16, 6, 5, 5)
    b2 = np.asarray(params["conv2_b"], f32)
    wf1 = np.asarray(params["fc1_w"], f32)     # (120, 400)
    bf1 = np.asarray(params["fc1_b"], f32)
    wf2 = np.asarray(params["fc2_w"], f32)     # (84, 120)
    bf2 = np.asarray(params["fc2_b"], f32)
    wf3 = np.asarray(params["fc3_w"], f32)     # (10, 84)
    bf3 = np.asarray(params["fc3_b"], f32)

    # conv1: acc[oh, s*128 + ow2*6 + co] = conv1(x)[co, oh, 2*ow2 + s]
    W1 = np.zeros((3, 5, 32, 2 * LANE), f32)
    B1 = np.zeros((1, 2 * LANE), f32)
    for s in range(2):
        for ow2 in range(14):
            col = s * LANE + ow2 * 6
            B1[0, col:col + 6] = b1
            ow = 2 * ow2 + s
            for ci in range(3):
                for i in range(5):
                    for j in range(5):
                        W1[ci, i, ow + j, col:col + 6] = w1[:, ci, i, j]

    # conv2: input cols = w*6 + ci (84 real of 128); output parity-blocked.
    W2 = np.zeros((5, LANE, 2 * LANE), f32)
    B2 = np.zeros((1, 2 * LANE), f32)
    for s in range(2):
        for ow2 in range(5):
            col = s * LANE + ow2 * 16
            B2[0, col:col + 16] = b2
            ow = 2 * ow2 + s
            for i in range(5):
                for j in range(5):
                    for ci in range(6):
                        W2[i, (ow + j) * 6 + ci, col:col + 16] = w2[:, ci, i, j]

    # fc1: kernel sees pooled2[h, w*16 + c]; torch flatten index = c*25 + h*5 + w
    WF1 = np.zeros((5, LANE, LANE), f32)
    for h in range(5):
        for w in range(5):
            for c in range(16):
                WF1[h, w * 16 + c, :120] = wf1[:, c * 25 + h * 5 + w]
    BF1 = np.zeros((1, LANE), f32)
    BF1[0, :120] = bf1

    WF2 = np.zeros((LANE, LANE), f32); WF2[:120, :84] = wf2.T
    BF2 = np.zeros((1, LANE), f32);    BF2[0, :84] = bf2
    WF3 = np.zeros((LANE, LANE), f32); WF3[:84, :10] = wf3.T
    BF3 = np.zeros((1, LANE), f32);    BF3[0, :10] = bf3

    # 0/1 row-pair selection matrices for the 2x2 max-pool height reduction.
    S1e = np.zeros((14, 28), f32); S1o = np.zeros((14, 28), f32)
    for p in range(14):
        S1e[p, 2 * p] = 1.0
        S1o[p, 2 * p + 1] = 1.0
    S2e = np.zeros((5, 10), f32); S2o = np.zeros((5, 10), f32)
    for p in range(5):
        S2e[p, 2 * p] = 1.0
        S2o[p, 2 * p + 1] = 1.0

    packed = dict(W1=W1, B1=B1, S1e=S1e, S1o=S1o, W2=W2, B2=B2, S2e=S2e,
                  S2o=S2o, WF1=WF1, BF1=BF1, WF2=WF2, BF2=BF2, WF3=WF3,
                  BF3=BF3)
    return {k: jnp.asarray(v) for k, v in packed.items()}


# --------------------------- parameter init / ref --------------------------- #

def init_params(key):
    ks = jax.random.split(key, 10)

    def u(k, shape, fan_in):
        bound = 1.0 / jnp.sqrt(float(fan_in))
        return jax.random.uniform(k, shape, jnp.float32, -bound, bound)

    return {
        "conv1_w": u(ks[0], (6, 3, 5, 5), 3 * 25),
        "conv1_b": u(ks[1], (6,), 3 * 25),
        "conv2_w": u(ks[2], (16, 6, 5, 5), 6 * 25),
        "conv2_b": u(ks[3], (16,), 6 * 25),
        "fc1_w": u(ks[4], (120, 16 * 5 * 5), 16 * 5 * 5),
        "fc1_b": u(ks[5], (120,), 16 * 5 * 5),
        "fc2_w": u(ks[6], (84, 120), 120),
        "fc2_b": u(ks[7], (84,), 120),
        "fc3_w": u(ks[8], (10, 84), 84),
        "fc3_b": u(ks[9], (10,), 84),
    }


def net_reference(params, x_nchw):
    def conv(x, w, b):
        y = jax.lax.conv_general_dilated(
            x, w, (1, 1), "VALID",
            dimension_numbers=("NCHW", "OIHW", "NCHW"))
        return jax.nn.relu(y + b[None, :, None, None])

    def pool(x):
        return jax.lax.reduce_window(x, -jnp.inf, jax.lax.max,
                                     (1, 1, 2, 2), (1, 1, 2, 2), "VALID")

    x = pool(conv(x_nchw, params["conv1_w"], params["conv1_b"]))
    x = pool(conv(x, params["conv2_w"], params["conv2_b"]))
    x = x.reshape(x.shape[0], -1)
    x = jax.nn.relu(x @ params["fc1_w"].T + params["fc1_b"])
    x = jax.nn.relu(x @ params["fc2_w"].T + params["fc2_b"])
    return x @ params["fc3_w"].T + params["fc3_b"]


if __name__ == "__main__":
    key = jax.random.PRNGKey(0)
    pkey, xkey = jax.random.split(key)
    params = init_params(pkey)
    packed = pack_params(params)
    x = jax.random.normal(xkey, (4, 3, 32, 32), dtype=jnp.float32)

    fwd = jax.jit(net_forward)
    out = jax.block_until_ready(fwd(packed, x))
    ref = jax.block_until_ready(net_reference(params, x))

    assert out.shape == (4, 10), out.shape
    assert jnp.allclose(out, ref, atol=1e-4, rtol=1e-4), (
        "mismatch vs reference, max abs err = "
        + str(float(jnp.max(jnp.abs(out - ref)))))
    print("KERNEL_OK")
</pallas_src>

<mosaic_0001>
module attributes {stable_mosaic.version = 11 : i64} {
  func.func @_lenet_kernel(%arg0: i32, %arg1: memref<1x3x32x32xf32, #tpu.memory_space<vmem>>, %arg2: memref<3x5x32x256xf32, #tpu.memory_space<vmem>>, %arg3: memref<1x256xf32, #tpu.memory_space<vmem>>, %arg4: memref<14x28xf32, #tpu.memory_space<vmem>>, %arg5: memref<14x28xf32, #tpu.memory_space<vmem>>, %arg6: memref<5x128x256xf32, #tpu.memory_space<vmem>>, %arg7: memref<1x256xf32, #tpu.memory_space<vmem>>, %arg8: memref<5x10xf32, #tpu.memory_space<vmem>>, %arg9: memref<5x10xf32, #tpu.memory_space<vmem>>, %arg10: memref<5x128x128xf32, #tpu.memory_space<vmem>>, %arg11: memref<1x128xf32, #tpu.memory_space<vmem>>, %arg12: memref<128x128xf32, #tpu.memory_space<vmem>>, %arg13: memref<1x128xf32, #tpu.memory_space<vmem>>, %arg14: memref<128x128xf32, #tpu.memory_space<vmem>>, %arg15: memref<1x128xf32, #tpu.memory_space<vmem>>, %arg16: memref<1x1x128xf32, #tpu.memory_space<vmem>>) attributes {dimension_semantics = [#tpu.dimension_semantics<parallel>], iteration_bounds = array<i64: 4>, scalar_prefetch = 0 : i64, scratch_operands = 0 : i64, tpu.core_type = #tpu.core_type<tc>, window_params = [{transform_indices = @transform_0, window_bounds = array<i64: 1, 3, 32, 32>}, {pipeline_mode = #tpu.pipeline_mode<synchronous>, transform_indices = @transform_1, window_bounds = array<i64: 3, 5, 32, 256>}, {pipeline_mode = #tpu.pipeline_mode<synchronous>, transform_indices = @transform_2, window_bounds = array<i64: 1, 256>}, {pipeline_mode = #tpu.pipeline_mode<synchronous>, transform_indices = @transform_3, window_bounds = array<i64: 14, 28>}, {pipeline_mode = #tpu.pipeline_mode<synchronous>, transform_indices = @transform_4, window_bounds = array<i64: 14, 28>}, {pipeline_mode = #tpu.pipeline_mode<synchronous>, transform_indices = @transform_5, window_bounds = array<i64: 5, 128, 256>}, {pipeline_mode = #tpu.pipeline_mode<synchronous>, transform_indices = @transform_6, window_bounds = array<i64: 1, 256>}, {pipeline_mode = #tpu.pipeline_mode<synchronous>, transform_indices = @transform_7, window_bounds = array<i64: 5, 10>}, {pipeline_mode = #tpu.pipeline_mode<synchronous>, transform_indices = @transform_8, window_bounds = array<i64: 5, 10>}, {pipeline_mode = #tpu.pipeline_mode<synchronous>, transform_indices = @transform_9, window_bounds = array<i64: 5, 128, 128>}, {pipeline_mode = #tpu.pipeline_mode<synchronous>, transform_indices = @transform_10, window_bounds = array<i64: 1, 128>}, {pipeline_mode = #tpu.pipeline_mode<synchronous>, transform_indices = @transform_11, window_bounds = array<i64: 128, 128>}, {pipeline_mode = #tpu.pipeline_mode<synchronous>, transform_indices = @transform_12, window_bounds = array<i64: 1, 128>}, {pipeline_mode = #tpu.pipeline_mode<synchronous>, transform_indices = @transform_13, window_bounds = array<i64: 128, 128>}, {pipeline_mode = #tpu.pipeline_mode<synchronous>, transform_indices = @transform_14, window_bounds = array<i64: 1, 128>}, {transform_indices = @transform_15, window_bounds = array<i64: 1, 1, 128>}]} {
    %c0 = arith.constant 0 : index
    %c0_0 = arith.constant 0 : index
    %c0_1 = arith.constant 0 : index
    %c0_2 = arith.constant 0 : index
    %0 = vector.load %arg1[%c0, %c0_0, %c0_1, %c0_2] : memref<1x3x32x32xf32, #tpu.memory_space<vmem>>, vector<1x1x28x32xf32>
    %1 = vector.shape_cast %0 : vector<1x1x28x32xf32> to vector<28x32xf32>
    %c0_3 = arith.constant 0 : index
    %c0_4 = arith.constant 0 : index
    %c0_5 = arith.constant 0 : index
    %c0_6 = arith.constant 0 : index
    %2 = vector.load %arg2[%c0_3, %c0_4, %c0_5, %c0_6] : memref<3x5x32x256xf32, #tpu.memory_space<vmem>>, vector<1x1x32x256xf32>
    %3 = vector.shape_cast %2 : vector<1x1x32x256xf32> to vector<32x256xf32>
    %cst = arith.constant dense<0.000000e+00> : vector<28x256xf32>
    %4 = tpu.matmul %1, %3, %cst {dimension_numbers = #tpu.dot_dimension_numbers<[1], [0], [0], [1], [0, 0, 1, 1], [], []>} : vector<28x32xf32>, vector<32x256xf32>, vector<28x256xf32> -> vector<28x256xf32>
    %c0_7 = arith.constant 0 : index
    %c0_8 = arith.constant 0 : index
    %c1 = arith.constant 1 : index
    %c0_9 = arith.constant 0 : index
    %5 = vector.load %arg1[%c0_7, %c0_8, %c1, %c0_9] : memref<1x3x32x32xf32, #tpu.memory_space<vmem>>, vector<1x1x28x32xf32>
    %6 = vector.shape_cast %5 : vector<1x1x28x32xf32> to vector<28x32xf32>
    %c0_10 = arith.constant 0 : index
    %c1_11 = arith.constant 1 : index
    %c0_12 = arith.constant 0 : index
    %c0_13 = arith.constant 0 : index
    %7 = vector.load %arg2[%c0_10, %c1_11, %c0_12, %c0_13] : memref<3x5x32x256xf32, #tpu.memory_space<vmem>>, vector<1x1x32x256xf32>
    %8 = vector.shape_cast %7 : vector<1x1x32x256xf32> to vector<32x256xf32>
    %cst_14 = arith.constant dense<0.000000e+00> : vector<28x256xf32>
    %9 = tpu.matmul %6, %8, %cst_14 {dimension_numbers = #tpu.dot_dimension_numbers<[1], [0], [0], [1], [0, 0, 1, 1], [], []>} : vector<28x32xf32>, vector<32x256xf32>, vector<28x256xf32> -> vector<28x256xf32>
    %10 = arith.addf %4, %9 : vector<28x256xf32>
    %c0_15 = arith.constant 0 : index
    %c0_16 = arith.constant 0 : index
    %c2 = arith.constant 2 : index
    %c0_17 = arith.constant 0 : index
    %11 = vector.load %arg1[%c0_15, %c0_16, %c2, %c0_17] : memref<1x3x32x32xf32, #tpu.memory_space<vmem>>, vector<1x1x28x32xf32>
    %12 = vector.shape_cast %11 : vector<1x1x28x32xf32> to vector<28x32xf32>
    %c0_18 = arith.constant 0 : index
    %c2_19 = arith.constant 2 : index
    %c0_20 = arith.constant 0 : index
    %c0_21 = arith.constant 0 : index
    %13 = vector.load %arg2[%c0_18, %c2_19, %c0_20, %c0_21] : memref<3x5x32x256xf32, #tpu.memory_space<vmem>>, vector<1x1x32x256xf32>
    %14 = vector.shape_cast %13 : vector<1x1x32x256xf32> to vector<32x256xf32>
    %cst_22 = arith.constant dense<0.000000e+00> : vector<28x256xf32>
    %15 = tpu.matmul %12, %14, %cst_22 {dimension_numbers = #tpu.dot_dimension_numbers<[1], [0], [0], [1], [0, 0, 1, 1], [], []>} : vector<28x32xf32>, vector<32x256xf32>, vector<28x256xf32> -> vector<28x256xf32>
    %16 = arith.addf %10, %15 : vector<28x256xf32>
    %c0_23 = arith.constant 0 : index
    %c0_24 = arith.constant 0 : index
    %c3 = arith.constant 3 : index
    %c0_25 = arith.constant 0 : index
    %17 = vector.load %arg1[%c0_23, %c0_24, %c3, %c0_25] : memref<1x3x32x32xf32, #tpu.memory_space<vmem>>, vector<1x1x28x32xf32>
    %18 = vector.shape_cast %17 : vector<1x1x28x32xf32> to vector<28x32xf32>
    %c0_26 = arith.constant 0 : index
    %c3_27 = arith.constant 3 : index
    %c0_28 = arith.constant 0 : index
    %c0_29 = arith.constant 0 : index
    %19 = vector.load %arg2[%c0_26, %c3_27, %c0_28, %c0_29] : memref<3x5x32x256xf32, #tpu.memory_space<vmem>>, vector<1x1x32x256xf32>
    %20 = vector.shape_cast %19 : vector<1x1x32x256xf32> to vector<32x256xf32>
    %cst_30 = arith.constant dense<0.000000e+00> : vector<28x256xf32>
    %21 = tpu.matmul %18, %20, %cst_30 {dimension_numbers = #tpu.dot_dimension_numbers<[1], [0], [0], [1], [0, 0, 1, 1], [], []>} : vector<28x32xf32>, vector<32x256xf32>, vector<28x256xf32> -> vector<28x256xf32>
    %22 = arith.addf %16, %21 : vector<28x256xf32>
    %c0_31 = arith.constant 0 : index
    %c0_32 = arith.constant 0 : index
    %c4 = arith.constant 4 : index
    %c0_33 = arith.constant 0 : index
    %23 = vector.load %arg1[%c0_31, %c0_32, %c4, %c0_33] : memref<1x3x32x32xf32, #tpu.memory_space<vmem>>, vector<1x1x28x32xf32>
    %24 = vector.shape_cast %23 : vector<1x1x28x32xf32> to vector<28x32xf32>
    %c0_34 = arith.constant 0 : index
    %c4_35 = arith.constant 4 : index
    %c0_36 = arith.constant 0 : index
    %c0_37 = arith.constant 0 : index
    %25 = vector.load %arg2[%c0_34, %c4_35, %c0_36, %c0_37] : memref<3x5x32x256xf32, #tpu.memory_space<vmem>>, vector<1x1x32x256xf32>
    %26 = vector.shape_cast %25 : vector<1x1x32x256xf32> to vector<32x256xf32>
    %cst_38 = arith.constant dense<0.000000e+00> : vector<28x256xf32>
    %27 = tpu.matmul %24, %26, %cst_38 {dimension_numbers = #tpu.dot_dimension_numbers<[1], [0], [0], [1], [0, 0, 1, 1], [], []>} : vector<28x32xf32>, vector<32x256xf32>, vector<28x256xf32> -> vector<28x256xf32>
    %28 = arith.addf %22, %27 : vector<28x256xf32>
    %c0_39 = arith.constant 0 : index
    %c1_40 = arith.constant 1 : index
    %c0_41 = arith.constant 0 : index
    %c0_42 = arith.constant 0 : index
    %29 = vector.load %arg1[%c0_39, %c1_40, %c0_41, %c0_42] : memref<1x3x32x32xf32, #tpu.memory_space<vmem>>, vector<1x1x28x32xf32>
    %30 = vector.shape_cast %29 : vector<1x1x28x32xf32> to vector<28x32xf32>
    %c1_43 = arith.constant 1 : index
    %c0_44 = arith.constant 0 : index
    %c0_45 = arith.constant 0 : index
    %c0_46 = arith.constant 0 : index
    %31 = vector.load %arg2[%c1_43, %c0_44, %c0_45, %c0_46] : memref<3x5x32x256xf32, #tpu.memory_space<vmem>>, vector<1x1x32x256xf32>
    %32 = vector.shape_cast %31 : vector<1x1x32x256xf32> to vector<32x256xf32>
    %cst_47 = arith.constant dense<0.000000e+00> : vector<28x256xf32>
    %33 = tpu.matmul %30, %32, %cst_47 {dimension_numbers = #tpu.dot_dimension_numbers<[1], [0], [0], [1], [0, 0, 1, 1], [], []>} : vector<28x32xf32>, vector<32x256xf32>, vector<28x256xf32> -> vector<28x256xf32>
    %34 = arith.addf %28, %33 : vector<28x256xf32>
    %c0_48 = arith.constant 0 : index
    %c1_49 = arith.constant 1 : index
    %c1_50 = arith.constant 1 : index
    %c0_51 = arith.constant 0 : index
    %35 = vector.load %arg1[%c0_48, %c1_49, %c1_50, %c0_51] : memref<1x3x32x32xf32, #tpu.memory_space<vmem>>, vector<1x1x28x32xf32>
    %36 = vector.shape_cast %35 : vector<1x1x28x32xf32> to vector<28x32xf32>
    %c1_52 = arith.constant 1 : index
    %c1_53 = arith.constant 1 : index
    %c0_54 = arith.constant 0 : index
    %c0_55 = arith.constant 0 : index
    %37 = vector.load %arg2[%c1_52, %c1_53, %c0_54, %c0_55] : memref<3x5x32x256xf32, #tpu.memory_space<vmem>>, vector<1x1x32x256xf32>
    %38 = vector.shape_cast %37 : vector<1x1x32x256xf32> to vector<32x256xf32>
    %cst_56 = arith.constant dense<0.000000e+00> : vector<28x256xf32>
    %39 = tpu.matmul %36, %38, %cst_56 {dimension_numbers = #tpu.dot_dimension_numbers<[1], [0], [0], [1], [0, 0, 1, 1], [], []>} : vector<28x32xf32>, vector<32x256xf32>, vector<28x256xf32> -> vector<28x256xf32>
    %40 = arith.addf %34, %39 : vector<28x256xf32>
    %c0_57 = arith.constant 0 : index
    %c1_58 = arith.constant 1 : index
    %c2_59 = arith.constant 2 : index
    %c0_60 = arith.constant 0 : index
    %41 = vector.load %arg1[%c0_57, %c1_58, %c2_59, %c0_60] : memref<1x3x32x32xf32, #tpu.memory_space<vmem>>, vector<1x1x28x32xf32>
    %42 = vector.shape_cast %41 : vector<1x1x28x32xf32> to vector<28x32xf32>
    %c1_61 = arith.constant 1 : index
    %c2_62 = arith.constant 2 : index
    %c0_63 = arith.constant 0 : index
    %c0_64 = arith.constant 0 : index
    %43 = vector.load %arg2[%c1_61, %c2_62, %c0_63, %c0_64] : memref<3x5x32x256xf32, #tpu.memory_space<vmem>>, vector<1x1x32x256xf32>
    %44 = vector.shape_cast %43 : vector<1x1x32x256xf32> to vector<32x256xf32>
    %cst_65 = arith.constant dense<0.000000e+00> : vector<28x256xf32>
    %45 = tpu.matmul %42, %44, %cst_65 {dimension_numbers = #tpu.dot_dimension_numbers<[1], [0], [0], [1], [0, 0, 1, 1], [], []>} : vector<28x32xf32>, vector<32x256xf32>, vector<28x256xf32> -> vector<28x256xf32>
    %46 = arith.addf %40, %45 : vector<28x256xf32>
    %c0_66 = arith.constant 0 : index
    %c1_67 = arith.constant 1 : index
    %c3_68 = arith.constant 3 : index
    %c0_69 = arith.constant 0 : index
    %47 = vector.load %arg1[%c0_66, %c1_67, %c3_68, %c0_69] : memref<1x3x32x32xf32, #tpu.memory_space<vmem>>, vector<1x1x28x32xf32>
    %48 = vector.shape_cast %47 : vector<1x1x28x32xf32> to vector<28x32xf32>
    %c1_70 = arith.constant 1 : index
    %c3_71 = arith.constant 3 : index
    %c0_72 = arith.constant 0 : index
    %c0_73 = arith.constant 0 : index
    %49 = vector.load %arg2[%c1_70, %c3_71, %c0_72, %c0_73] : memref<3x5x32x256xf32, #tpu.memory_space<vmem>>, vector<1x1x32x256xf32>
    %50 = vector.shape_cast %49 : vector<1x1x32x256xf32> to vector<32x256xf32>
    %cst_74 = arith.constant dense<0.000000e+00> : vector<28x256xf32>
    %51 = tpu.matmul %48, %50, %cst_74 {dimension_numbers = #tpu.dot_dimension_numbers<[1], [0], [0], [1], [0, 0, 1, 1], [], []>} : vector<28x32xf32>, vector<32x256xf32>, vector<28x256xf32> -> vector<28x256xf32>
    %52 = arith.addf %46, %51 : vector<28x256xf32>
    %c0_75 = arith.constant 0 : index
    %c1_76 = arith.constant 1 : index
    %c4_77 = arith.constant 4 : index
    %c0_78 = arith.constant 0 : index
    %53 = vector.load %arg1[%c0_75, %c1_76, %c4_77, %c0_78] : memref<1x3x32x32xf32, #tpu.memory_space<vmem>>, vector<1x1x28x32xf32>
    %54 = vector.shape_cast %53 : vector<1x1x28x32xf32> to vector<28x32xf32>
    %c1_79 = arith.constant 1 : index
    %c4_80 = arith.constant 4 : index
    %c0_81 = arith.constant 0 : index
    %c0_82 = arith.constant 0 : index
    %55 = vector.load %arg2[%c1_79, %c4_80, %c0_81, %c0_82] : memref<3x5x32x256xf32, #tpu.memory_space<vmem>>, vector<1x1x32x256xf32>
    %56 = vector.shape_cast %55 : vector<1x1x32x256xf32> to vector<32x256xf32>
    %cst_83 = arith.constant dense<0.000000e+00> : vector<28x256xf32>
    %57 = tpu.matmul %54, %56, %cst_83 {dimension_numbers = #tpu.dot_dimension_numbers<[1], [0], [0], [1], [0, 0, 1, 1], [], []>} : vector<28x32xf32>, vector<32x256xf32>, vector<28x256xf32> -> vector<28x256xf32>
    %58 = arith.addf %52, %57 : vector<28x256xf32>
    %c0_84 = arith.constant 0 : index
    %c2_85 = arith.constant 2 : index
    %c0_86 = arith.constant 0 : index
    %c0_87 = arith.constant 0 : index
    %59 = vector.load %arg1[%c0_84, %c2_85, %c0_86, %c0_87] : memref<1x3x32x32xf32, #tpu.memory_space<vmem>>, vector<1x1x28x32xf32>
    %60 = vector.shape_cast %59 : vector<1x1x28x32xf32> to vector<28x32xf32>
    %c2_88 = arith.constant 2 : index
    %c0_89 = arith.constant 0 : index
    %c0_90 = arith.constant 0 : index
    %c0_91 = arith.constant 0 : index
    %61 = vector.load %arg2[%c2_88, %c0_89, %c0_90, %c0_91] : memref<3x5x32x256xf32, #tpu.memory_space<vmem>>, vector<1x1x32x256xf32>
    %62 = vector.shape_cast %61 : vector<1x1x32x256xf32> to vector<32x256xf32>
    %cst_92 = arith.constant dense<0.000000e+00> : vector<28x256xf32>
    %63 = tpu.matmul %60, %62, %cst_92 {dimension_numbers = #tpu.dot_dimension_numbers<[1], [0], [0], [1], [0, 0, 1, 1], [], []>} : vector<28x32xf32>, vector<32x256xf32>, vector<28x256xf32> -> vector<28x256xf32>
    %64 = arith.addf %58, %63 : vector<28x256xf32>
    %c0_93 = arith.constant 0 : index
    %c2_94 = arith.constant 2 : index
    %c1_95 = arith.constant 1 : index
    %c0_96 = arith.constant 0 : index
    %65 = vector.load %arg1[%c0_93, %c2_94, %c1_95, %c0_96] : memref<1x3x32x32xf32, #tpu.memory_space<vmem>>, vector<1x1x28x32xf32>
    %66 = vector.shape_cast %65 : vector<1x1x28x32xf32> to vector<28x32xf32>
    %c2_97 = arith.constant 2 : index
    %c1_98 = arith.constant 1 : index
    %c0_99 = arith.constant 0 : index
    %c0_100 = arith.constant 0 : index
    %67 = vector.load %arg2[%c2_97, %c1_98, %c0_99, %c0_100] : memref<3x5x32x256xf32, #tpu.memory_space<vmem>>, vector<1x1x32x256xf32>
    %68 = vector.shape_cast %67 : vector<1x1x32x256xf32> to vector<32x256xf32>
    %cst_101 = arith.constant dense<0.000000e+00> : vector<28x256xf32>
    %69 = tpu.matmul %66, %68, %cst_101 {dimension_numbers = #tpu.dot_dimension_numbers<[1], [0], [0], [1], [0, 0, 1, 1], [], []>} : vector<28x32xf32>, vector<32x256xf32>, vector<28x256xf32> -> vector<28x256xf32>
    %70 = arith.addf %64, %69 : vector<28x256xf32>
    %c0_102 = arith.constant 0 : index
    %c2_103 = arith.constant 2 : index
    %c2_104 = arith.constant 2 : index
    %c0_105 = arith.constant 0 : index
    %71 = vector.load %arg1[%c0_102, %c2_103, %c2_104, %c0_105] : memref<1x3x32x32xf32, #tpu.memory_space<vmem>>, vector<1x1x28x32xf32>
    %72 = vector.shape_cast %71 : vector<1x1x28x32xf32> to vector<28x32xf32>
    %c2_106 = arith.constant 2 : index
    %c2_107 = arith.constant 2 : index
    %c0_108 = arith.constant 0 : index
    %c0_109 = arith.constant 0 : index
    %73 = vector.load %arg2[%c2_106, %c2_107, %c0_108, %c0_109] : memref<3x5x32x256xf32, #tpu.memory_space<vmem>>, vector<1x1x32x256xf32>
    %74 = vector.shape_cast %73 : vector<1x1x32x256xf32> to vector<32x256xf32>
    %cst_110 = arith.constant dense<0.000000e+00> : vector<28x256xf32>
    %75 = tpu.matmul %72, %74, %cst_110 {dimension_numbers = #tpu.dot_dimension_numbers<[1], [0], [0], [1], [0, 0, 1, 1], [], []>} : vector<28x32xf32>, vector<32x256xf32>, vector<28x256xf32> -> vector<28x256xf32>
    %76 = arith.addf %70, %75 : vector<28x256xf32>
    %c0_111 = arith.constant 0 : index
    %c2_112 = arith.constant 2 : index
    %c3_113 = arith.constant 3 : index
    %c0_114 = arith.constant 0 : index
    %77 = vector.load %arg1[%c0_111, %c2_112, %c3_113, %c0_114] : memref<1x3x32x32xf32, #tpu.memory_space<vmem>>, vector<1x1x28x32xf32>
    %78 = vector.shape_cast %77 : vector<1x1x28x32xf32> to vector<28x32xf32>
    %c2_115 = arith.constant 2 : index
    %c3_116 = arith.constant 3 : index
    %c0_117 = arith.constant 0 : index
    %c0_118 = arith.constant 0 : index
    %79 = vector.load %arg2[%c2_115, %c3_116, %c0_117, %c0_118] : memref<3x5x32x256xf32, #tpu.memory_space<vmem>>, vector<1x1x32x256xf32>
    %80 = vector.shape_cast %79 : vector<1x1x32x256xf32> to vector<32x256xf32>
    %cst_119 = arith.constant dense<0.000000e+00> : vector<28x256xf32>
    %81 = tpu.matmul %78, %80, %cst_119 {dimension_numbers = #tpu.dot_dimension_numbers<[1], [0], [0], [1], [0, 0, 1, 1], [], []>} : vector<28x32xf32>, vector<32x256xf32>, vector<28x256xf32> -> vector<28x256xf32>
    %82 = arith.addf %76, %81 : vector<28x256xf32>
    %c0_120 = arith.constant 0 : index
    %c2_121 = arith.constant 2 : index
    %c4_122 = arith.constant 4 : index
    %c0_123 = arith.constant 0 : index
    %83 = vector.load %arg1[%c0_120, %c2_121, %c4_122, %c0_123] : memref<1x3x32x32xf32, #tpu.memory_space<vmem>>, vector<1x1x28x32xf32>
    %84 = vector.shape_cast %83 : vector<1x1x28x32xf32> to vector<28x32xf32>
    %c2_124 = arith.constant 2 : index
    %c4_125 = arith.constant 4 : index
    %c0_126 = arith.constant 0 : index
    %c0_127 = arith.constant 0 : index
    %85 = vector.load %arg2[%c2_124, %c4_125, %c0_126, %c0_127] : memref<3x5x32x256xf32, #tpu.memory_space<vmem>>, vector<1x1x32x256xf32>
    %86 = vector.shape_cast %85 : vector<1x1x32x256xf32> to vector<32x256xf32>
    %cst_128 = arith.constant dense<0.000000e+00> : vector<28x256xf32>
    %87 = tpu.matmul %84, %86, %cst_128 {dimension_numbers = #tpu.dot_dimension_numbers<[1], [0], [0], [1], [0, 0, 1, 1], [], []>} : vector<28x32xf32>, vector<32x256xf32>, vector<28x256xf32> -> vector<28x256xf32>
    %88 = arith.addf %82, %87 : vector<28x256xf32>
    %c0_129 = arith.constant 0 : index
    %c0_130 = arith.constant 0 : index
    %89 = vector.load %arg3[%c0_129, %c0_130] : memref<1x256xf32, #tpu.memory_space<vmem>>, vector<1x256xf32>
    %90 = vector.broadcast %89 : vector<1x256xf32> to vector<28x256xf32>
    %91 = arith.addf %88, %90 : vector<28x256xf32>
    %cst_131 = arith.constant 0.000000e+00 : f32
    %92 = vector.broadcast %cst_131 : f32 to vector<28x256xf32>
    %93 = arith.maximumf %91, %92 : vector<28x256xf32>
    %94 = vector.extract_strided_slice %93 {offsets = [0, 0], sizes = [28, 128], strides = [1, 1]} : vector<28x256xf32> to vector<28x128xf32>
    %95 = vector.extract_strided_slice %93 {offsets = [0, 128], sizes = [28, 128], strides = [1, 1]} : vector<28x256xf32> to vector<28x128xf32>
    %96 = arith.maximumf %94, %95 : vector<28x128xf32>
    %c0_132 = arith.constant 0 : index
    %c0_133 = arith.constant 0 : index
    %97 = vector.load %arg4[%c0_132, %c0_133] : memref<14x28xf32, #tpu.memory_space<vmem>>, vector<14x28xf32>
    %cst_134 = arith.constant dense<0.000000e+00> : vector<14x128xf32>
    %98 = tpu.matmul %97, %96, %cst_134 {dimension_numbers = #tpu.dot_dimension_numbers<[1], [0], [0], [1], [0, 0, 1, 1], [], []>} : vector<14x28xf32>, vector<28x128xf32>, vector<14x128xf32> -> vector<14x128xf32>
    %c0_135 = arith.constant 0 : index
    %c0_136 = arith.constant 0 : index
    %99 = vector.load %arg5[%c0_135, %c0_136] : memref<14x28xf32, #tpu.memory_space<vmem>>, vector<14x28xf32>
    %cst_137 = arith.constant dense<0.000000e+00> : vector<14x128xf32>
    %100 = tpu.matmul %99, %96, %cst_137 {dimension_numbers = #tpu.dot_dimension_numbers<[1], [0], [0], [1], [0, 0, 1, 1], [], []>} : vector<14x28xf32>, vector<28x128xf32>, vector<14x128xf32> -> vector<14x128xf32>
    %101 = arith.maximumf %98, %100 : vector<14x128xf32>
    %102 = vector.extract_strided_slice %101 {offsets = [0, 0], sizes = [10, 128], strides = [1, 1]} : vector<14x128xf32> to vector<10x128xf32>
    %c0_138 = arith.constant 0 : index
    %c0_139 = arith.constant 0 : index
    %c0_140 = arith.constant 0 : index
    %103 = vector.load %arg6[%c0_138, %c0_139, %c0_140] : memref<5x128x256xf32, #tpu.memory_space<vmem>>, vector<1x128x256xf32>
    %104 = vector.shape_cast %103 : vector<1x128x256xf32> to vector<128x256xf32>
    %cst_141 = arith.constant dense<0.000000e+00> : vector<10x256xf32>
    %105 = tpu.matmul %102, %104, %cst_141 {dimension_numbers = #tpu.dot_dimension_numbers<[1], [0], [0], [1], [0, 0, 1, 1], [], []>} : vector<10x128xf32>, vector<128x256xf32>, vector<10x256xf32> -> vector<10x256xf32>
    %106 = vector.extract_strided_slice %101 {offsets = [1, 0], sizes = [10, 128], strides = [1, 1]} : vector<14x128xf32> to vector<10x128xf32>
    %c1_142 = arith.constant 1 : index
    %c0_143 = arith.constant 0 : index
    %c0_144 = arith.constant 0 : index
    %107 = vector.load %arg6[%c1_142, %c0_143, %c0_144] : memref<5x128x256xf32, #tpu.memory_space<vmem>>, vector<1x128x256xf32>
    %108 = vector.shape_cast %107 : vector<1x128x256xf32> to vector<128x256xf32>
    %cst_145 = arith.constant dense<0.000000e+00> : vector<10x256xf32>
    %109 = tpu.matmul %106, %108, %cst_145 {dimension_numbers = #tpu.dot_dimension_numbers<[1], [0], [0], [1], [0, 0, 1, 1], [], []>} : vector<10x128xf32>, vector<128x256xf32>, vector<10x256xf32> -> vector<10x256xf32>
    %110 = arith.addf %105, %109 : vector<10x256xf32>
    %111 = vector.extract_strided_slice %101 {offsets = [2, 0], sizes = [10, 128], strides = [1, 1]} : vector<14x128xf32> to vector<10x128xf32>
    %c2_146 = arith.constant 2 : index
    %c0_147 = arith.constant 0 : index
    %c0_148 = arith.constant 0 : index
    %112 = vector.load %arg6[%c2_146, %c0_147, %c0_148] : memref<5x128x256xf32, #tpu.memory_space<vmem>>, vector<1x128x256xf32>
    %113 = vector.shape_cast %112 : vector<1x128x256xf32> to vector<128x256xf32>
    %cst_149 = arith.constant dense<0.000000e+00> : vector<10x256xf32>
    %114 = tpu.matmul %111, %113, %cst_149 {dimension_numbers = #tpu.dot_dimension_numbers<[1], [0], [0], [1], [0, 0, 1, 1], [], []>} : vector<10x128xf32>, vector<128x256xf32>, vector<10x256xf32> -> vector<10x256xf32>
    %115 = arith.addf %110, %114 : vector<10x256xf32>
    %116 = vector.extract_strided_slice %101 {offsets = [3, 0], sizes = [10, 128], strides = [1, 1]} : vector<14x128xf32> to vector<10x128xf32>
    %c3_150 = arith.constant 3 : index
    %c0_151 = arith.constant 0 : index
    %c0_152 = arith.constant 0 : index
    %117 = vector.load %arg6[%c3_150, %c0_151, %c0_152] : memref<5x128x256xf32, #tpu.memory_space<vmem>>, vector<1x128x256xf32>
    %118 = vector.shape_cast %117 : vector<1x128x256xf32> to vector<128x256xf32>
    %cst_153 = arith.constant dense<0.000000e+00> : vector<10x256xf32>
    %119 = tpu.matmul %116, %118, %cst_153 {dimension_numbers = #tpu.dot_dimension_numbers<[1], [0], [0], [1], [0, 0, 1, 1], [], []>} : vector<10x128xf32>, vector<128x256xf32>, vector<10x256xf32> -> vector<10x256xf32>
    %120 = arith.addf %115, %119 : vector<10x256xf32>
    %121 = vector.extract_strided_slice %101 {offsets = [4, 0], sizes = [10, 128], strides = [1, 1]} : vector<14x128xf32> to vector<10x128xf32>
    %c4_154 = arith.constant 4 : index
    %c0_155 = arith.constant 0 : index
    %c0_156 = arith.constant 0 : index
    %122 = vector.load %arg6[%c4_154, %c0_155, %c0_156] : memref<5x128x256xf32, #tpu.memory_space<vmem>>, vector<1x128x256xf32>
    %123 = vector.shape_cast %122 : vector<1x128x256xf32> to vector<128x256xf32>
    %cst_157 = arith.constant dense<0.000000e+00> : vector<10x256xf32>
    %124 = tpu.matmul %121, %123, %cst_157 {dimension_numbers = #tpu.dot_dimension_numbers<[1], [0], [0], [1], [0, 0, 1, 1], [], []>} : vector<10x128xf32>, vector<128x256xf32>, vector<10x256xf32> -> vector<10x256xf32>
    %125 = arith.addf %120, %124 : vector<10x256xf32>
    %c0_158 = arith.constant 0 : index
    %c0_159 = arith.constant 0 : index
    %126 = vector.load %arg7[%c0_158, %c0_159] : memref<1x256xf32, #tpu.memory_space<vmem>>, vector<1x256xf32>
    %127 = vector.broadcast %126 : vector<1x256xf32> to vector<10x256xf32>
    %128 = arith.addf %125, %127 : vector<10x256xf32>
    %cst_160 = arith.constant 0.000000e+00 : f32
    %129 = vector.broadcast %cst_160 : f32 to vector<10x256xf32>
    %130 = arith.maximumf %128, %129 : vector<10x256xf32>
    %131 = vector.extract_strided_slice %130 {offsets = [0, 0], sizes = [10, 128], strides = [1, 1]} : vector<10x256xf32> to vector<10x128xf32>
    %132 = vector.extract_strided_slice %130 {offsets = [0, 128], sizes = [10, 128], strides = [1, 1]} : vector<10x256xf32> to vector<10x128xf32>
    %133 = arith.maximumf %131, %132 : vector<10x128xf32>
    %c0_161 = arith.constant 0 : index
    %c0_162 = arith.constant 0 : index
    %134 = vector.load %arg8[%c0_161, %c0_162] : memref<5x10xf32, #tpu.memory_space<vmem>>, vector<5x10xf32>
    %cst_163 = arith.constant dense<0.000000e+00> : vector<5x128xf32>
    %135 = tpu.matmul %134, %133, %cst_163 {dimension_numbers = #tpu.dot_dimension_numbers<[1], [0], [0], [1], [0, 0, 1, 1], [], []>} : vector<5x10xf32>, vector<10x128xf32>, vector<5x128xf32> -> vector<5x128xf32>
    %c0_164 = arith.constant 0 : index
    %c0_165 = arith.constant 0 : index
    %136 = vector.load %arg9[%c0_164, %c0_165] : memref<5x10xf32, #tpu.memory_space<vmem>>, vector<5x10xf32>
    %cst_166 = arith.constant dense<0.000000e+00> : vector<5x128xf32>
    %137 = tpu.matmul %136, %133, %cst_166 {dimension_numbers = #tpu.dot_dimension_numbers<[1], [0], [0], [1], [0, 0, 1, 1], [], []>} : vector<5x10xf32>, vector<10x128xf32>, vector<5x128xf32> -> vector<5x128xf32>
    %138 = arith.maximumf %135, %137 : vector<5x128xf32>
    %139 = vector.extract_strided_slice %138 {offsets = [0, 0], sizes = [1, 128], strides = [1, 1]} : vector<5x128xf32> to vector<1x128xf32>
    %c0_167 = arith.constant 0 : index
    %c0_168 = arith.constant 0 : index
    %c0_169 = arith.constant 0 : index
    %140 = vector.load %arg10[%c0_167, %c0_168, %c0_169] : memref<5x128x128xf32, #tpu.memory_space<vmem>>, vector<1x128x128xf32>
    %141 = vector.shape_cast %140 : vector<1x128x128xf32> to vector<128x128xf32>
    %cst_170 = arith.constant dense<0.000000e+00> : vector<1x128xf32>
    %142 = tpu.matmul %139, %141, %cst_170 {dimension_numbers = #tpu.dot_dimension_numbers<[1], [0], [0], [1], [0, 0, 1, 1], [], []>} : vector<1x128xf32>, vector<128x128xf32>, vector<1x128xf32> -> vector<1x128xf32>
    %143 = vector.extract_strided_slice %138 {offsets = [1, 0], sizes = [1, 128], strides = [1, 1]} : vector<5x128xf32> to vector<1x128xf32>
    %c1_171 = arith.constant 1 : index
    %c0_172 = arith.constant 0 : index
    %c0_173 = arith.constant 0 : index
    %144 = vector.load %arg10[%c1_171, %c0_172, %c0_173] : memref<5x128x128xf32, #tpu.memory_space<vmem>>, vector<1x128x128xf32>
    %145 = vector.shape_cast %144 : vector<1x128x128xf32> to vector<128x128xf32>
    %cst_174 = arith.constant dense<0.000000e+00> : vector<1x128xf32>
    %146 = tpu.matmul %143, %145, %cst_174 {dimension_numbers = #tpu.dot_dimension_numbers<[1], [0], [0], [1], [0, 0, 1, 1], [], []>} : vector<1x128xf32>, vector<128x128xf32>, vector<1x128xf32> -> vector<1x128xf32>
    %147 = arith.addf %142, %146 : vector<1x128xf32>
    %148 = vector.extract_strided_slice %138 {offsets = [2, 0], sizes = [1, 128], strides = [1, 1]} : vector<5x128xf32> to vector<1x128xf32>
    %c2_175 = arith.constant 2 : index
    %c0_176 = arith.constant 0 : index
    %c0_177 = arith.constant 0 : index
    %149 = vector.load %arg10[%c2_175, %c0_176, %c0_177] : memref<5x128x128xf32, #tpu.memory_space<vmem>>, vector<1x128x128xf32>
    %150 = vector.shape_cast %149 : vector<1x128x128xf32> to vector<128x128xf32>
    %cst_178 = arith.constant dense<0.000000e+00> : vector<1x128xf32>
    %151 = tpu.matmul %148, %150, %cst_178 {dimension_numbers = #tpu.dot_dimension_numbers<[1], [0], [0], [1], [0, 0, 1, 1], [], []>} : vector<1x128xf32>, vector<128x128xf32>, vector<1x128xf32> -> vector<1x128xf32>
    %152 = arith.addf %147, %151 : vector<1x128xf32>
    %153 = vector.extract_strided_slice %138 {offsets = [3, 0], sizes = [1, 128], strides = [1, 1]} : vector<5x128xf32> to vector<1x128xf32>
    %c3_179 = arith.constant 3 : index
    %c0_180 = arith.constant 0 : index
    %c0_181 = arith.constant 0 : index
    %154 = vector.load %arg10[%c3_179, %c0_180, %c0_181] : memref<5x128x128xf32, #tpu.memory_space<vmem>>, vector<1x128x128xf32>
    %155 = vector.shape_cast %154 : vector<1x128x128xf32> to vector<128x128xf32>
    %cst_182 = arith.constant dense<0.000000e+00> : vector<1x128xf32>
    %156 = tpu.matmul %153, %155, %cst_182 {dimension_numbers = #tpu.dot_dimension_numbers<[1], [0], [0], [1], [0, 0, 1, 1], [], []>} : vector<1x128xf32>, vector<128x128xf32>, vector<1x128xf32> -> vector<1x128xf32>
    %157 = arith.addf %152, %156 : vector<1x128xf32>
    %158 = vector.extract_strided_slice %138 {offsets = [4, 0], sizes = [1, 128], strides = [1, 1]} : vector<5x128xf32> to vector<1x128xf32>
    %c4_183 = arith.constant 4 : index
    %c0_184 = arith.constant 0 : index
    %c0_185 = arith.constant 0 : index
    %159 = vector.load %arg10[%c4_183, %c0_184, %c0_185] : memref<5x128x128xf32, #tpu.memory_space<vmem>>, vector<1x128x128xf32>
    %160 = vector.shape_cast %159 : vector<1x128x128xf32> to vector<128x128xf32>
    %cst_186 = arith.constant dense<0.000000e+00> : vector<1x128xf32>
    %161 = tpu.matmul %158, %160, %cst_186 {dimension_numbers = #tpu.dot_dimension_numbers<[1], [0], [0], [1], [0, 0, 1, 1], [], []>} : vector<1x128xf32>, vector<128x128xf32>, vector<1x128xf32> -> vector<1x128xf32>
    %162 = arith.addf %157, %161 : vector<1x128xf32>
    %c0_187 = arith.constant 0 : index
    %c0_188 = arith.constant 0 : index
    %163 = vector.load %arg11[%c0_187, %c0_188] : memref<1x128xf32, #tpu.memory_space<vmem>>, vector<1x128xf32>
    %164 = arith.addf %162, %163 : vector<1x128xf32>
    %cst_189 = arith.constant 0.000000e+00 : f32
    %165 = vector.broadcast %cst_189 : f32 to vector<1x128xf32>
    %166 = arith.maximumf %164, %165 : vector<1x128xf32>
    %c0_190 = arith.constant 0 : index
    %c0_191 = arith.constant 0 : index
    %167 = vector.load %arg12[%c0_190, %c0_191] : memref<128x128xf32, #tpu.memory_space<vmem>>, vector<128x128xf32>
    %cst_192 = arith.constant dense<0.000000e+00> : vector<1x128xf32>
    %168 = tpu.matmul %166, %167, %cst_192 {dimension_numbers = #tpu.dot_dimension_numbers<[1], [0], [0], [1], [0, 0, 1, 1], [], []>} : vector<1x128xf32>, vector<128x128xf32>, vector<1x128xf32> -> vector<1x128xf32>
    %c0_193 = arith.constant 0 : index
    %c0_194 = arith.constant 0 : index
    %169 = vector.load %arg13[%c0_193, %c0_194] : memref<1x128xf32, #tpu.memory_space<vmem>>, vector<1x128xf32>
    %170 = arith.addf %168, %169 : vector<1x128xf32>
    %cst_195 = arith.constant 0.000000e+00 : f32
    %171 = vector.broadcast %cst_195 : f32 to vector<1x128xf32>
    %172 = arith.maximumf %170, %171 : vector<1x128xf32>
    %c0_196 = arith.constant 0 : index
    %c0_197 = arith.constant 0 : index
    %173 = vector.load %arg14[%c0_196, %c0_197] : memref<128x128xf32, #tpu.memory_space<vmem>>, vector<128x128xf32>
    %cst_198 = arith.constant dense<0.000000e+00> : vector<1x128xf32>
    %174 = tpu.matmul %172, %173, %cst_198 {dimension_numbers = #tpu.dot_dimension_numbers<[1], [0], [0], [1], [0, 0, 1, 1], [], []>} : vector<1x128xf32>, vector<128x128xf32>, vector<1x128xf32> -> vector<1x128xf32>
    %c0_199 = arith.constant 0 : index
    %c0_200 = arith.constant 0 : index
    %175 = vector.load %arg15[%c0_199, %c0_200] : memref<1x128xf32, #tpu.memory_space<vmem>>, vector<1x128xf32>
    %176 = arith.addf %174, %175 : vector<1x128xf32>
    %c0_201 = arith.constant 0 : index
    %c0_202 = arith.constant 0 : index
    %c0_203 = arith.constant 0 : index
    %177 = vector.load %arg16[%c0_201, %c0_202, %c0_203] : memref<1x1x128xf32, #tpu.memory_space<vmem>>, vector<1x1x128xf32>
    %178 = vector.shape_cast %177 : vector<1x1x128xf32> to vector<1x128xf32>
    %179 = vector.shape_cast %176 : vector<1x128xf32> to vector<1x1x128xf32>
    tpu.vector_store %arg16[%c0_201, %c0_202, %c0_203], %179 {strides = array<i32>} : memref<1x1x128xf32, #tpu.memory_space<vmem>>, vector<1x1x128xf32>,
    return
  }
  func.func @transform_0(%arg0: i32) -> (i32, i32, i32, i32) {
    %c0_i32 = arith.constant 0 : i32
    %c0_i32_0 = arith.constant 0 : i32
    %c0_i32_1 = arith.constant 0 : i32
    %c0_i32_2 = arith.constant 0 : i32
    return %arg0, %c0_i32, %c0_i32_0, %c0_i32_1 : i32, i32, i32, i32
  }
  func.func @transform_1(%arg0: i32) -> (i32, i32, i32, i32) {
    %c0_i32 = arith.constant 0 : i32
    %c0_i32_0 = arith.constant 0 : i32
    %c0_i32_1 = arith.constant 0 : i32
    %c0_i32_2 = arith.constant 0 : i32
    %c0_i32_3 = arith.constant 0 : i32
    return %c0_i32, %c0_i32_0, %c0_i32_1, %c0_i32_2 : i32, i32, i32, i32
  }
  func.func @transform_2(%arg0: i32) -> (i32, i32) {
    %c0_i32 = arith.constant 0 : i32
    %c0_i32_0 = arith.constant 0 : i32
    %c0_i32_1 = arith.constant 0 : i32
    return %c0_i32, %c0_i32_0 : i32, i32
  }
  func.func @transform_3(%arg0: i32) -> (i32, i32) {
    %c0_i32 = arith.constant 0 : i32
    %c0_i32_0 = arith.constant 0 : i32
    %c0_i32_1 = arith.constant 0 : i32
    return %c0_i32, %c0_i32_0 : i32, i32
  }
  func.func @transform_4(%arg0: i32) -> (i32, i32) {
    %c0_i32 = arith.constant 0 : i32
    %c0_i32_0 = arith.constant 0 : i32
    %c0_i32_1 = arith.constant 0 : i32
    return %c0_i32, %c0_i32_0 : i32, i32
  }
  func.func @transform_5(%arg0: i32) -> (i32, i32, i32) {
    %c0_i32 = arith.constant 0 : i32
    %c0_i32_0 = arith.constant 0 : i32
    %c0_i32_1 = arith.constant 0 : i32
    %c0_i32_2 = arith.constant 0 : i32
    return %c0_i32, %c0_i32_0, %c0_i32_1 : i32, i32, i32
  }
  func.func @transform_6(%arg0: i32) -> (i32, i32) {
    %c0_i32 = arith.constant 0 : i32
    %c0_i32_0 = arith.constant 0 : i32
    %c0_i32_1 = arith.constant 0 : i32
    return %c0_i32, %c0_i32_0 : i32, i32
  }
  func.func @transform_7(%arg0: i32) -> (i32, i32) {
    %c0_i32 = arith.constant 0 : i32
    %c0_i32_0 = arith.constant 0 : i32
    %c0_i32_1 = arith.constant 0 : i32
    return %c0_i32, %c0_i32_0 : i32, i32
  }
  func.func @transform_8(%arg0: i32) -> (i32, i32) {
    %c0_i32 = arith.constant 0 : i32
    %c0_i32_0 = arith.constant 0 : i32
    %c0_i32_1 = arith.constant 0 : i32
    return %c0_i32, %c0_i32_0 : i32, i32
  }
  func.func @transform_9(%arg0: i32) -> (i32, i32, i32) {
    %c0_i32 = arith.constant 0 : i32
    %c0_i32_0 = arith.constant 0 : i32
    %c0_i32_1 = arith.constant 0 : i32
    %c0_i32_2 = arith.constant 0 : i32
    return %c0_i32, %c0_i32_0, %c0_i32_1 : i32, i32, i32
  }
  func.func @transform_10(%arg0: i32) -> (i32, i32) {
    %c0_i32 = arith.constant 0 : i32
    %c0_i32_0 = arith.constant 0 : i32
    %c0_i32_1 = arith.constant 0 : i32
    return %c0_i32, %c0_i32_0 : i32, i32
  }
  func.func @transform_11(%arg0: i32) -> (i32, i32) {
    %c0_i32 = arith.constant 0 : i32
    %c0_i32_0 = arith.constant 0 : i32
    %c0_i32_1 = arith.constant 0 : i32
    return %c0_i32, %c0_i32_0 : i32, i32
  }
  func.func @transform_12(%arg0: i32) -> (i32, i32) {
    %c0_i32 = arith.constant 0 : i32
    %c0_i32_0 = arith.constant 0 : i32
    %c0_i32_1 = arith.constant 0 : i32
    return %c0_i32, %c0_i32_0 : i32, i32
  }
  func.func @transform_13(%arg0: i32) -> (i32, i32) {
    %c0_i32 = arith.constant 0 : i32
    %c0_i32_0 = arith.constant 0 : i32
    %c0_i32_1 = arith.constant 0 : i32
    return %c0_i32, %c0_i32_0 : i32, i32
  }
  func.func @transform_14(%arg0: i32) -> (i32, i32) {
    %c0_i32 = arith.constant 0 : i32
    %c0_i32_0 = arith.constant 0 : i32
    %c0_i32_1 = arith.constant 0 : i32
    return %c0_i32, %c0_i32_0 : i32, i32
  }
  func.func @transform_15(%arg0: i32) -> (i32, i32, i32) {
    %c0_i32 = arith.constant 0 : i32
    %c0_i32_0 = arith.constant 0 : i32
    %c0_i32_1 = arith.constant 0 : i32
    return %arg0, %c0_i32, %c0_i32_0 : i32, i32, i32
  }
}

</mosaic_0001>

<llo_original>
// kernel: net_forward.1
$region0: #{net_forward.1}
  #allocation0 [shape = 'u32[]', space=smem, size = 0x4, offset = 0x4, fixed_abs, tag = 'smem constant byte address 0x4 - core index']
  #allocation1 [shape = 'u32[144,128]{1,0:T(1,128)}', space=vmem, size = 0x12000, scoped, tag = 'internal scratch']
  %s0 = inlined_call_operand.hbm [shape: f32[4,3,32,32], index: 0, kind: input, shape index: {}]
  %s1 = inlined_call_operand.hbm [shape: f32[3,5,32,256], index: 1, kind: input, shape index: {}]
  %s2 = inlined_call_operand.hbm [shape: f32[1,256], index: 2, kind: input, shape index: {}]
  %s3 = inlined_call_operand.vmem [shape: f32[14,28], index: 3, kind: input, shape index: {}]
  %s4 = inlined_call_operand.hbm [shape: f32[14,28], index: 4, kind: input, shape index: {}]
  %s5 = inlined_call_operand.hbm [shape: f32[5,128,256], index: 5, kind: input, shape index: {}]
  %s6 = inlined_call_operand.vmem [shape: f32[1,256], index: 6, kind: input, shape index: {}]
  %s7 = inlined_call_operand.vmem [shape: f32[5,10], index: 7, kind: input, shape index: {}]
  %s8 = inlined_call_operand.hbm [shape: f32[5,10], index: 8, kind: input, shape index: {}]
  %s9 = inlined_call_operand.hbm [shape: f32[5,128,128], index: 9, kind: input, shape index: {}]
  %s10 = inlined_call_operand.hbm [shape: f32[1,128], index: 10, kind: input, shape index: {}]
  %s11 = inlined_call_operand.hbm [shape: f32[128,128], index: 11, kind: input, shape index: {}]
  %s12 = inlined_call_operand.hbm [shape: f32[1,128], index: 12, kind: input, shape index: {}]
  %s13 = inlined_call_operand.hbm [shape: f32[128,128], index: 13, kind: input, shape index: {}]
  %s14 = inlined_call_operand.hbm [shape: f32[1,128], index: 14, kind: input, shape index: {}]
  %s15 = inlined_call_operand.hbm [shape: f32[4,1,128], index: 15, kind: output, shape index: {}]
  %s16 = sld [smem:[#allocation0]]
  $region141: #{net_forward.1} parent=0
    _
  %s18 = ssub.s32 1, %s16
  %s19 = scalar_select 0, %s18, %s16
  $region1: #{net_forward.1} parent=0
    #allocation2 [shape = 'u8[98304]{0}', space=vmem, size = 0x18000, scoped, tag = 'input window, operand 0']
    #allocation3 [shape = 's32[2]{0}', space=sflag, size = 0x8, scoped, tag = 'scoped memory for net_forward.1']
    #allocation4 [shape = 's32[2]{0}', space=sflag, size = 0x8, scoped, tag = 'scoped memory for net_forward.1']
    #allocation5 [shape = 'u8[491520]{0}', space=vmem, size = 0x78000, scoped, tag = 'input window, operand 1, single buffered']
    #allocation6 [shape = 's32[1]{0}', space=sflag, size = 0x4, scoped, tag = 'scoped memory for net_forward.1']
    #allocation7 [shape = 'u8[1024]{0}', space=vmem, size = 0x400, scoped, tag = 'input window, operand 2, single buffered']
    #allocation8 [shape = 'u8[8192]{0}', space=vmem, size = 0x2000, scoped, tag = 'input window, operand 4, single buffered']
    #allocation9 [shape = 's32[1]{0}', space=sflag, size = 0x4, scoped, tag = 'scoped memory for net_forward.1']
    #allocation10 [shape = 'u8[655360]{0}', space=vmem, size = 0xa0000, scoped, tag = 'input window, operand 5, single buffered']
    #allocation11 [shape = 'u8[4096]{0}', space=vmem, size = 0x1000, scoped, tag = 'input window, operand 8, single buffered']
    #allocation12 [shape = 's32[1]{0}', space=sflag, size = 0x4, scoped, tag = 'scoped memory for net_forward.1']
    #allocation13 [shape = 'u8[327680]{0}', space=vmem, size = 0x50000, scoped, tag = 'input window, operand 9, single buffered']
    #allocation14 [shape = 'u8[512]{0}', space=vmem, size = 0x400, scoped, tag = 'input window, operand 10, single buffered']
    #allocation15 [shape = 's32[1]{0}', space=sflag, size = 0x4, scoped, tag = 'scoped memory for net_forward.1']
    #allocation16 [shape = 'u8[65536]{0}', space=vmem, size = 0x10000, scoped, tag = 'input window, operand 11, single buffered']
    #allocation17 [shape = 'u8[512]{0}', space=vmem, size = 0x400, scoped, tag = 'input window, operand 12, single buffered']
    #allocation18 [shape = 's32[1]{0}', space=sflag, size = 0x4, scoped, tag = 'scoped memory for net_forward.1']
    #allocation19 [shape = 'u8[65536]{0}', space=vmem, size = 0x10000, scoped, tag = 'input window, operand 13, single buffered']
    #allocation20 [shape = 'u8[512]{0}', space=vmem, size = 0x400, scoped, tag = 'input window, operand 14, single buffered']
    #allocation21 [shape = 's32[1]{0}', space=sflag, size = 0x4, scoped, tag = 'scoped memory for net_forward.1']
    #allocation22 [shape = 'u8[1024]{0}', space=vmem, size = 0x400, scoped, tag = 'output window, operand 0']
    %20 = vsyncpa [#allocation3], 0
    %s21 = scalar_lea.sflag [#allocation3], 1
    %22 = vsyncpa %s21, 0
    %23 = vsyncpa [#allocation6], 0
    %24 = vsyncpa [#allocation9], 0
    %25 = vsyncpa [#allocation12], 0
    %26 = vsyncpa [#allocation15], 0
    %27 = vsyncpa [#allocation18], 0
    %28 = vsyncpa [#allocation21], 0
    %29 = vsyncpa [#allocation4], 0
    %s30 = scalar_lea.sflag [#allocation4], 1
    %31 = vsyncpa %s30, 0
    loop: start=0, step=1, limit=6
    $region2: #{net_forward.1} parent=1 // loop_pre_header
      _
    $region3: #{net_forward.1} parent=1 // loop_header
      %s33 = sphi 0, %s37
      %p34 = scmp.ge.s32.totalorder %s33, 6
      %s43 = sphi 0, %s45
      %s46 = sphi 0, %s43
      %s47 = sphi 0, %s46
      %s63 = sphi 0, %s47
      %s67 = sphi 0, %s67
      %s69 = sphi 0, %s67
      %s70 = sphi 0, %s69
      %s84 = sphi 0, %s70
      %s88 = sphi 0, %s88
      %s90 = sphi 0, %s88
      %s91 = sphi 0, %s90
      %s105 = sphi 0, %s91
      %s109 = sphi 0, %s109
      %s111 = sphi 0, %s109
      %s112 = sphi 0, %s111
      %s126 = sphi 0, %s112
      %s130 = sphi 0, %s130
      %s132 = sphi 0, %s130
      %s133 = sphi 0, %s132
      %s147 = sphi 0, %s133
      %s151 = sphi 0, %s151
      %s153 = sphi 0, %s151
      %s154 = sphi 0, %s153
      %s168 = sphi 0, %s154
      %s172 = sphi 0, %s172
      %s174 = sphi 0, %s172
      %s175 = sphi 0, %s174
      %s189 = sphi 0, %s175
      %s193 = sphi 0, %s193
      %s195 = sphi 0, %s193
      %s196 = sphi 0, %s195
      %s210 = sphi 0, %s196
      %s214 = sphi 0, %s214
      %s216 = sphi 0, %s214
      %s217 = sphi 0, %s216
      %s231 = sphi 0, %s217
      %s235 = sphi 0, %s235
      %s237 = sphi 0, %s235
      %s238 = sphi 0, %s237
      %s252 = sphi 0, %s238
      %s256 = sphi 0, %s256
      %s258 = sphi 0, %s256
      %s259 = sphi 0, %s258
      %s273 = sphi 0, %s259
      %s277 = sphi 0, %s277
      %s279 = sphi 0, %s277
      %s280 = sphi 0, %s279
      %s294 = sphi 0, %s280
      %s298 = sphi 0, %s298
      %s300 = sphi 0, %s298
      %s301 = sphi 0, %s300
      %s315 = sphi 0, %s301
      %s319 = sphi 0, %s319
      %s321 = sphi 0, %s319
      %s322 = sphi 0, %s321
      %s336 = sphi 0, %s322
      %s340 = sphi 0, %s340
      %s342 = sphi 0, %s340
      %s343 = sphi 0, %s342
      %s357 = sphi 0, %s343
      %s363 = sphi 0, %s365
      %s366 = sphi 0, %s363
      %s367 = sphi 0, %s366
      %s383 = sphi 0, %s367
    $region4: #{net_forward.1} parent=1 // loop_header_branch
      %36 = sbr.rel (%p34) target = $region8
    $region5: #{net_forward.1} parent=1 // loop_body
      %s38 = ssub.s32 %s33, 1
      %s39 = ssub.s32 %s33, 2
      %s40 = sadd.s32 %s33, 1
      %s41 = ssub.s32 %s33, %s40
      %p42 = scmp.eq.s32.totalorder %s41, 0
      %s44 = sadd.s32 %s43, 1
      %s45 = scalar_select %p42, %s43, %s44
      %p48 = pneg %p42
      %p49 = scmp.eq.s32.totalorder %s33, 3
      %p50 = por %p48, %p49
      %p51 = scmp.ne.s32.totalorder %s43, %s46
      %p52 = scmp.eq.s32.totalorder %s33, 0
      %p53 = por %p51, %p52
      %p54 = scmp.ne.s32.totalorder %s43, %s46
      %p55 = scmp.eq.s32.totalorder %s38, 3
      %p56 = por %p54, %p55
      %p57 = scmp.ne.s32.totalorder %s46, %s47
      %p58 = scmp.eq.s32.totalorder %s38, 0
      %p59 = por %p57, %p58
      %p60 = scmp.ne.s32.totalorder %s46, %s47
      %p61 = scmp.eq.s32.totalorder %s39, 3
      %p62 = por %p60, %p61
      %p64 = scmp.ne.s32.totalorder %s47, %s63
      %p65 = scmp.eq.s32.totalorder %s39, 0
      %p66 = por %p64, %p65
      %s68 = sadd.s32 %s67, 1
      %p71 = scmp.eq.s32.totalorder %s33, 3
      %p72 = scmp.ne.s32.totalorder %s67, %s69
      %p73 = scmp.eq.s32.totalorder %s33, 0
      %p74 = por %p72, %p73
      %p75 = scmp.ne.s32.totalorder %s67, %s69
      %p76 = scmp.eq.s32.totalorder %s38, 3
      %p77 = por %p75, %p76
      %p78 = scmp.ne.s32.totalorder %s69, %s70
      %p79 = scmp.eq.s32.totalorder %s38, 0
      %p80 = por %p78, %p79
      %p81 = scmp.ne.s32.totalorder %s69, %s70
      %p82 = scmp.eq.s32.totalorder %s39, 3
      %p83 = por %p81, %p82
      %p85 = scmp.ne.s32.totalorder %s70, %s84
      %p86 = scmp.eq.s32.totalorder %s39, 0
      %p87 = por %p85, %p86
      %s89 = sadd.s32 %s88, 1
      %p92 = scmp.eq.s32.totalorder %s33, 3
      %p93 = scmp.ne.s32.totalorder %s88, %s90
      %p94 = scmp.eq.s32.totalorder %s33, 0
      %p95 = por %p93, %p94
      %p96 = scmp.ne.s32.totalorder %s88, %s90
      %p97 = scmp.eq.s32.totalorder %s38, 3
      %p98 = por %p96, %p97
      %p99 = scmp.ne.s32.totalorder %s90, %s91
      %p100 = scmp.eq.s32.totalorder %s38, 0
      %p101 = por %p99, %p100
      %p102 = scmp.ne.s32.totalorder %s90, %s91
      %p103 = scmp.eq.s32.totalorder %s39, 3
      %p104 = por %p102, %p103
      %p106 = scmp.ne.s32.totalorder %s91, %s105
      %p107 = scmp.eq.s32.totalorder %s39, 0
      %p108 = por %p106, %p107
      %s110 = sadd.s32 %s109, 1
      %p113 = scmp.eq.s32.totalorder %s33, 3
      %p114 = scmp.ne.s32.totalorder %s109, %s111
      %p115 = scmp.eq.s32.totalorder %s33, 0
      %p116 = por %p114, %p115
      %p117 = scmp.ne.s32.totalorder %s109, %s111
      %p118 = scmp.eq.s32.totalorder %s38, 3
      %p119 = por %p117, %p118
      %p120 = scmp.ne.s32.totalorder %s111, %s112
      %p121 = scmp.eq.s32.totalorder %s38, 0
      %p122 = por %p120, %p121
      %p123 = scmp.ne.s32.totalorder %s111, %s112
      %p124 = scmp.eq.s32.totalorder %s39, 3
      %p125 = por %p123, %p124
      %p127 = scmp.ne.s32.totalorder %s112, %s126
      %p128 = scmp.eq.s32.totalorder %s39, 0
      %p129 = por %p127, %p128
      %s131 = sadd.s32 %s130, 1
      %p134 = scmp.eq.s32.totalorder %s33, 3
      %p135 = scmp.ne.s32.totalorder %s130, %s132
      %p136 = scmp.eq.s32.totalorder %s33, 0
      %p137 = por %p135, %p136
      %p138 = scmp.ne.s32.totalorder %s130, %s132
      %p139 = scmp.eq.s32.totalorder %s38, 3
      %p140 = por %p138, %p139
      %p141 = scmp.ne.s32.totalorder %s132, %s133
      %p142 = scmp.eq.s32.totalorder %s38, 0
      %p143 = por %p141, %p142
      %p144 = scmp.ne.s32.totalorder %s132, %s133
      %p145 = scmp.eq.s32.totalorder %s39, 3
      %p146 = por %p144, %p145
      %p148 = scmp.ne.s32.totalorder %s133, %s147
      %p149 = scmp.eq.s32.totalorder %s39, 0
      %p150 = por %p148, %p149
      %s152 = sadd.s32 %s151, 1
      %p155 = scmp.eq.s32.totalorder %s33, 3
      %p156 = scmp.ne.s32.totalorder %s151, %s153
      %p157 = scmp.eq.s32.totalorder %s33, 0
      %p158 = por %p156, %p157
      %p159 = scmp.ne.s32.totalorder %s151, %s153
      %p160 = scmp.eq.s32.totalorder %s38, 3
      %p161 = por %p159, %p160
      %p162 = scmp.ne.s32.totalorder %s153, %s154
      %p163 = scmp.eq.s32.totalorder %s38, 0
      %p164 = por %p162, %p163
      %p165 = scmp.ne.s32.totalorder %s153, %s154
      %p166 = scmp.eq.s32.totalorder %s39, 3
      %p167 = por %p165, %p166
      %p169 = scmp.ne.s32.totalorder %s154, %s168
      %p170 = scmp.eq.s32.totalorder %s39, 0
      %p171 = por %p169, %p170
      %s173 = sadd.s32 %s172, 1
      %p176 = scmp.eq.s32.totalorder %s33, 3
      %p177 = scmp.ne.s32.totalorder %s172, %s174
      %p178 = scmp.eq.s32.totalorder %s33, 0
      %p179 = por %p177, %p178
      %p180 = scmp.ne.s32.totalorder %s172, %s174
      %p181 = scmp.eq.s32.totalorder %s38, 3
      %p182 = por %p180, %p181
      %p183 = scmp.ne.s32.totalorder %s174, %s175
      %p184 = scmp.eq.s32.totalorder %s38, 0
      %p185 = por %p183, %p184
      %p186 = scmp.ne.s32.totalorder %s174, %s175
      %p187 = scmp.eq.s32.totalorder %s39, 3
      %p188 = por %p186, %p187
      %p190 = scmp.ne.s32.totalorder %s175, %s189
      %p191 = scmp.eq.s32.totalorder %s39, 0
      %p192 = por %p190, %p191
      %s194 = sadd.s32 %s193, 1
      %p197 = scmp.eq.s32.totalorder %s33, 3
      %p198 = scmp.ne.s32.totalorder %s193, %s195
      %p199 = scmp.eq.s32.totalorder %s33, 0
      %p200 = por %p198, %p199
      %p201 = scmp.ne.s32.totalorder %s193, %s195
      %p202 = scmp.eq.s32.totalorder %s38, 3
      %p203 = por %p201, %p202
      %p204 = scmp.ne.s32.totalorder %s195, %s196
      %p205 = scmp.eq.s32.totalorder %s38, 0
      %p206 = por %p204, %p205
      %p207 = scmp.ne.s32.totalorder %s195, %s196
      %p208 = scmp.eq.s32.totalorder %s39, 3
      %p209 = por %p207, %p208
      %p211 = scmp.ne.s32.totalorder %s196, %s210
      %p212 = scmp.eq.s32.totalorder %s39, 0
      %p213 = por %p211, %p212
      %s215 = sadd.s32 %s214, 1
      %p218 = scmp.eq.s32.totalorder %s33, 3
      %p219 = scmp.ne.s32.totalorder %s214, %s216
      %p220 = scmp.eq.s32.totalorder %s33, 0
      %p221 = por %p219, %p220
      %p222 = scmp.ne.s32.totalorder %s214, %s216
      %p223 = scmp.eq.s32.totalorder %s38, 3
      %p224 = por %p222, %p223
      %p225 = scmp.ne.s32.totalorder %s216, %s217
      %p226 = scmp.eq.s32.totalorder %s38, 0
      %p227 = por %p225, %p226
      %p228 = scmp.ne.s32.totalorder %s216, %s217
      %p229 = scmp.eq.s32.totalorder %s39, 3
      %p230 = por %p228, %p229
      %p232 = scmp.ne.s32.totalorder %s217, %s231
      %p233 = scmp.eq.s32.totalorder %s39, 0
      %p234 = por %p232, %p233
      %s236 = sadd.s32 %s235, 1
      %p239 = scmp.eq.s32.totalorder %s33, 3
      %p240 = scmp.ne.s32.totalorder %s235, %s237
      %p241 = scmp.eq.s32.totalorder %s33, 0
      %p242 = por %p240, %p241
      %p243 = scmp.ne.s32.totalorder %s235, %s237
      %p244 = scmp.eq.s32.totalorder %s38, 3
      %p245 = por %p243, %p244
      %p246 = scmp.ne.s32.totalorder %s237, %s238
      %p247 = scmp.eq.s32.totalorder %s38, 0
      %p248 = por %p246, %p247
      %p249 = scmp.ne.s32.totalorder %s237, %s238
      %p250 = scmp.eq.s32.totalorder %s39, 3
      %p251 = por %p249, %p250
      %p253 = scmp.ne.s32.totalorder %s238, %s252
      %p254 = scmp.eq.s32.totalorder %s39, 0
      %p255 = por %p253, %p254
      %s257 = sadd.s32 %s256, 1
      %p260 = scmp.eq.s32.totalorder %s33, 3
      %p261 = scmp.ne.s32.totalorder %s256, %s258
      %p262 = scmp.eq.s32.totalorder %s33, 0
      %p263 = por %p261, %p262
      %p264 = scmp.ne.s32.totalorder %s256, %s258
      %p265 = scmp.eq.s32.totalorder %s38, 3
      %p266 = por %p264, %p265
      %p267 = scmp.ne.s32.totalorder %s258, %s259
      %p268 = scmp.eq.s32.totalorder %s38, 0
      %p269 = por %p267, %p268
      %p270 = scmp.ne.s32.totalorder %s258, %s259
      %p271 = scmp.eq.s32.totalorder %s39, 3
      %p272 = por %p270, %p271
      %p274 = scmp.ne.s32.totalorder %s259, %s273
      %p275 = scmp.eq.s32.totalorder %s39, 0
      %p276 = por %p274, %p275
      %s278 = sadd.s32 %s277, 1
      %p281 = scmp.eq.s32.totalorder %s33, 3
      %p282 = scmp.ne.s32.totalorder %s277, %s279
      %p283 = scmp.eq.s32.totalorder %s33, 0
      %p284 = por %p282, %p283
      %p285 = scmp.ne.s32.totalorder %s277, %s279
      %p286 = scmp.eq.s32.totalorder %s38, 3
      %p287 = por %p285, %p286
      %p288 = scmp.ne.s32.totalorder %s279, %s280
      %p289 = scmp.eq.s32.totalorder %s38, 0
      %p290 = por %p288, %p289
      %p291 = scmp.ne.s32.totalorder %s279, %s280
      %p292 = scmp.eq.s32.totalorder %s39, 3
      %p293 = por %p291, %p292
      %p295 = scmp.ne.s32.totalorder %s280, %s294
      %p296 = scmp.eq.s32.totalorder %s39, 0
      %p297 = por %p295, %p296
      %s299 = sadd.s32 %s298, 1
      %p302 = scmp.eq.s32.totalorder %s33, 3
      %p303 = scmp.ne.s32.totalorder %s298, %s300
      %p304 = scmp.eq.s32.totalorder %s33, 0
      %p305 = por %p303, %p304
      %p306 = scmp.ne.s32.totalorder %s298, %s300
      %p307 = scmp.eq.s32.totalorder %s38, 3
      %p308 = por %p306, %p307
      %p309 = scmp.ne.s32.totalorder %s300, %s301
      %p310 = scmp.eq.s32.totalorder %s38, 0
      %p311 = por %p309, %p310
      %p312 = scmp.ne.s32.totalorder %s300, %s301
      %p313 = scmp.eq.s32.totalorder %s39, 3
      %p314 = por %p312, %p313
      %p316 = scmp.ne.s32.totalorder %s301, %s315
      %p317 = scmp.eq.s32.totalorder %s39, 0
      %p318 = por %p316, %p317
      %s320 = sadd.s32 %s319, 1
      %p323 = scmp.eq.s32.totalorder %s33, 3
      %p324 = scmp.ne.s32.totalorder %s319, %s321
      %p325 = scmp.eq.s32.totalorder %s33, 0
      %p326 = por %p324, %p325
      %p327 = scmp.ne.s32.totalorder %s319, %s321
      %p328 = scmp.eq.s32.totalorder %s38, 3
      %p329 = por %p327, %p328
      %p330 = scmp.ne.s32.totalorder %s321, %s322
      %p331 = scmp.eq.s32.totalorder %s38, 0
      %p332 = por %p330, %p331
      %p333 = scmp.ne.s32.totalorder %s321, %s322
      %p334 = scmp.eq.s32.totalorder %s39, 3
      %p335 = por %p333, %p334
      %p337 = scmp.ne.s32.totalorder %s322, %s336
      %p338 = scmp.eq.s32.totalorder %s39, 0
      %p339 = por %p337, %p338
      %s341 = sadd.s32 %s340, 1
      %p344 = scmp.eq.s32.totalorder %s33, 3
      %p345 = scmp.ne.s32.totalorder %s340, %s342
      %p346 = scmp.eq.s32.totalorder %s33, 0
      %p347 = por %p345, %p346
      %p348 = scmp.ne.s32.totalorder %s340, %s342
      %p349 = scmp.eq.s32.totalorder %s38, 3
      %p350 = por %p348, %p349
      %p351 = scmp.ne.s32.totalorder %s342, %s343
      %p352 = scmp.eq.s32.totalorder %s38, 0
      %p353 = por %p351, %p352
      %p354 = scmp.ne.s32.totalorder %s342, %s343
      %p355 = scmp.eq.s32.totalorder %s39, 3
      %p356 = por %p354, %p355
      %p358 = scmp.ne.s32.totalorder %s343, %s357
      %p359 = scmp.eq.s32.totalorder %s39, 0
      %p360 = por %p358, %p359
      %s361 = ssub.s32 %s33, %s40
      %p362 = scmp.eq.s32.totalorder %s361, 0
      %s364 = sadd.s32 %s363, 1
      %s365 = scalar_select %p362, %s363, %s364
      %p368 = pneg %p362
      %p369 = scmp.eq.s32.totalorder %s33, 3
      %p370 = por %p368, %p369
      %p371 = scmp.ne.s32.totalorder %s363, %s366
      %p372 = scmp.eq.s32.totalorder %s33, 0
      %p373 = por %p371, %p372
      %p374 = scmp.ne.s32.totalorder %s363, %s366
      %p375 = scmp.eq.s32.totalorder %s38, 3
      %p376 = por %p374, %p375
      %p377 = scmp.ne.s32.totalorder %s366, %s367
      %p378 = scmp.eq.s32.totalorder %s38, 0
      %p379 = por %p377, %p378
      %p380 = scmp.ne.s32.totalorder %s366, %s367
      %p381 = scmp.eq.s32.totalorder %s39, 3
      %p382 = por %p380, %p381
      %p384 = scmp.ne.s32.totalorder %s367, %s383
      %p385 = scmp.eq.s32.totalorder %s39, 0
      %p386 = por %p384, %p385
      %p387 = scmp.le.s32.totalorder 1, %s33
      %p388 = scmp.lt.s32.totalorder %s33, 5
      %p389 = pnand %p387, %p388
      %p390 = pneg %p389
      // Predicated region
      $region9: #{net_forward.1} parent=5 // pred_check
        _
      $region10: #{net_forward.1} parent=5 // pred_check_branch
        %392 = sbr.rel (%p389) target = $region12
      $region11: #{net_forward.1} parent=5 // pred_region
        %s393 = ssub.s32 %s33, 1
        // Predicated region
        $region13: #{net_forward.1} parent=11 // pred_check
          %p394 = pneg %p80
        $region14: #{net_forward.1} parent=11 // pred_check_branch
          %396 = sbr.rel (%p394) target = $region16
        $region15: #{net_forward.1} parent=11 // pred_region
          %s398 = ssub.s32 15360, 15360
          %399 = vsyncadd [#allocation6], %s398
          %s400 = sshll.u32 [#allocation5], 4
          %s401 = int_to_ptr.vmem [resolvable:$true] %s400
          %406 = dma.hbm_to_vmem [thread:$0]  %s1, 15360, %s401, [#allocation6], 256, 256, 16
        $region16: #{net_forward.1} parent=11 // pred_fallthru
          _
        // Predicated region
        $region17: #{net_forward.1} parent=11 // pred_check
          %p407 = pneg %p101
        $region18: #{net_forward.1} parent=11 // pred_check_branch
          %409 = sbr.rel (%p407) target = $region20
        $region19: #{net_forward.1} parent=11 // pred_region
          %s411 = ssub.s32 32, 32
          %412 = vsyncadd [#allocation6], %s411
          %s414 = sshll.u32 [#allocation7], 4
          %s415 = int_to_ptr.vmem [resolvable:$true] %s414
          %417 = dma.hbm_to_vmem [thread:$0]  %s2, 32, %s415, [#allocation6]
        $region20: #{net_forward.1} parent=11 // pred_fallthru
          _
        // Predicated region
        $region21: #{net_forward.1} parent=11 // pred_check
          %p418 = pneg %p122
        $region22: #{net_forward.1} parent=11 // pred_check_branch
          %420 = sbr.rel (%p418) target = $region24
        $region23: #{net_forward.1} parent=11 // pred_region
          _
        $region24: #{net_forward.1} parent=11 // pred_fallthru
          _
        // Predicated region
        $region25: #{net_forward.1} parent=11 // pred_check
          %p421 = pneg %p143
        $region26: #{net_forward.1} parent=11 // pred_check_branch
          %423 = sbr.rel (%p421) target = $region28
        $region27: #{net_forward.1} parent=11 // pred_region
          %s425 = ssub.s32 256, 256
          %426 = vsyncadd [#allocation9], %s425
          %s427 = sshll.u32 [#allocation8], 4
          %s428 = int_to_ptr.vmem [resolvable:$true] %s427
          %433 = dma.hbm_to_vmem [thread:$0]  %s4, 256, %s428, [#allocation9], 128, 128, 8
        $region28: #{net_forward.1} parent=11 // pred_fallthru
          _
        // Predicated region
        $region29: #{net_forward.1} parent=11 // pred_check
          %p434 = pneg %p164
        $region30: #{net_forward.1} parent=11 // pred_check_branch
          %436 = sbr.rel (%p434) target = $region32
        $region31: #{net_forward.1} parent=11 // pred_region
          %s438 = ssub.s32 20480, 20480
          %439 = vsyncadd [#allocation9], %s438
          %s440 = sshll.u32 [#allocation10], 4
          %s441 = int_to_ptr.vmem [resolvable:$true] %s440
          %446 = dma.hbm_to_vmem [thread:$0]  %s5, 20480, %s441, [#allocation9], 256, 256, 16
        $region32: #{net_forward.1} parent=11 // pred_fallthru
          _
        // Predicated region
        $region33: #{net_forward.1} parent=11 // pred_check
          %p447 = pneg %p185
        $region34: #{net_forward.1} parent=11 // pred_check_branch
          %449 = sbr.rel (%p447) target = $region36
        $region35: #{net_forward.1} parent=11 // pred_region
          _
        $region36: #{net_forward.1} parent=11 // pred_fallthru
          _
        // Predicated region
        $region37: #{net_forward.1} parent=11 // pred_check
          %p450 = pneg %p206
        $region38: #{net_forward.1} parent=11 // pred_check_branch
          %452 = sbr.rel (%p450) target = $region40
        $region39: #{net_forward.1} parent=11 // pred_region
          _
        $region40: #{net_forward.1} parent=11 // pred_fallthru
          _
        // Predicated region
        $region41: #{net_forward.1} parent=11 // pred_check
          %p453 = pneg %p227
        $region42: #{net_forward.1} parent=11 // pred_check_branch
          %455 = sbr.rel (%p453) target = $region44
        $region43: #{net_forward.1} parent=11 // pred_region
          %s457 = ssub.s32 128, 128
          %458 = vsyncadd [#allocation12], %s457
          %s460 = sshll.u32 [#allocation11], 4
          %s461 = int_to_ptr.vmem [resolvable:$true] %s460
          %463 = dma.hbm_to_vmem [thread:$0]  %s8, 128, %s461, [#allocation12]
        $region44: #{net_forward.1} parent=11 // pred_fallthru
          _
        // Predicated region
        $region45: #{net_forward.1} parent=11 // pred_check
          %p464 = pneg %p248
        $region46: #{net_forward.1} parent=11 // pred_check_branch
          %466 = sbr.rel (%p464) target = $region48
        $region47: #{net_forward.1} parent=11 // pred_region
          %s468 = ssub.s32 10240, 10240
          %469 = vsyncadd [#allocation12], %s468
          %s470 = sshll.u32 [#allocation13], 4
          %s471 = int_to_ptr.vmem [resolvable:$true] %s470
          %476 = dma.hbm_to_vmem [thread:$0]  %s9, 10240, %s471, [#allocation12], 128, 128, 8
        $region48: #{net_forward.1} parent=11 // pred_fallthru
          _
        // Predicated region
        $region49: #{net_forward.1} parent=11 // pred_check
          %p477 = pneg %p269
        $region50: #{net_forward.1} parent=11 // pred_check_branch
          %479 = sbr.rel (%p477) target = $region52
        $region51: #{net_forward.1} parent=11 // pred_region
          %s481 = ssub.s32 16, 16
          %482 = vsyncadd [#allocation15], %s481
          %s484 = sshll.u32 [#allocation14], 4
          %s485 = int_to_ptr.vmem [resolvable:$true] %s484
          %487 = dma.hbm_to_vmem [thread:$0]  %s10, 16, %s485, [#allocation15]
        $region52: #{net_forward.1} parent=11 // pred_fallthru
          _
        // Predicated region
        $region53: #{net_forward.1} parent=11 // pred_check
          %p488 = pneg %p290
        $region54: #{net_forward.1} parent=11 // pred_check_branch
          %490 = sbr.rel (%p488) target = $region56
        $region55: #{net_forward.1} parent=11 // pred_region
          %s492 = ssub.s32 2048, 2048
          %493 = vsyncadd [#allocation15], %s492
          %s494 = sshll.u32 [#allocation16], 4
          %s495 = int_to_ptr.vmem [resolvable:$true] %s494
          %500 = dma.hbm_to_vmem [thread:$0]  %s11, 2048, %s495, [#allocation15], 128, 128, 8
        $region56: #{net_forward.1} parent=11 // pred_fallthru
          _
        // Predicated region
        $region57: #{net_forward.1} parent=11 // pred_check
          %p501 = pneg %p311
        $region58: #{net_forward.1} parent=11 // pred_check_branch
          %503 = sbr.rel (%p501) target = $region60
        $region59: #{net_forward.1} parent=11 // pred_region
          %s505 = ssub.s32 16, 16
          %506 = vsyncadd [#allocation18], %s505
          %s508 = sshll.u32 [#allocation17], 4
          %s509 = int_to_ptr.vmem [resolvable:$true] %s508
          %511 = dma.hbm_to_vmem [thread:$0]  %s12, 16, %s509, [#allocation18]
        $region60: #{net_forward.1} parent=11 // pred_fallthru
          _
        // Predicated region
        $region61: #{net_forward.1} parent=11 // pred_check
          %p512 = pneg %p332
        $region62: #{net_forward.1} parent=11 // pred_check_branch
          %514 = sbr.rel (%p512) target = $region64
        $region63: #{net_forward.1} parent=11 // pred_region
          %s516 = ssub.s32 2048, 2048
          %517 = vsyncadd [#allocation18], %s516
          %s518 = sshll.u32 [#allocation19], 4
          %s519 = int_to_ptr.vmem [resolvable:$true] %s518
          %524 = dma.hbm_to_vmem [thread:$0]  %s13, 2048, %s519, [#allocation18], 128, 128, 8
        $region64: #{net_forward.1} parent=11 // pred_fallthru
          _
        // Predicated region
        $region65: #{net_forward.1} parent=11 // pred_check
          %p525 = pneg %p353
        $region66: #{net_forward.1} parent=11 // pred_check_branch
          %527 = sbr.rel (%p525) target = $region68
        $region67: #{net_forward.1} parent=11 // pred_region
          %s529 = ssub.s32 16, 16
          %530 = vsyncadd [#allocation21], %s529
          %s532 = sshll.u32 [#allocation20], 4
          %s533 = int_to_ptr.vmem [resolvable:$true] %s532
          %535 = dma.hbm_to_vmem [thread:$0]  %s14, 16, %s533, [#allocation21]
        $region68: #{net_forward.1} parent=11 // pred_fallthru
          _
      $region12: #{net_forward.1} parent=5 // pred_fallthru
        _
      %p536 = scmp.lt.s32.totalorder %s33, 4
      // Predicated region
      $region69: #{net_forward.1} parent=5 // pred_check
        %p537 = pneg %p536
      $region70: #{net_forward.1} parent=5 // pred_check_branch
        %539 = sbr.rel (%p537) target = $region72
      $region71: #{net_forward.1} parent=5 // pred_region
        // Predicated region
        $region73: #{net_forward.1} parent=71 // pred_check
          %p540 = pneg %p53
        $region74: #{net_forward.1} parent=71 // pred_check_branch
          %542 = sbr.rel (%p540) target = $region76
        $region75: #{net_forward.1} parent=71 // pred_region
          %s543 = sand.u32 %s43, 1
          %s544 = scalar_lea.sflag [#allocation3], %s543
          %s545 = sand.u32 %s43, 1
          %s546 = smul.addr %s545, 96
          %s547 = scalar_lea.vmem [#allocation2], %s546
          %s549 = ssub.s32 1536, 1536
          %550 = vsyncadd %s544, %s549
          %s551 = smul.addr %s33, 12
          %s552 = smul.addr %s551, 128
          %s553 = scalar_lea.hbm %s0, %s552
          %s554 = sshll.u32 %s547, 4
          %s555 = int_to_ptr.vmem [resolvable:$true] %s554
          %560 = dma.hbm_to_vmem [thread:$0]  %s553, 1536, %s555, %s544, 128, 128, 8
        $region76: #{net_forward.1} parent=71 // pred_fallthru
          _
      $region72: #{net_forward.1} parent=5 // pred_fallthru
        _
      %p561 = scmp.le.s32.totalorder 1, %s33
      %p562 = scmp.lt.s32.totalorder %s33, 5
      %p563 = pnand %p561, %p562
      %p564 = pneg %p563
      // Predicated region
      $region77: #{net_forward.1} parent=5 // pred_check
        _
      $region78: #{net_forward.1} parent=5 // pred_check_branch
        %566 = sbr.rel (%p563) target = $region80
      $region79: #{net_forward.1} parent=5 // pred_region
        %s567 = ssub.s32 %s33, 1
        %s568 = sand.u32 %s46, 1
        %s569 = scalar_lea.sflag [#allocation3], %s568
        %s570 = sand.u32 %s46, 1
        %s571 = smul.addr %s570, 96
        %s572 = scalar_lea.vmem [#allocation2], %s571
        // Predicated region
        $region81: #{net_forward.1} parent=79 // pred_check
          %p573 = pneg %p59
        $region82: #{net_forward.1} parent=79 // pred_check_branch
          %575 = sbr.rel (%p573) target = $region84
        $region83: #{net_forward.1} parent=79 // pred_region
          %576 = dma.done %s569, 1536
        $region84: #{net_forward.1} parent=79 // pred_fallthru
          _
        // Predicated region
        $region85: #{net_forward.1} parent=79 // pred_check
          %p577 = pneg %p80
        $region86: #{net_forward.1} parent=79 // pred_check_branch
          %579 = sbr.rel (%p577) target = $region88
        $region87: #{net_forward.1} parent=79 // pred_region
          %580 = dma.done [#allocation6], 15360
        $region88: #{net_forward.1} parent=79 // pred_fallthru
          _
        // Predicated region
        $region89: #{net_forward.1} parent=79 // pred_check
          %p581 = pneg %p101
        $region90: #{net_forward.1} parent=79 // pred_check_branch
          %583 = sbr.rel (%p581) target = $region92
        $region91: #{net_forward.1} parent=79 // pred_region
          %584 = dma.done [#allocation6], 32
        $region92: #{net_forward.1} parent=79 // pred_fallthru
          _
        // Predicated region
        $region93: #{net_forward.1} parent=79 // pred_check
          %p585 = pneg %p143
        $region94: #{net_forward.1} parent=79 // pred_check_branch
          %587 = sbr.rel (%p585) target = $region96
        $region95: #{net_forward.1} parent=79 // pred_region
          %588 = dma.done [#allocation9], 256
        $region96: #{net_forward.1} parent=79 // pred_fallthru
          _
        // Predicated region
        $region97: #{net_forward.1} parent=79 // pred_check
          %p589 = pneg %p164
        $region98: #{net_forward.1} parent=79 // pred_check_branch
          %591 = sbr.rel (%p589) target = $region100
        $region99: #{net_forward.1} parent=79 // pred_region
          %592 = dma.done [#allocation9], 20480
        $region100: #{net_forward.1} parent=79 // pred_fallthru
          _
        // Predicated region
        $region101: #{net_forward.1} parent=79 // pred_check
          %p593 = pneg %p227
        $region102: #{net_forward.1} parent=79 // pred_check_branch
          %595 = sbr.rel (%p593) target = $region104
        $region103: #{net_forward.1} parent=79 // pred_region
          %596 = dma.done [#allocation12], 128
        $region104: #{net_forward.1} parent=79 // pred_fallthru
          _
        // Predicated region
        $region105: #{net_forward.1} parent=79 // pred_check
          %p597 = pneg %p248
        $region106: #{net_forward.1} parent=79 // pred_check_branch
          %599 = sbr.rel (%p597) target = $region108
        $region107: #{net_forward.1} parent=79 // pred_region
          %600 = dma.done [#allocation12], 10240
        $region108: #{net_forward.1} parent=79 // pred_fallthru
          _
        // Predicated region
        $region109: #{net_forward.1} parent=79 // pred_check
          %p601 = pneg %p269
        $region110: #{net_forward.1} parent=79 // pred_check_branch
          %603 = sbr.rel (%p601) target = $region112
        $region111: #{net_forward.1} parent=79 // pred_region
          %604 = dma.done [#allocation15], 16
        $region112: #{net_forward.1} parent=79 // pred_fallthru
          _
        // Predicated region
        $region113: #{net_forward.1} parent=79 // pred_check
          %p605 = pneg %p290
        $region114: #{net_forward.1} parent=79 // pred_check_branch
          %607 = sbr.rel (%p605) target = $region116
        $region115: #{net_forward.1} parent=79 // pred_region
          %608 = dma.done [#allocation15], 2048
        $region116: #{net_forward.1} parent=79 // pred_fallthru
          _
        // Predicated region
        $region117: #{net_forward.1} parent=79 // pred_check
          %p609 = pneg %p311
        $region118: #{net_forward.1} parent=79 // pred_check_branch
          %611 = sbr.rel (%p609) target = $region120
        $region119: #{net_forward.1} parent=79 // pred_region
          %612 = dma.done [#allocation18], 16
        $region120: #{net_forward.1} parent=79 // pred_fallthru
          _
        // Predicated region
        $region121: #{net_forward.1} parent=79 // pred_check
          %p613 = pneg %p332
        $region122: #{net_forward.1} parent=79 // pred_check_branch
          %615 = sbr.rel (%p613) target = $region124
        $region123: #{net_forward.1} parent=79 // pred_region
          %616 = dma.done [#allocation18], 2048
        $region124: #{net_forward.1} parent=79 // pred_fallthru
          _
        // Predicated region
        $region125: #{net_forward.1} parent=79 // pred_check
          %p617 = pneg %p353
        $region126: #{net_forward.1} parent=79 // pred_check_branch
          %619 = sbr.rel (%p617) target = $region128
        $region127: #{net_forward.1} parent=79 // pred_region
          %620 = dma.done [#allocation21], 16
        $region128: #{net_forward.1} parent=79 // pred_fallthru
          _
        %s621 = sand.u32 %s46, 1
        %s622 = scalar_lea.sflag [#allocation3], %s621
        %s623 = sand.u32 %s46, 1
        %s624 = smul.addr %s623, 96
        %s625 = scalar_lea.vmem [#allocation2], %s624
        %p626 = pneg %p59
        %p627 = pneg %p56
        %p628 = pneg %p80
        %p629 = pneg %p77
        %p630 = pneg %p101
        %p631 = pneg %p98
        %p632 = pneg %p122
        %p633 = pneg %p119
        %p634 = pneg %p143
        %p635 = pneg %p140
        %p636 = pneg %p164
        %p637 = pneg %p161
        %p638 = pneg %p185
        %p639 = pneg %p182
        %p640 = pneg %p206
        %p641 = pneg %p203
        %p642 = pneg %p227
        %p643 = pneg %p224
        %p644 = pneg %p248
        %p645 = pneg %p245
        %p646 = pneg %p269
        %p647 = pneg %p266
        %p648 = pneg %p290
        %p649 = pneg %p287
        %p650 = pneg %p311
        %p651 = pneg %p308
        %p652 = pneg %p332
        %p653 = pneg %p329
        %p654 = pneg %p353
        %p655 = pneg %p350
        %p656 = pneg %p379
        %p657 = pneg %p376
        %s658 = sand.u32 %s366, 1
        %s659 = scalar_lea.sflag [#allocation4], %s658
        %s660 = sand.u32 %s366, 1
        %s661 = scalar_lea.vmem [#allocation22], %s660
        %v662 = vld [vmem:[%s572] sm:$0xff]
        %v663 = vld [vmem:[%s572 + $0x8] sm:$0xff]
        %v664 = vld [vmem:[%s572 + $0x10] sm:$0xff]
        %v665 = vld [vmem:[%s572 + $0x18] sm:$0xf]
        %v666 = vld [vmem:[#allocation5] sm:$0xff]
        %v667 = vld [vmem:[#allocation5 + $0x8] sm:$0xff]
        %v668 = vld [vmem:[#allocation5 + $0x10] sm:$0xff]
        %v669 = vld [vmem:[#allocation5 + $0x18] sm:$0xff]
        %v670 = vld [vmem:[#allocation5 + $0x20] sm:$0xff]
        %v671 = vld [vmem:[#allocation5 + $0x28] sm:$0xff]
        %v672 = vld [vmem:[#allocation5 + $0x30] sm:$0xff]
        %v673 = vld [vmem:[#allocation5 + $0x38] sm:$0xff]
        %v674 = vld [vmem:[%s572 + $0x1] sm:$0xff]
        %v675 = vld [vmem:[%s572 + $0x9] sm:$0xff]
        %v676 = vld [vmem:[%s572 + $0x11] sm:$0xff]
        %v677 = vld [vmem:[%s572 + $0x19] sm:$0xf]
        %s678 = scalar_lea.vmem [#allocation5], 64
        %v679 = vld [vmem:[%s678] sm:$0xff]
        %v680 = vld [vmem:[%s678 + $0x8] sm:$0xff]
        %v681 = vld [vmem:[%s678 + $0x10] sm:$0xff]
        %v682 = vld [vmem:[%s678 + $0x18] sm:$0xff]
        %v683 = vld [vmem:[%s678 + $0x20] sm:$0xff]
        %v684 = vld [vmem:[%s678 + $0x28] sm:$0xff]
        %v685 = vld [vmem:[%s678 + $0x30] sm:$0xff]
        %v686 = vld [vmem:[%s678 + $0x38] sm:$0xff]
        %vm687 = vcmask 261120
        %v689 = vsel %vm687, %v674, 0
        %v692 = vsel %vm687, %v675, 0
        %v695 = vsel %vm687, %v676, 0
        %v698 = vsel %vm687, %v677, 0
        %700 = vmatprep.subr.mxu0 %v680
        %701 = vmatpush1.msra.mxu0 %v679
        %702 = vmatprep.subr.mxu0 %v682
        %703 = vmatpush1.msra.mxu0 %v681
        %704 = vmatprep.subr.mxu0 %v684
        %705 = vmatpush1.msra.mxu0 %v683
        %706 = vmatprep.subr.mxu0 %v686
        %707 = vmatpush1.msra.mxu0 %v685
        %708 = vmatprep.subr.mxu0 0.0
        %709 = vmatpush1.msra.mxu0 0.0
        %710 = vmatprep.subr.mxu0 0.0
        %711 = vmatpush1.msra.mxu0 0.0
        %712 = vmatprep.subr.mxu0 0.0
        %713 = vmatpush1.msra.mxu0 0.0
        %714 = vmatprep.subr.mxu0 0.0
        %715 = vmatpush1.msra.mxu0 0.0
        %716 = vmatprep.subr.mxu0 0.0
        %717 = vmatpush1.msra.mxu0 0.0
        %718 = vmatprep.subr.mxu0 0.0
        %719 = vmatpush1.msra.mxu0 0.0
        %720 = vmatprep.subr.mxu0 0.0
        %721 = vmatpush1.msra.mxu0 0.0
        %722 = vmatprep.subr.mxu0 0.0
        %723 = vmatpush1.msra.mxu0 0.0
        %724 = vmatprep.subr.mxu0 0.0
        %725 = vmatpush1.msra.mxu0 0.0
        %726 = vmatprep.subr.mxu0 0.0
        %727 = vmatpush1.msra.mxu0 0.0
        %728 = vmatprep.subr.mxu0 0.0
        %729 = vmatpush1.msra.mxu0 0.0
        %730 = vmatprep.subr.mxu0 0.0
        %731 = vmatpush1.msra.mxu0 0.0
        %732 = vmatprep.subr.mxu0 0.0
        %733 = vmatpush1.msra.mxu0 0.0
        %734 = vmatprep.subr.mxu0 0.0
        %735 = vmatpush1.msra.mxu0 0.0
        %736 = vmatprep.subr.mxu0 0.0
        %737 = vmatpush1.msra.mxu0 0.0
        %738 = vmatprep.subr.mxu0 0.0
        %739 = vmatpush1.msra.mxu0 0.0
        %740 = vmatprep.subr.mxu0 0.0
        %741 = vmatpush1.msra.mxu0 0.0
        %742 = vmatprep.subr.mxu0 0.0
        %743 = vmatpush1.msra.mxu0 0.0
        %744 = vmatprep.subr.mxu0 0.0
        %745 = vmatpush1.msra.mxu0 0.0
        %746 = vmatprep.subr.mxu0 0.0
        %747 = vmatpush1.msra.mxu0 0.0
        %748 = vmatprep.subr.mxu0 0.0
        %749 = vmatpush1.msra.mxu0 0.0
        %750 = vmatprep.subr.mxu0 0.0
        %751 = vmatpush1.msra.mxu0 0.0
        %752 = vmatprep.subr.mxu0 0.0
        %753 = vmatpush1.msra.mxu0 0.0
        %754 = vmatprep.subr.mxu0 0.0
        %755 = vmatpush1.msra.mxu0 0.0
        %756 = vmatprep.subr.mxu0 0.0
        %757 = vmatpush1.msra.mxu0 0.0
        %758 = vmatprep.subr.mxu0 0.0
        %759 = vmatpush1.msra.mxu0 0.0
        %760 = vmatprep.subr.mxu0 0.0
        %761 = vmatpush1.msra.mxu0 0.0
        %762 = vmatprep.subr.mxu0 0.0
        %763 = vmatpush1.msra.mxu0 0.0
        %764 = vmatprep.mubr.f32.mxu0 0.0
        %765 = vmatmul.mubr.f32.gmra.mrb[0].mxu0 %v689
        %v766 = vpop.f32.mrb[0].mxu0
        %v767 = vadd.f32 0.0, %v766
        %v768 = vpop.f32.mrb[0].mxu0
        %v769 = vadd.f32 0.0, %v768
        %770 = vmatprep.mubr.f32.mxu0 0.0
        %771 = vmatmul.mubr.f32.gmra.mrb[0].mxu0 %v692
        %v772 = vpop.f32.mrb[0].mxu0
        %v773 = vadd.f32 0.0, %v772
        %v774 = vpop.f32.mrb[0].mxu0
        %v775 = vadd.f32 0.0, %v774
        %776 = vmatprep.mubr.f32.mxu0 0.0
        %777 = vmatmul.mubr.f32.gmra.mrb[0].mxu0 %v695
        %v778 = vpop.f32.mrb[0].mxu0
        %v779 = vadd.f32 0.0, %v778
        %v780 = vpop.f32.mrb[0].mxu0
        %v781 = vadd.f32 0.0, %v780
        %782 = vmatprep.mubr.f32.mxu0 0.0
        %783 = vmatmul.mubr.f32.gmra.mrb[0].mxu0 %v698
        %v784 = vpop.f32.mrb[0].mxu0
        %v785 = vadd.f32 0.0, %v784
        %v786 = vpop.f32.mrb[0].mxu0
        %v787 = vadd.f32 0.0, %v786
        %788 = vdwg.mxu0
        %v790 = vsel %vm687, %v662, 0
        %v793 = vsel %vm687, %v663, 0
        %v796 = vsel %vm687, %v664, 0
        %v799 = vsel %vm687, %v665, 0
        %801 = vmatprep.subr.mxu0 %v667
        %802 = vmatpush1.msra.mxu0 %v666
        %803 = vmatprep.subr.mxu0 %v669
        %804 = vmatpush1.msra.mxu0 %v668
        %805 = vmatprep.subr.mxu0 %v671
        %806 = vmatpush1.msra.mxu0 %v670
        %807 = vmatprep.subr.mxu0 %v673
        %808 = vmatpush1.msra.mxu0 %v672
        %809 = vmatprep.subr.mxu0 0.0
        %810 = vmatpush1.msra.mxu0 0.0
        %811 = vmatprep.subr.mxu0 0.0
        %812 = vmatpush1.msra.mxu0 0.0
        %813 = vmatprep.subr.mxu0 0.0
        %814 = vmatpush1.msra.mxu0 0.0
        %815 = vmatprep.subr.mxu0 0.0
        %816 = vmatpush1.msra.mxu0 0.0
        %817 = vmatprep.subr.mxu0 0.0
        %818 = vmatpush1.msra.mxu0 0.0
        %819 = vmatprep.subr.mxu0 0.0
        %820 = vmatpush1.msra.mxu0 0.0
        %821 = vmatprep.subr.mxu0 0.0
        %822 = vmatpush1.msra.mxu0 0.0
        %823 = vmatprep.subr.mxu0 0.0
        %824 = vmatpush1.msra.mxu0 0.0
        %825 = vmatprep.subr.mxu0 0.0
        %826 = vmatpush1.msra.mxu0 0.0
        %827 = vmatprep.subr.mxu0 0.0
        %828 = vmatpush1.msra.mxu0 0.0
        %829 = vmatprep.subr.mxu0 0.0
        %830 = vmatpush1.msra.mxu0 0.0
        %831 = vmatprep.subr.mxu0 0.0
        %832 = vmatpush1.msra.mxu0 0.0
        %833 = vmatprep.subr.mxu0 0.0
        %834 = vmatpush1.msra.mxu0 0.0
        %835 = vmatprep.subr.mxu0 0.0
        %836 = vmatpush1.msra.mxu0 0.0
        %837 = vmatprep.subr.mxu0 0.0
        %838 = vmatpush1.msra.mxu0 0.0
        %839 = vmatprep.subr.mxu0 0.0
        %840 = vmatpush1.msra.mxu0 0.0
        %841 = vmatprep.subr.mxu0 0.0
        %842 = vmatpush1.msra.mxu0 0.0
        %843 = vmatprep.subr.mxu0 0.0
        %844 = vmatpush1.msra.mxu0 0.0
        %845 = vmatprep.subr.mxu0 0.0
        %846 = vmatpush1.msra.mxu0 0.0
        %847 = vmatprep.subr.mxu0 0.0
        %848 = vmatpush1.msra.mxu0 0.0
        %849 = vmatprep.subr.mxu0 0.0
        %850 = vmatpush1.msra.mxu0 0.0
        %851 = vmatprep.subr.mxu0 0.0
        %852 = vmatpush1.msra.mxu0 0.0
        %853 = vmatprep.subr.mxu0 0.0
        %854 = vmatpush1.msra.mxu0 0.0
        %855 = vmatprep.subr.mxu0 0.0
        %856 = vmatpush1.msra.mxu0 0.0
        %857 = vmatprep.subr.mxu0 0.0
        %858 = vmatpush1.msra.mxu0 0.0
        %859 = vmatprep.subr.mxu0 0.0
        %860 = vmatpush1.msra.mxu0 0.0
        %861 = vmatprep.subr.mxu0 0.0
        %862 = vmatpush1.msra.mxu0 0.0
        %863 = vmatprep.subr.mxu0 0.0
        %864 = vmatpush1.msra.mxu0 0.0
        %865 = vmatprep.mubr.f32.mxu0 0.0
        %866 = vmatmul.mubr.f32.gmra.mrb[0].mxu0 %v790
        %v867 = vpop.f32.mrb[0].mxu0
        %v868 = vadd.f32 %v767, %v867
        %v869 = vpop.f32.mrb[0].mxu0
        %v870 = vadd.f32 %v769, %v869
        %871 = vmatprep.mubr.f32.mxu0 0.0
        %872 = vmatmul.mubr.f32.gmra.mrb[0].mxu0 %v793
        %v873 = vpop.f32.mrb[0].mxu0
        %v874 = vadd.f32 %v773, %v873
        %v875 = vpop.f32.mrb[0].mxu0
        %v876 = vadd.f32 %v775, %v875
        %877 = vmatprep.mubr.f32.mxu0 0.0
        %878 = vmatmul.mubr.f32.gmra.mrb[0].mxu0 %v796
        %v879 = vpop.f32.mrb[0].mxu0
        %v880 = vadd.f32 %v779, %v879
        %v881 = vpop.f32.mrb[0].mxu0
        %v882 = vadd.f32 %v781, %v881
        %883 = vmatprep.mubr.f32.mxu0 0.0
        %884 = vmatmul.mubr.f32.gmra.mrb[0].mxu0 %v799
        %v885 = vpop.f32.mrb[0].mxu0
        %v886 = vadd.f32 %v785, %v885
        %v887 = vpop.f32.mrb[0].mxu0
        %v888 = vadd.f32 %v787, %v887
        %889 = vdwg.mxu0
        %v890 = vld [vmem:[%s572 + $0x2] sm:$0xff]
        %v891 = vld [vmem:[%s572 + $0xa] sm:$0xff]
        %v892 = vld [vmem:[%s572 + $0x12] sm:$0xff]
        %v893 = vld [vmem:[%s572 + $0x1a] sm:$0xf]
        %s894 = scalar_lea.vmem [#allocation5], 128
        %v895 = vld [vmem:[%s894] sm:$0xff]
        %v896 = vld [vmem:[%s894 + $0x8] sm:$0xff]
        %v897 = vld [vmem:[%s894 + $0x10] sm:$0xff]
        %v898 = vld [vmem:[%s894 + $0x18] sm:$0xff]
        %v899 = vld [vmem:[%s894 + $0x20] sm:$0xff]
        %v900 = vld [vmem:[%s894 + $0x28] sm:$0xff]
        %v901 = vld [vmem:[%s894 + $0x30] sm:$0xff]
        %v902 = vld [vmem:[%s894 + $0x38] sm:$0xff]
        %v904 = vsel %vm687, %v890, 0
        %v907 = vsel %vm687, %v891, 0
        %v910 = vsel %vm687, %v892, 0
        %v913 = vsel %vm687, %v893, 0
        %915 = vmatprep.subr.mxu0 %v896
        %916 = vmatpush1.msra.mxu0 %v895
        %917 = vmatprep.subr.mxu0 %v898
        %918 = vmatpush1.msra.mxu0 %v897
        %919 = vmatprep.subr.mxu0 %v900
        %920 = vmatpush1.msra.mxu0 %v899
        %921 = vmatprep.subr.mxu0 %v902
        %922 = vmatpush1.msra.mxu0 %v901
        %923 = vmatprep.subr.mxu0 0.0
        %924 = vmatpush1.msra.mxu0 0.0
        %925 = vmatprep.subr.mxu0 0.0
        %926 = vmatpush1.msra.mxu0 0.0
        %927 = vmatprep.subr.mxu0 0.0
        %928 = vmatpush1.msra.mxu0 0.0
        %929 = vmatprep.subr.mxu0 0.0
        %930 = vmatpush1.msra.mxu0 0.0
        %931 = vmatprep.subr.mxu0 0.0
        %932 = vmatpush1.msra.mxu0 0.0
        %933 = vmatprep.subr.mxu0 0.0
        %934 = vmatpush1.msra.mxu0 0.0
        %935 = vmatprep.subr.mxu0 0.0
        %936 = vmatpush1.msra.mxu0 0.0
        %937 = vmatprep.subr.mxu0 0.0
        %938 = vmatpush1.msra.mxu0 0.0
        %939 = vmatprep.subr.mxu0 0.0
        %940 = vmatpush1.msra.mxu0 0.0
        %941 = vmatprep.subr.mxu0 0.0
        %942 = vmatpush1.msra.mxu0 0.0
        %943 = vmatprep.subr.mxu0 0.0
        %944 = vmatpush1.msra.mxu0 0.0
        %945 = vmatprep.subr.mxu0 0.0
        %946 = vmatpush1.msra.mxu0 0.0
        %947 = vmatprep.subr.mxu0 0.0
        %948 = vmatpush1.msra.mxu0 0.0
        %949 = vmatprep.subr.mxu0 0.0
        %950 = vmatpush1.msra.mxu0 0.0
        %951 = vmatprep.subr.mxu0 0.0
        %952 = vmatpush1.msra.mxu0 0.0
        %953 = vmatprep.subr.mxu0 0.0
        %954 = vmatpush1.msra.mxu0 0.0
        %955 = vmatprep.subr.mxu0 0.0
        %956 = vmatpush1.msra.mxu0 0.0
        %957 = vmatprep.subr.mxu0 0.0
        %958 = vmatpush1.msra.mxu0 0.0
        %959 = vmatprep.subr.mxu0 0.0
        %960 = vmatpush1.msra.mxu0 0.0
        %961 = vmatprep.subr.mxu0 0.0
        %962 = vmatpush1.msra.mxu0 0.0
        %963 = vmatprep.subr.mxu0 0.0
        %964 = vmatpush1.msra.mxu0 0.0
        %965 = vmatprep.subr.mxu0 0.0
        %966 = vmatpush1.msra.mxu0 0.0
        %967 = vmatprep.subr.mxu0 0.0
        %968 = vmatpush1.msra.mxu0 0.0
        %969 = vmatprep.subr.mxu0 0.0
        %970 = vmatpush1.msra.mxu0 0.0
        %971 = vmatprep.subr.mxu0 0.0
        %972 = vmatpush1.msra.mxu0 0.0
        %973 = vmatprep.subr.mxu0 0.0
        %974 = vmatpush1.msra.mxu0 0.0
        %975 = vmatprep.subr.mxu0 0.0
        %976 = vmatpush1.msra.mxu0 0.0
        %977 = vmatprep.subr.mxu0 0.0
        %978 = vmatpush1.msra.mxu0 0.0
        %979 = vmatprep.mubr.f32.mxu0 0.0
        %980 = vmatmul.mubr.f32.gmra.mrb[0].mxu0 %v904
        %v981 = vpop.f32.mrb[0].mxu0
        %v982 = vadd.f32 0.0, %v981
        %v983 = vpop.f32.mrb[0].mxu0
        %v984 = vadd.f32 0.0, %v983
        %985 = vmatprep.mubr.f32.mxu0 0.0
        %986 = vmatmul.mubr.f32.gmra.mrb[0].mxu0 %v907
        %v987 = vpop.f32.mrb[0].mxu0
        %v988 = vadd.f32 0.0, %v987
        %v989 = vpop.f32.mrb[0].mxu0
        %v990 = vadd.f32 0.0, %v989
        %991 = vmatprep.mubr.f32.mxu0 0.0
        %992 = vmatmul.mubr.f32.gmra.mrb[0].mxu0 %v910
        %v993 = vpop.f32.mrb[0].mxu0
        %v994 = vadd.f32 0.0, %v993
        %v995 = vpop.f32.mrb[0].mxu0
        %v996 = vadd.f32 0.0, %v995
        %997 = vmatprep.mubr.f32.mxu0 0.0
        %998 = vmatmul.mubr.f32.gmra.mrb[0].mxu0 %v913
        %v999 = vpop.f32.mrb[0].mxu0
        %v1000 = vadd.f32 0.0, %v999
        %v1001 = vpop.f32.mrb[0].mxu0
        %v1002 = vadd.f32 0.0, %v1001
        %1003 = vdwg.mxu0
        %v1004 = vadd.f32 %v868, %v982
        %v1005 = vadd.f32 %v870, %v984
        %v1006 = vadd.f32 %v874, %v988
        %v1007 = vadd.f32 %v876, %v990
        %v1008 = vadd.f32 %v880, %v994
        %v1009 = vadd.f32 %v882, %v996
        %v1010 = vadd.f32 %v886, %v1000
        %v1011 = vadd.f32 %v888, %v1002
        %v1012 = vld [vmem:[%s572 + $0x3] sm:$0xff]
        %v1013 = vld [vmem:[%s572 + $0xb] sm:$0xff]
        %v1014 = vld [vmem:[%s572 + $0x13] sm:$0xff]
        %v1015 = vld [vmem:[%s572 + $0x1b] sm:$0xf]
        %s1016 = scalar_lea.vmem [#allocation5], 192
        %v1017 = vld [vmem:[%s1016] sm:$0xff]
        %v1018 = vld [vmem:[%s1016 + $0x8] sm:$0xff]
        %v1019 = vld [vmem:[%s1016 + $0x10] sm:$0xff]
        %v1020 = vld [vmem:[%s1016 + $0x18] sm:$0xff]
        %v1021 = vld [vmem:[%s1016 + $0x20] sm:$0xff]
        %v1022 = vld [vmem:[%s1016 + $0x28] sm:$0xff]
        %v1023 = vld [vmem:[%s1016 + $0x30] sm:$0xff]
        %v1024 = vld [vmem:[%s1016 + $0x38] sm:$0xff]
        %v1026 = vsel %vm687, %v1012, 0
        %v1029 = vsel %vm687, %v1013, 0
        %v1032 = vsel %vm687, %v1014, 0
        %v1035 = vsel %vm687, %v1015, 0
        %1037 = vmatprep.subr.mxu0 %v1018
        %1038 = vmatpush1.msra.mxu0 %v1017
        %1039 = vmatprep.subr.mxu0 %v1020
        %1040 = vmatpush1.msra.mxu0 %v1019
        %1041 = vmatprep.subr.mxu0 %v1022
        %1042 = vmatpush1.msra.mxu0 %v1021
        %1043 = vmatprep.subr.mxu0 %v1024
        %1044 = vmatpush1.msra.mxu0 %v1023
        %1045 = vmatprep.subr.mxu0 0.0
        %1046 = vmatpush1.msra.mxu0 0.0
        %1047 = vmatprep.subr.mxu0 0.0
        %1048 = vmatpush1.msra.mxu0 0.0
        %1049 = vmatprep.subr.mxu0 0.0
        %1050 = vmatpush1.msra.mxu0 0.0
        %1051 = vmatprep.subr.mxu0 0.0
        %1052 = vmatpush1.msra.mxu0 0.0
        %1053 = vmatprep.subr.mxu0 0.0
        %1054 = vmatpush1.msra.mxu0 0.0
        %1055 = vmatprep.subr.mxu0 0.0
        %1056 = vmatpush1.msra.mxu0 0.0
        %1057 = vmatprep.subr.mxu0 0.0
        %1058 = vmatpush1.msra.mxu0 0.0
        %1059 = vmatprep.subr.mxu0 0.0
        %1060 = vmatpush1.msra.mxu0 0.0
        %1061 = vmatprep.subr.mxu0 0.0
        %1062 = vmatpush1.msra.mxu0 0.0
        %1063 = vmatprep.subr.mxu0 0.0
        %1064 = vmatpush1.msra.mxu0 0.0
        %1065 = vmatprep.subr.mxu0 0.0
        %1066 = vmatpush1.msra.mxu0 0.0
        %1067 = vmatprep.subr.mxu0 0.0
        %1068 = vmatpush1.msra.mxu0 0.0
        %1069 = vmatprep.subr.mxu0 0.0
        %1070 = vmatpush1.msra.mxu0 0.0
        %1071 = vmatprep.subr.mxu0 0.0
        %1072 = vmatpush1.msra.mxu0 0.0
        %1073 = vmatprep.subr.mxu0 0.0
        %1074 = vmatpush1.msra.mxu0 0.0
        %1075 = vmatprep.subr.mxu0 0.0
        %1076 = vmatpush1.msra.mxu0 0.0
        %1077 = vmatprep.subr.mxu0 0.0
        %1078 = vmatpush1.msra.mxu0 0.0
        %1079 = vmatprep.subr.mxu0 0.0
        %1080 = vmatpush1.msra.mxu0 0.0
        %1081 = vmatprep.subr.mxu0 0.0
        %1082 = vmatpush1.msra.mxu0 0.0
        %1083 = vmatprep.subr.mxu0 0.0
        %1084 = vmatpush1.msra.mxu0 0.0
        %1085 = vmatprep.subr.mxu0 0.0
        %1086 = vmatpush1.msra.mxu0 0.0
        %1087 = vmatprep.subr.mxu0 0.0
        %1088 = vmatpush1.msra.mxu0 0.0
        %1089 = vmatprep.subr.mxu0 0.0
        %1090 = vmatpush1.msra.mxu0 0.0
        %1091 = vmatprep.subr.mxu0 0.0
        %1092 = vmatpush1.msra.mxu0 0.0
        %1093 = vmatprep.subr.mxu0 0.0
        %1094 = vmatpush1.msra.mxu0 0.0
        %1095 = vmatprep.subr.mxu0 0.0
        %1096 = vmatpush1.msra.mxu0 0.0
        %1097 = vmatprep.subr.mxu0 0.0
        %1098 = vmatpush1.msra.mxu0 0.0
        %1099 = vmatprep.subr.mxu0 0.0
        %1100 = vmatpush1.msra.mxu0 0.0
        %1101 = vmatprep.mubr.f32.mxu0 0.0
        %1102 = vmatmul.mubr.f32.gmra.mrb[0].mxu0 %v1026
        %v1103 = vpop.f32.mrb[0].mxu0
        %v1104 = vadd.f32 0.0, %v1103
        %v1105 = vpop.f32.mrb[0].mxu0
        %v1106 = vadd.f32 0.0, %v1105
        %1107 = vmatprep.mubr.f32.mxu0 0.0
        %1108 = vmatmul.mubr.f32.gmra.mrb[0].mxu0 %v1029
        %v1109 = vpop.f32.mrb[0].mxu0
        %v1110 = vadd.f32 0.0, %v1109
        %v1111 = vpop.f32.mrb[0].mxu0
        %v1112 = vadd.f32 0.0, %v1111
        %1113 = vmatprep.mubr.f32.mxu0 0.0
        %1114 = vmatmul.mubr.f32.gmra.mrb[0].mxu0 %v1032
        %v1115 = vpop.f32.mrb[0].mxu0
        %v1116 = vadd.f32 0.0, %v1115
        %v1117 = vpop.f32.mrb[0].mxu0
        %v1118 = vadd.f32 0.0, %v1117
        %1119 = vmatprep.mubr.f32.mxu0 0.0
        %1120 = vmatmul.mubr.f32.gmra.mrb[0].mxu0 %v1035
        %v1121 = vpop.f32.mrb[0].mxu0
        %v1122 = vadd.f32 0.0, %v1121
        %v1123 = vpop.f32.mrb[0].mxu0
        %v1124 = vadd.f32 0.0, %v1123
        %1125 = vdwg.mxu0
        %v1126 = vadd.f32 %v1004, %v1104
        %v1127 = vadd.f32 %v1005, %v1106
        %v1128 = vadd.f32 %v1006, %v1110
        %v1129 = vadd.f32 %v1007, %v1112
        %v1130 = vadd.f32 %v1008, %v1116
        %v1131 = vadd.f32 %v1009, %v1118
        %v1132 = vadd.f32 %v1010, %v1122
        %v1133 = vadd.f32 %v1011, %v1124
        %v1134 = vld [vmem:[%s572 + $0x4] sm:$0xff]
        %v1135 = vld [vmem:[%s572 + $0xc] sm:$0xff]
        %v1136 = vld [vmem:[%s572 + $0x14] sm:$0xff]
        %v1137 = vld [vmem:[%s572 + $0x1c] sm:$0xf]
        %s1138 = scalar_lea.vmem [#allocation5], 256
        %v1139 = vld [vmem:[%s1138] sm:$0xff]
        %v1140 = vld [vmem:[%s1138 + $0x8] sm:$0xff]
        %v1141 = vld [vmem:[%s1138 + $0x10] sm:$0xff]
        %v1142 = vld [vmem:[%s1138 + $0x18] sm:$0xff]
        %v1143 = vld [vmem:[%s1138 + $0x20] sm:$0xff]
        %v1144 = vld [vmem:[%s1138 + $0x28] sm:$0xff]
        %v1145 = vld [vmem:[%s1138 + $0x30] sm:$0xff]
        %v1146 = vld [vmem:[%s1138 + $0x38] sm:$0xff]
        %v1148 = vsel %vm687, %v1134, 0
        %v1151 = vsel %vm687, %v1135, 0
        %v1154 = vsel %vm687, %v1136, 0
        %v1157 = vsel %vm687, %v1137, 0
        %1159 = vmatprep.subr.mxu0 %v1140
        %1160 = vmatpush1.msra.mxu0 %v1139
        %1161 = vmatprep.subr.mxu0 %v1142
        %1162 = vmatpush1.msra.mxu0 %v1141
        %1163 = vmatprep.subr.mxu0 %v1144
        %1164 = vmatpush1.msra.mxu0 %v1143
        %1165 = vmatprep.subr.mxu0 %v1146
        %1166 = vmatpush1.msra.mxu0 %v1145
        %1167 = vmatprep.subr.mxu0 0.0
        %1168 = vmatpush1.msra.mxu0 0.0
        %1169 = vmatprep.subr.mxu0 0.0
        %1170 = vmatpush1.msra.mxu0 0.0
        %1171 = vmatprep.subr.mxu0 0.0
        %1172 = vmatpush1.msra.mxu0 0.0
        %1173 = vmatprep.subr.mxu0 0.0
        %1174 = vmatpush1.msra.mxu0 0.0
        %1175 = vmatprep.subr.mxu0 0.0
        %1176 = vmatpush1.msra.mxu0 0.0
        %1177 = vmatprep.subr.mxu0 0.0
        %1178 = vmatpush1.msra.mxu0 0.0
        %1179 = vmatprep.subr.mxu0 0.0
        %1180 = vmatpush1.msra.mxu0 0.0
        %1181 = vmatprep.subr.mxu0 0.0
        %1182 = vmatpush1.msra.mxu0 0.0
        %1183 = vmatprep.subr.mxu0 0.0
        %1184 = vmatpush1.msra.mxu0 0.0
        %1185 = vmatprep.subr.mxu0 0.0
        %1186 = vmatpush1.msra.mxu0 0.0
        %1187 = vmatprep.subr.mxu0 0.0
        %1188 = vmatpush1.msra.mxu0 0.0
        %1189 = vmatprep.subr.mxu0 0.0
        %1190 = vmatpush1.msra.mxu0 0.0
        %1191 = vmatprep.subr.mxu0 0.0
        %1192 = vmatpush1.msra.mxu0 0.0
        %1193 = vmatprep.subr.mxu0 0.0
        %1194 = vmatpush1.msra.mxu0 0.0
        %1195 = vmatprep.subr.mxu0 0.0
        %1196 = vmatpush1.msra.mxu0 0.0
        %1197 = vmatprep.subr.mxu0 0.0
        %1198 = vmatpush1.msra.mxu0 0.0
        %1199 = vmatprep.subr.mxu0 0.0
        %1200 = vmatpush1.msra.mxu0 0.0
        %1201 = vmatprep.subr.mxu0 0.0
        %1202 = vmatpush1.msra.mxu0 0.0
        %1203 = vmatprep.subr.mxu0 0.0
        %1204 = vmatpush1.msra.mxu0 0.0
        %1205 = vmatprep.subr.mxu0 0.0
        %1206 = vmatpush1.msra.mxu0 0.0
        %1207 = vmatprep.subr.mxu0 0.0
        %1208 = vmatpush1.msra.mxu0 0.0
        %1209 = vmatprep.subr.mxu0 0.0
        %1210 = vmatpush1.msra.mxu0 0.0
        %1211 = vmatprep.subr.mxu0 0.0
        %1212 = vmatpush1.msra.mxu0 0.0
        %1213 = vmatprep.subr.mxu0 0.0
        %1214 = vmatpush1.msra.mxu0 0.0
        %1215 = vmatprep.subr.mxu0 0.0
        %1216 = vmatpush1.msra.mxu0 0.0
        %1217 = vmatprep.subr.mxu0 0.0
        %1218 = vmatpush1.msra.mxu0 0.0
        %1219 = vmatprep.subr.mxu0 0.0
        %1220 = vmatpush1.msra.mxu0 0.0
        %1221 = vmatprep.subr.mxu0 0.0
        %1222 = vmatpush1.msra.mxu0 0.0
        %1223 = vmatprep.mubr.f32.mxu0 0.0
        %1224 = vmatmul.mubr.f32.gmra.mrb[0].mxu0 %v1148
        %v1225 = vpop.f32.mrb[0].mxu0
        %v1226 = vadd.f32 0.0, %v1225
        %v1227 = vpop.f32.mrb[0].mxu0
        %v1228 = vadd.f32 0.0, %v1227
        %1229 = vmatprep.mubr.f32.mxu0 0.0
        %1230 = vmatmul.mubr.f32.gmra.mrb[0].mxu0 %v1151
        %v1231 = vpop.f32.mrb[0].mxu0
        %v1232 = vadd.f32 0.0, %v1231
        %v1233 = vpop.f32.mrb[0].mxu0
        %v1234 = vadd.f32 0.0, %v1233
        %1235 = vmatprep.mubr.f32.mxu0 0.0
        %1236 = vmatmul.mubr.f32.gmra.mrb[0].mxu0 %v1154
        %v1237 = vpop.f32.mrb[0].mxu0
        %v1238 = vadd.f32 0.0, %v1237
        %v1239 = vpop.f32.mrb[0].mxu0
        %v1240 = vadd.f32 0.0, %v1239
        %1241 = vmatprep.mubr.f32.mxu0 0.0
        %1242 = vmatmul.mubr.f32.gmra.mrb[0].mxu0 %v1157
        %v1243 = vpop.f32.mrb[0].mxu0
        %v1244 = vadd.f32 0.0, %v1243
        %v1245 = vpop.f32.mrb[0].mxu0
        %v1246 = vadd.f32 0.0, %v1245
        %1247 = vdwg.mxu0
        %v1248 = vadd.f32 %v1126, %v1226
        %v1249 = vadd.f32 %v1127, %v1228
        %v1250 = vadd.f32 %v1128, %v1232
        %v1251 = vadd.f32 %v1129, %v1234
        %v1252 = vadd.f32 %v1130, %v1238
        %v1253 = vadd.f32 %v1131, %v1240
        %v1254 = vadd.f32 %v1132, %v1244
        %v1255 = vadd.f32 %v1133, %v1246
        %s1256 = scalar_lea.vmem %s572, 32 [#allocation2]
        %v1257 = vld [vmem:[%s1256] sm:$0xff]
        %v1258 = vld [vmem:[%s1256 + $0x8] sm:$0xff]
        %v1259 = vld [vmem:[%s1256 + $0x10] sm:$0xff]
        %v1260 = vld [vmem:[%s1256 + $0x18] sm:$0xf]
        %s1261 = scalar_lea.vmem [#allocation5], 320
        %v1262 = vld [vmem:[%s1261] sm:$0xff]
        %v1263 = vld [vmem:[%s1261 + $0x8] sm:$0xff]
        %v1264 = vld [vmem:[%s1261 + $0x10] sm:$0xff]
        %v1265 = vld [vmem:[%s1261 + $0x18] sm:$0xff]
        %v1266 = vld [vmem:[%s1261 + $0x20] sm:$0xff]
        %v1267 = vld [vmem:[%s1261 + $0x28] sm:$0xff]
        %v1268 = vld [vmem:[%s1261 + $0x30] sm:$0xff]
        %v1269 = vld [vmem:[%s1261 + $0x38] sm:$0xff]
        %v1271 = vsel %vm687, %v1257, 0
        %v1274 = vsel %vm687, %v1258, 0
        %v1277 = vsel %vm687, %v1259, 0
        %v1280 = vsel %vm687, %v1260, 0
        %1282 = vmatprep.subr.mxu0 %v1263
        %1283 = vmatpush1.msra.mxu0 %v1262
        %1284 = vmatprep.subr.mxu0 %v1265
        %1285 = vmatpush1.msra.mxu0 %v1264
        %1286 = vmatprep.subr.mxu0 %v1267
        %1287 = vmatpush1.msra.mxu0 %v1266
        %1288 = vmatprep.subr.mxu0 %v1269
        %1289 = vmatpush1.msra.mxu0 %v1268
        %1290 = vmatprep.subr.mxu0 0.0
        %1291 = vmatpush1.msra.mxu0 0.0
        %1292 = vmatprep.subr.mxu0 0.0
        %1293 = vmatpush1.msra.mxu0 0.0
        %1294 = vmatprep.subr.mxu0 0.0
        %1295 = vmatpush1.msra.mxu0 0.0
        %1296 = vmatprep.subr.mxu0 0.0
        %1297 = vmatpush1.msra.mxu0 0.0
        %1298 = vmatprep.subr.mxu0 0.0
        %1299 = vmatpush1.msra.mxu0 0.0
        %1300 = vmatprep.subr.mxu0 0.0
        %1301 = vmatpush1.msra.mxu0 0.0
        %1302 = vmatprep.subr.mxu0 0.0
        %1303 = vmatpush1.msra.mxu0 0.0
        %1304 = vmatprep.subr.mxu0 0.0
        %1305 = vmatpush1.msra.mxu0 0.0
        %1306 = vmatprep.subr.mxu0 0.0
        %1307 = vmatpush1.msra.mxu0 0.0
        %1308 = vmatprep.subr.mxu0 0.0
        %1309 = vmatpush1.msra.mxu0 0.0
        %1310 = vmatprep.subr.mxu0 0.0
        %1311 = vmatpush1.msra.mxu0 0.0
        %1312 = vmatprep.subr.mxu0 0.0
        %1313 = vmatpush1.msra.mxu0 0.0
        %1314 = vmatprep.subr.mxu0 0.0
        %1315 = vmatpush1.msra.mxu0 0.0
        %1316 = vmatprep.subr.mxu0 0.0
        %1317 = vmatpush1.msra.mxu0 0.0
        %1318 = vmatprep.subr.mxu0 0.0
        %1319 = vmatpush1.msra.mxu0 0.0
        %1320 = vmatprep.subr.mxu0 0.0
        %1321 = vmatpush1.msra.mxu0 0.0
        %1322 = vmatprep.subr.mxu0 0.0
        %1323 = vmatpush1.msra.mxu0 0.0
        %1324 = vmatprep.subr.mxu0 0.0
        %1325 = vmatpush1.msra.mxu0 0.0
        %1326 = vmatprep.subr.mxu0 0.0
        %1327 = vmatpush1.msra.mxu0 0.0
        %1328 = vmatprep.subr.mxu0 0.0
        %1329 = vmatpush1.msra.mxu0 0.0
        %1330 = vmatprep.subr.mxu0 0.0
        %1331 = vmatpush1.msra.mxu0 0.0
        %1332 = vmatprep.subr.mxu0 0.0
        %1333 = vmatpush1.msra.mxu0 0.0
        %1334 = vmatprep.subr.mxu0 0.0
        %1335 = vmatpush1.msra.mxu0 0.0
        %1336 = vmatprep.subr.mxu0 0.0
        %1337 = vmatpush1.msra.mxu0 0.0
        %1338 = vmatprep.subr.mxu0 0.0
        %1339 = vmatpush1.msra.mxu0 0.0
        %1340 = vmatprep.subr.mxu0 0.0
        %1341 = vmatpush1.msra.mxu0 0.0
        %1342 = vmatprep.subr.mxu0 0.0
        %1343 = vmatpush1.msra.mxu0 0.0
        %1344 = vmatprep.subr.mxu0 0.0
        %1345 = vmatpush1.msra.mxu0 0.0
        %1346 = vmatprep.mubr.f32.mxu0 0.0
        %1347 = vmatmul.mubr.f32.gmra.mrb[0].mxu0 %v1271
        %v1348 = vpop.f32.mrb[0].mxu0
        %v1349 = vadd.f32 0.0, %v1348
        %v1350 = vpop.f32.mrb[0].mxu0
        %v1351 = vadd.f32 0.0, %v1350
        %1352 = vmatprep.mubr.f32.mxu0 0.0
        %1353 = vmatmul.mubr.f32.gmra.mrb[0].mxu0 %v1274
        %v1354 = vpop.f32.mrb[0].mxu0
        %v1355 = vadd.f32 0.0, %v1354
        %v1356 = vpop.f32.mrb[0].mxu0
        %v1357 = vadd.f32 0.0, %v1356
        %1358 = vmatprep.mubr.f32.mxu0 0.0
        %1359 = vmatmul.mubr.f32.gmra.mrb[0].mxu0 %v1277
        %v1360 = vpop.f32.mrb[0].mxu0
        %v1361 = vadd.f32 0.0, %v1360
        %v1362 = vpop.f32.mrb[0].mxu0
        %v1363 = vadd.f32 0.0, %v1362
        %1364 = vmatprep.mubr.f32.mxu0 0.0
        %1365 = vmatmul.mubr.f32.gmra.mrb[0].mxu0 %v1280
        %v1366 = vpop.f32.mrb[0].mxu0
        %v1367 = vadd.f32 0.0, %v1366
        %v1368 = vpop.f32.mrb[0].mxu0
        %v1369 = vadd.f32 0.0, %v1368
        %1370 = vdwg.mxu0
        %v1371 = vadd.f32 %v1248, %v1349
        %v1372 = vadd.f32 %v1249, %v1351
        %v1373 = vadd.f32 %v1250, %v1355
        %v1374 = vadd.f32 %v1251, %v1357
        %v1375 = vadd.f32 %v1252, %v1361
        %v1376 = vadd.f32 %v1253, %v1363
        %v1377 = vadd.f32 %v1254, %v1367
        %v1378 = vadd.f32 %v1255, %v1369
        %v1379 = vld [vmem:[%s1256 + $0x1] sm:$0xff]
        %v1380 = vld [vmem:[%s1256 + $0x9] sm:$0xff]
        %v1381 = vld [vmem:[%s1256 + $0x11] sm:$0xff]
        %v1382 = vld [vmem:[%s1256 + $0x19] sm:$0xf]
        %s1383 = scalar_lea.vmem [#allocation5], 384
        %v1384 = vld [vmem:[%s1383] sm:$0xff]
        %v1385 = vld [vmem:[%s1383 + $0x8] sm:$0xff]
        %v1386 = vld [vmem:[%s1383 + $0x10] sm:$0xff]
        %v1387 = vld [vmem:[%s1383 + $0x18] sm:$0xff]
        %v1388 = vld [vmem:[%s1383 + $0x20] sm:$0xff]
        %v1389 = vld [vmem:[%s1383 + $0x28] sm:$0xff]
        %v1390 = vld [vmem:[%s1383 + $0x30] sm:$0xff]
        %v1391 = vld [vmem:[%s1383 + $0x38] sm:$0xff]
        %v1393 = vsel %vm687, %v1379, 0
        %v1396 = vsel %vm687, %v1380, 0
        %v1399 = vsel %vm687, %v1381, 0
        %v1402 = vsel %vm687, %v1382, 0
        %1404 = vmatprep.subr.mxu0 %v1385
        %1405 = vmatpush1.msra.mxu0 %v1384
        %1406 = vmatprep.subr.mxu0 %v1387
        %1407 = vmatpush1.msra.mxu0 %v1386
        %1408 = vmatprep.subr.mxu0 %v1389
        %1409 = vmatpush1.msra.mxu0 %v1388
        %1410 = vmatprep.subr.mxu0 %v1391
        %1411 = vmatpush1.msra.mxu0 %v1390
        %1412 = vmatprep.subr.mxu0 0.0
        %1413 = vmatpush1.msra.mxu0 0.0
        %1414 = vmatprep.subr.mxu0 0.0
        %1415 = vmatpush1.msra.mxu0 0.0
        %1416 = vmatprep.subr.mxu0 0.0
        %1417 = vmatpush1.msra.mxu0 0.0
        %1418 = vmatprep.subr.mxu0 0.0
        %1419 = vmatpush1.msra.mxu0 0.0
        %1420 = vmatprep.subr.mxu0 0.0
        %1421 = vmatpush1.msra.mxu0 0.0
        %1422 = vmatprep.subr.mxu0 0.0
        %1423 = vmatpush1.msra.mxu0 0.0
        %1424 = vmatprep.subr.mxu0 0.0
        %1425 = vmatpush1.msra.mxu0 0.0
        %1426 = vmatprep.subr.mxu0 0.0
        %1427 = vmatpush1.msra.mxu0 0.0
        %1428 = vmatprep.subr.mxu0 0.0
        %1429 = vmatpush1.msra.mxu0 0.0
        %1430 = vmatprep.subr.mxu0 0.0
        %1431 = vmatpush1.msra.mxu0 0.0
        %1432 = vmatprep.subr.mxu0 0.0
        %1433 = vmatpush1.msra.mxu0 0.0
        %1434 = vmatprep.subr.mxu0 0.0
        %1435 = vmatpush1.msra.mxu0 0.0
        %1436 = vmatprep.subr.mxu0 0.0
        %1437 = vmatpush1.msra.mxu0 0.0
        %1438 = vmatprep.subr.mxu0 0.0
        %1439 = vmatpush1.msra.mxu0 0.0
        %1440 = vmatprep.subr.mxu0 0.0
        %1441 = vmatpush1.msra.mxu0 0.0
        %1442 = vmatprep.subr.mxu0 0.0
        %1443 = vmatpush1.msra.mxu0 0.0
        %1444 = vmatprep.subr.mxu0 0.0
        %1445 = vmatpush1.msra.mxu0 0.0
        %1446 = vmatprep.subr.mxu0 0.0
        %1447 = vmatpush1.msra.mxu0 0.0
        %1448 = vmatprep.subr.mxu0 0.0
        %1449 = vmatpush1.msra.mxu0 0.0
        %1450 = vmatprep.subr.mxu0 0.0
        %1451 = vmatpush1.msra.mxu0 0.0
        %1452 = vmatprep.subr.mxu0 0.0
        %1453 = vmatpush1.msra.mxu0 0.0
        %1454 = vmatprep.subr.mxu0 0.0
        %1455 = vmatpush1.msra.mxu0 0.0
        %1456 = vmatprep.subr.mxu0 0.0
        %1457 = vmatpush1.msra.mxu0 0.0
        %1458 = vmatprep.subr.mxu0 0.0
        %1459 = vmatpush1.msra.mxu0 0.0
        %1460 = vmatprep.subr.mxu0 0.0
        %1461 = vmatpush1.msra.mxu0 0.0
        %1462 = vmatprep.subr.mxu0 0.0
        %1463 = vmatpush1.msra.mxu0 0.0
        %1464 = vmatprep.subr.mxu0 0.0
        %1465 = vmatpush1.msra.mxu0 0.0
        %1466 = vmatprep.subr.mxu0 0.0
        %1467 = vmatpush1.msra.mxu0 0.0
        %1468 = vmatprep.mubr.f32.mxu0 0.0
        %1469 = vmatmul.mubr.f32.gmra.mrb[0].mxu0 %v1393
        %v1470 = vpop.f32.mrb[0].mxu0
        %v1471 = vadd.f32 0.0, %v1470
        %v1472 = vpop.f32.mrb[0].mxu0
        %v1473 = vadd.f32 0.0, %v1472
        %1474 = vmatprep.mubr.f32.mxu0 0.0
        %1475 = vmatmul.mubr.f32.gmra.mrb[0].mxu0 %v1396
        %v1476 = vpop.f32.mrb[0].mxu0
        %v1477 = vadd.f32 0.0, %v1476
        %v1478 = vpop.f32.mrb[0].mxu0
        %v1479 = vadd.f32 0.0, %v1478
        %1480 = vmatprep.mubr.f32.mxu0 0.0
        %1481 = vmatmul.mubr.f32.gmra.mrb[0].mxu0 %v1399
        %v1482 = vpop.f32.mrb[0].mxu0
        %v1483 = vadd.f32 0.0, %v1482
        %v1484 = vpop.f32.mrb[0].mxu0
        %v1485 = vadd.f32 0.0, %v1484
        %1486 = vmatprep.mubr.f32.mxu0 0.0
        %1487 = vmatmul.mubr.f32.gmra.mrb[0].mxu0 %v1402
        %v1488 = vpop.f32.mrb[0].mxu0
        %v1489 = vadd.f32 0.0, %v1488
        %v1490 = vpop.f32.mrb[0].mxu0
        %v1491 = vadd.f32 0.0, %v1490
        %1492 = vdwg.mxu0
        %v1493 = vadd.f32 %v1371, %v1471
        %v1494 = vadd.f32 %v1372, %v1473
        %v1495 = vadd.f32 %v1373, %v1477
        %v1496 = vadd.f32 %v1374, %v1479
        %v1497 = vadd.f32 %v1375, %v1483
        %v1498 = vadd.f32 %v1376, %v1485
        %v1499 = vadd.f32 %v1377, %v1489
        %v1500 = vadd.f32 %v1378, %v1491
        %v1501 = vld [vmem:[%s1256 + $0x2] sm:$0xff]
        %v1502 = vld [vmem:[%s1256 + $0xa] sm:$0xff]
        %v1503 = vld [vmem:[%s1256 + $0x12] sm:$0xff]
        %v1504 = vld [vmem:[%s1256 + $0x1a] sm:$0xf]
        %s1505 = scalar_lea.vmem [#allocation5], 448
        %v1506 = vld [vmem:[%s1505] sm:$0xff]
        %v1507 = vld [vmem:[%s1505 + $0x8] sm:$0xff]
        %v1508 = vld [vmem:[%s1505 + $0x10] sm:$0xff]
        %v1509 = vld [vmem:[%s1505 + $0x18] sm:$0xff]
        %v1510 = vld [vmem:[%s1505 + $0x20] sm:$0xff]
        %v1511 = vld [vmem:[%s1505 + $0x28] sm:$0xff]
        %v1512 = vld [vmem:[%s1505 + $0x30] sm:$0xff]
        %v1513 = vld [vmem:[%s1505 + $0x38] sm:$0xff]
        %v1515 = vsel %vm687, %v1501, 0
        %v1518 = vsel %vm687, %v1502, 0
        %v1521 = vsel %vm687, %v1503, 0
        %v1524 = vsel %vm687, %v1504, 0
        %1526 = vmatprep.subr.mxu0 %v1507
        %1527 = vmatpush1.msra.mxu0 %v1506
        %1528 = vmatprep.subr.mxu0 %v1509
        %1529 = vmatpush1.msra.mxu0 %v1508
        %1530 = vmatprep.subr.mxu0 %v1511
        %1531 = vmatpush1.msra.mxu0 %v1510
        %1532 = vmatprep.subr.mxu0 %v1513
        %1533 = vmatpush1.msra.mxu0 %v1512
        %1534 = vmatprep.subr.mxu0 0.0
        %1535 = vmatpush1.msra.mxu0 0.0
        %1536 = vmatprep.subr.mxu0 0.0
        %1537 = vmatpush1.msra.mxu0 0.0
        %1538 = vmatprep.subr.mxu0 0.0
        %1539 = vmatpush1.msra.mxu0 0.0
        %1540 = vmatprep.subr.mxu0 0.0
        %1541 = vmatpush1.msra.mxu0 0.0
        %1542 = vmatprep.subr.mxu0 0.0
        %1543 = vmatpush1.msra.mxu0 0.0
        %1544 = vmatprep.subr.mxu0 0.0
        %1545 = vmatpush1.msra.mxu0 0.0
        %1546 = vmatprep.subr.mxu0 0.0
        %1547 = vmatpush1.msra.mxu0 0.0
        %1548 = vmatprep.subr.mxu0 0.0
        %1549 = vmatpush1.msra.mxu0 0.0
        %1550 = vmatprep.subr.mxu0 0.0
        %1551 = vmatpush1.msra.mxu0 0.0
        %1552 = vmatprep.subr.mxu0 0.0
        %1553 = vmatpush1.msra.mxu0 0.0
        %1554 = vmatprep.subr.mxu0 0.0
        %1555 = vmatpush1.msra.mxu0 0.0
        %1556 = vmatprep.subr.mxu0 0.0
        %1557 = vmatpush1.msra.mxu0 0.0
        %1558 = vmatprep.subr.mxu0 0.0
        %1559 = vmatpush1.msra.mxu0 0.0
        %1560 = vmatprep.subr.mxu0 0.0
        %1561 = vmatpush1.msra.mxu0 0.0
        %1562 = vmatprep.subr.mxu0 0.0
        %1563 = vmatpush1.msra.mxu0 0.0
        %1564 = vmatprep.subr.mxu0 0.0
        %1565 = vmatpush1.msra.mxu0 0.0
        %1566 = vmatprep.subr.mxu0 0.0
        %1567 = vmatpush1.msra.mxu0 0.0
        %1568 = vmatprep.subr.mxu0 0.0
        %1569 = vmatpush1.msra.mxu0 0.0
        %1570 = vmatprep.subr.mxu0 0.0
        %1571 = vmatpush1.msra.mxu0 0.0
        %1572 = vmatprep.subr.mxu0 0.0
        %1573 = vmatpush1.msra.mxu0 0.0
        %1574 = vmatprep.subr.mxu0 0.0
        %1575 = vmatpush1.msra.mxu0 0.0
        %1576 = vmatprep.subr.mxu0 0.0
        %1577 = vmatpush1.msra.mxu0 0.0
        %1578 = vmatprep.subr.mxu0 0.0
        %1579 = vmatpush1.msra.mxu0 0.0
        %1580 = vmatprep.subr.mxu0 0.0
        %1581 = vmatpush1.msra.mxu0 0.0
        %1582 = vmatprep.subr.mxu0 0.0
        %1583 = vmatpush1.msra.mxu0 0.0
        %1584 = vmatprep.subr.mxu0 0.0
        %1585 = vmatpush1.msra.mxu0 0.0
        %1586 = vmatprep.subr.mxu0 0.0
        %1587 = vmatpush1.msra.mxu0 0.0
        %1588 = vmatprep.subr.mxu0 0.0
        %1589 = vmatpush1.msra.mxu0 0.0
        %1590 = vmatprep.mubr.f32.mxu0 0.0
        %1591 = vmatmul.mubr.f32.gmra.mrb[0].mxu0 %v1515
        %v1592 = vpop.f32.mrb[0].mxu0
        %v1593 = vadd.f32 0.0, %v1592
        %v1594 = vpop.f32.mrb[0].mxu0
        %v1595 = vadd.f32 0.0, %v1594
        %1596 = vmatprep.mubr.f32.mxu0 0.0
        %1597 = vmatmul.mubr.f32.gmra.mrb[0].mxu0 %v1518
        %v1598 = vpop.f32.mrb[0].mxu0
        %v1599 = vadd.f32 0.0, %v1598
        %v1600 = vpop.f32.mrb[0].mxu0
        %v1601 = vadd.f32 0.0, %v1600
        %1602 = vmatprep.mubr.f32.mxu0 0.0
        %1603 = vmatmul.mubr.f32.gmra.mrb[0].mxu0 %v1521
        %v1604 = vpop.f32.mrb[0].mxu0
        %v1605 = vadd.f32 0.0, %v1604
        %v1606 = vpop.f32.mrb[0].mxu0
        %v1607 = vadd.f32 0.0, %v1606
        %1608 = vmatprep.mubr.f32.mxu0 0.0
        %1609 = vmatmul.mubr.f32.gmra.mrb[0].mxu0 %v1524
        %v1610 = vpop.f32.mrb[0].mxu0
        %v1611 = vadd.f32 0.0, %v1610
        %v1612 = vpop.f32.mrb[0].mxu0
        %v1613 = vadd.f32 0.0, %v1612
        %1614 = vdwg.mxu0
        %v1615 = vadd.f32 %v1493, %v1593
        %v1616 = vadd.f32 %v1494, %v1595
        %v1617 = vadd.f32 %v1495, %v1599
        %v1618 = vadd.f32 %v1496, %v1601
        %v1619 = vadd.f32 %v1497, %v1605
        %v1620 = vadd.f32 %v1498, %v1607
        %v1621 = vadd.f32 %v1499, %v1611
        %v1622 = vadd.f32 %v1500, %v1613
        %v1623 = vld [vmem:[%s1256 + $0x3] sm:$0xff]
        %v1624 = vld [vmem:[%s1256 + $0xb] sm:$0xff]
        %v1625 = vld [vmem:[%s1256 + $0x13] sm:$0xff]
        %v1626 = vld [vmem:[%s1256 + $0x1b] sm:$0xf]
        %s1627 = scalar_lea.vmem [#allocation5], 512
        %v1628 = vld [vmem:[%s1627] sm:$0xff]
        %v1629 = vld [vmem:[%s1627 + $0x8] sm:$0xff]
        %v1630 = vld [vmem:[%s1627 + $0x10] sm:$0xff]
        %v1631 = vld [vmem:[%s1627 + $0x18] sm:$0xff]
        %v1632 = vld [vmem:[%s1627 + $0x20] sm:$0xff]
        %v1633 = vld [vmem:[%s1627 + $0x28] sm:$0xff]
        %v1634 = vld [vmem:[%s1627 + $0x30] sm:$0xff]
        %v1635 = vld [vmem:[%s1627 + $0x38] sm:$0xff]
        %v1637 = vsel %vm687, %v1623, 0
        %v1640 = vsel %vm687, %v1624, 0
        %v1643 = vsel %vm687, %v1625, 0
        %v1646 = vsel %vm687, %v1626, 0
        %1648 = vmatprep.subr.mxu0 %v1629
        %1649 = vmatpush1.msra.mxu0 %v1628
        %1650 = vmatprep.subr.mxu0 %v1631
        %1651 = vmatpush1.msra.mxu0 %v1630
        %1652 = vmatprep.subr.mxu0 %v1633
        %1653 = vmatpush1.msra.mxu0 %v1632
        %1654 = vmatprep.subr.mxu0 %v1635
        %1655 = vmatpush1.msra.mxu0 %v1634
        %1656 = vmatprep.subr.mxu0 0.0
        %1657 = vmatpush1.msra.mxu0 0.0
        %1658 = vmatprep.subr.mxu0 0.0
        %1659 = vmatpush1.msra.mxu0 0.0
        %1660 = vmatprep.subr.mxu0 0.0
        %1661 = vmatpush1.msra.mxu0 0.0
        %1662 = vmatprep.subr.mxu0 0.0
        %1663 = vmatpush1.msra.mxu0 0.0
        %1664 = vmatprep.subr.mxu0 0.0
        %1665 = vmatpush1.msra.mxu0 0.0
        %1666 = vmatprep.subr.mxu0 0.0
        %1667 = vmatpush1.msra.mxu0 0.0
        %1668 = vmatprep.subr.mxu0 0.0
        %1669 = vmatpush1.msra.mxu0 0.0
        %1670 = vmatprep.subr.mxu0 0.0
        %1671 = vmatpush1.msra.mxu0 0.0
        %1672 = vmatprep.subr.mxu0 0.0
        %1673 = vmatpush1.msra.mxu0 0.0
        %1674 = vmatprep.subr.mxu0 0.0
        %1675 = vmatpush1.msra.mxu0 0.0
        %1676 = vmatprep.subr.mxu0 0.0
        %1677 = vmatpush1.msra.mxu0 0.0
        %1678 = vmatprep.subr.mxu0 0.0
        %1679 = vmatpush1.msra.mxu0 0.0
        %1680 = vmatprep.subr.mxu0 0.0
        %1681 = vmatpush1.msra.mxu0 0.0
        %1682 = vmatprep.subr.mxu0 0.0
        %1683 = vmatpush1.msra.mxu0 0.0
        %1684 = vmatprep.subr.mxu0 0.0
        %1685 = vmatpush1.msra.mxu0 0.0
        %1686 = vmatprep.subr.mxu0 0.0
        %1687 = vmatpush1.msra.mxu0 0.0
        %1688 = vmatprep.subr.mxu0 0.0
        %1689 = vmatpush1.msra.mxu0 0.0
        %1690 = vmatprep.subr.mxu0 0.0
        %1691 = vmatpush1.msra.mxu0 0.0
        %1692 = vmatprep.subr.mxu0 0.0
        %1693 = vmatpush1.msra.mxu0 0.0
        %1694 = vmatprep.subr.mxu0 0.0
        %1695 = vmatpush1.msra.mxu0 0.0
        %1696 = vmatprep.subr.mxu0 0.0
        %1697 = vmatpush1.msra.mxu0 0.0
        %1698 = vmatprep.subr.mxu0 0.0
        %1699 = vmatpush1.msra.mxu0 0.0
        %1700 = vmatprep.subr.mxu0 0.0
        %1701 = vmatpush1.msra.mxu0 0.0
        %1702 = vmatprep.subr.mxu0 0.0
        %1703 = vmatpush1.msra.mxu0 0.0
        %1704 = vmatprep.subr.mxu0 0.0
        %1705 = vmatpush1.msra.mxu0 0.0
        %1706 = vmatprep.subr.mxu0 0.0
        %1707 = vmatpush1.msra.mxu0 0.0
        %1708 = vmatprep.subr.mxu0 0.0
        %1709 = vmatpush1.msra.mxu0 0.0
        %1710 = vmatprep.subr.mxu0 0.0
        %1711 = vmatpush1.msra.mxu0 0.0
        %1712 = vmatprep.mubr.f32.mxu0 0.0
        %1713 = vmatmul.mubr.f32.gmra.mrb[0].mxu0 %v1637
        %v1714 = vpop.f32.mrb[0].mxu0
        %v1715 = vadd.f32 0.0, %v1714
        %v1716 = vpop.f32.mrb[0].mxu0
        %v1717 = vadd.f32 0.0, %v1716
        %1718 = vmatprep.mubr.f32.mxu0 0.0
        %1719 = vmatmul.mubr.f32.gmra.mrb[0].mxu0 %v1640
        %v1720 = vpop.f32.mrb[0].mxu0
        %v1721 = vadd.f32 0.0, %v1720
        %v1722 = vpop.f32.mrb[0].mxu0
        %v1723 = vadd.f32 0.0, %v1722
        %1724 = vmatprep.mubr.f32.mxu0 0.0
        %1725 = vmatmul.mubr.f32.gmra.mrb[0].mxu0 %v1643
        %v1726 = vpop.f32.mrb[0].mxu0
        %v1727 = vadd.f32 0.0, %v1726
        %v1728 = vpop.f32.mrb[0].mxu0
        %v1729 = vadd.f32 0.0, %v1728
        %1730 = vmatprep.mubr.f32.mxu0 0.0
        %1731 = vmatmul.mubr.f32.gmra.mrb[0].mxu0 %v1646
        %v1732 = vpop.f32.mrb[0].mxu0
        %v1733 = vadd.f32 0.0, %v1732
        %v1734 = vpop.f32.mrb[0].mxu0
        %v1735 = vadd.f32 0.0, %v1734
        %1736 = vdwg.mxu0
        %v1737 = vadd.f32 %v1615, %v1715
        %v1738 = vadd.f32 %v1616, %v1717
        %v1739 = vadd.f32 %v1617, %v1721
        %v1740 = vadd.f32 %v1618, %v1723
        %v1741 = vadd.f32 %v1619, %v1727
        %v1742 = vadd.f32 %v1620, %v1729
        %v1743 = vadd.f32 %v1621, %v1733
        %v1744 = vadd.f32 %v1622, %v1735
        %v1745 = vld [vmem:[%s1256 + $0x4] sm:$0xff]
        %v1746 = vld [vmem:[%s1256 + $0xc] sm:$0xff]
        %v1747 = vld [vmem:[%s1256 + $0x14] sm:$0xff]
        %v1748 = vld [vmem:[%s1256 + $0x1c] sm:$0xf]
        %s1749 = scalar_lea.vmem [#allocation5], 576
        %v1750 = vld [vmem:[%s1749] sm:$0xff]
        %v1751 = vld [vmem:[%s1749 + $0x8] sm:$0xff]
        %v1752 = vld [vmem:[%s1749 + $0x10] sm:$0xff]
        %v1753 = vld [vmem:[%s1749 + $0x18] sm:$0xff]
        %v1754 = vld [vmem:[%s1749 + $0x20] sm:$0xff]
        %v1755 = vld [vmem:[%s1749 + $0x28] sm:$0xff]
        %v1756 = vld [vmem:[%s1749 + $0x30] sm:$0xff]
        %v1757 = vld [vmem:[%s1749 + $0x38] sm:$0xff]
        %v1759 = vsel %vm687, %v1745, 0
        %v1762 = vsel %vm687, %v1746, 0
        %v1765 = vsel %vm687, %v1747, 0
        %v1768 = vsel %vm687, %v1748, 0
        %1770 = vmatprep.subr.mxu0 %v1751
        %1771 = vmatpush1.msra.mxu0 %v1750
        %1772 = vmatprep.subr.mxu0 %v1753
        %1773 = vmatpush1.msra.mxu0 %v1752
        %1774 = vmatprep.subr.mxu0 %v1755
        %1775 = vmatpush1.msra.mxu0 %v1754
        %1776 = vmatprep.subr.mxu0 %v1757
        %1777 = vmatpush1.msra.mxu0 %v1756
        %1778 = vmatprep.subr.mxu0 0.0
        %1779 = vmatpush1.msra.mxu0 0.0
        %1780 = vmatprep.subr.mxu0 0.0
        %1781 = vmatpush1.msra.mxu0 0.0
        %1782 = vmatprep.subr.mxu0 0.0
        %1783 = vmatpush1.msra.mxu0 0.0
        %1784 = vmatprep.subr.mxu0 0.0
        %1785 = vmatpush1.msra.mxu0 0.0
        %1786 = vmatprep.subr.mxu0 0.0
        %1787 = vmatpush1.msra.mxu0 0.0
        %1788 = vmatprep.subr.mxu0 0.0
        %1789 = vmatpush1.msra.mxu0 0.0
        %1790 = vmatprep.subr.mxu0 0.0
        %1791 = vmatpush1.msra.mxu0 0.0
        %1792 = vmatprep.subr.mxu0 0.0
        %1793 = vmatpush1.msra.mxu0 0.0
        %1794 = vmatprep.subr.mxu0 0.0
        %1795 = vmatpush1.msra.mxu0 0.0
        %1796 = vmatprep.subr.mxu0 0.0
        %1797 = vmatpush1.msra.mxu0 0.0
        %1798 = vmatprep.subr.mxu0 0.0
        %1799 = vmatpush1.msra.mxu0 0.0
        %1800 = vmatprep.subr.mxu0 0.0
        %1801 = vmatpush1.msra.mxu0 0.0
        %1802 = vmatprep.subr.mxu0 0.0
        %1803 = vmatpush1.msra.mxu0 0.0
        %1804 = vmatprep.subr.mxu0 0.0
        %1805 = vmatpush1.msra.mxu0 0.0
        %1806 = vmatprep.subr.mxu0 0.0
        %1807 = vmatpush1.msra.mxu0 0.0
        %1808 = vmatprep.subr.mxu0 0.0
        %1809 = vmatpush1.msra.mxu0 0.0
        %1810 = vmatprep.subr.mxu0 0.0
        %1811 = vmatpush1.msra.mxu0 0.0
        %1812 = vmatprep.subr.mxu0 0.0
        %1813 = vmatpush1.msra.mxu0 0.0
        %1814 = vmatprep.subr.mxu0 0.0
        %1815 = vmatpush1.msra.mxu0 0.0
        %1816 = vmatprep.subr.mxu0 0.0
        %1817 = vmatpush1.msra.mxu0 0.0
        %1818 = vmatprep.subr.mxu0 0.0
        %1819 = vmatpush1.msra.mxu0 0.0
        %1820 = vmatprep.subr.mxu0 0.0
        %1821 = vmatpush1.msra.mxu0 0.0
        %1822 = vmatprep.subr.mxu0 0.0
        %1823 = vmatpush1.msra.mxu0 0.0
        %1824 = vmatprep.subr.mxu0 0.0
        %1825 = vmatpush1.msra.mxu0 0.0
        %1826 = vmatprep.subr.mxu0 0.0
        %1827 = vmatpush1.msra.mxu0 0.0
        %1828 = vmatprep.subr.mxu0 0.0
        %1829 = vmatpush1.msra.mxu0 0.0
        %1830 = vmatprep.subr.mxu0 0.0
        %1831 = vmatpush1.msra.mxu0 0.0
        %1832 = vmatprep.subr.mxu0 0.0
        %1833 = vmatpush1.msra.mxu0 0.0
        %1834 = vmatprep.mubr.f32.mxu0 0.0
        %1835 = vmatmul.mubr.f32.gmra.mrb[0].mxu0 %v1759
        %v1836 = vpop.f32.mrb[0].mxu0
        %v1837 = vadd.f32 0.0, %v1836
        %v1838 = vpop.f32.mrb[0].mxu0
        %v1839 = vadd.f32 0.0, %v1838
        %1840 = vmatprep.mubr.f32.mxu0 0.0
        %1841 = vmatmul.mubr.f32.gmra.mrb[0].mxu0 %v1762
        %v1842 = vpop.f32.mrb[0].mxu0
        %v1843 = vadd.f32 0.0, %v1842
        %v1844 = vpop.f32.mrb[0].mxu0
        %v1845 = vadd.f32 0.0, %v1844
        %1846 = vmatprep.mubr.f32.mxu0 0.0
        %1847 = vmatmul.mubr.f32.gmra.mrb[0].mxu0 %v1765
        %v1848 = vpop.f32.mrb[0].mxu0
        %v1849 = vadd.f32 0.0, %v1848
        %v1850 = vpop.f32.mrb[0].mxu0
        %v1851 = vadd.f32 0.0, %v1850
        %1852 = vmatprep.mubr.f32.mxu0 0.0
        %1853 = vmatmul.mubr.f32.gmra.mrb[0].mxu0 %v1768
        %v1854 = vpop.f32.mrb[0].mxu0
        %v1855 = vadd.f32 0.0, %v1854
        %v1856 = vpop.f32.mrb[0].mxu0
        %v1857 = vadd.f32 0.0, %v1856
        %1858 = vdwg.mxu0
        %v1859 = vadd.f32 %v1737, %v1837
        %v1860 = vadd.f32 %v1738, %v1839
        %v1861 = vadd.f32 %v1739, %v1843
        %v1862 = vadd.f32 %v1740, %v1845
        %v1863 = vadd.f32 %v1741, %v1849
        %v1864 = vadd.f32 %v1742, %v1851
        %v1865 = vadd.f32 %v1743, %v1855
        %v1866 = vadd.f32 %v1744, %v1857
        %s1867 = scalar_lea.vmem %s572, 64 [#allocation2]
        %v1868 = vld [vmem:[%s1867] sm:$0xff]
        %v1869 = vld [vmem:[%s1867 + $0x8] sm:$0xff]
        %v1870 = vld [vmem:[%s1867 + $0x10] sm:$0xff]
        %v1871 = vld [vmem:[%s1867 + $0x18] sm:$0xf]
        %s1872 = scalar_lea.vmem [#allocation5], 640
        %v1873 = vld [vmem:[%s1872] sm:$0xff]
        %v1874 = vld [vmem:[%s1872 + $0x8] sm:$0xff]
        %v1875 = vld [vmem:[%s1872 + $0x10] sm:$0xff]
        %v1876 = vld [vmem:[%s1872 + $0x18] sm:$0xff]
        %v1877 = vld [vmem:[%s1872 + $0x20] sm:$0xff]
        %v1878 = vld [vmem:[%s1872 + $0x28] sm:$0xff]
        %v1879 = vld [vmem:[%s1872 + $0x30] sm:$0xff]
        %v1880 = vld [vmem:[%s1872 + $0x38] sm:$0xff]
        %v1882 = vsel %vm687, %v1868, 0
        %v1885 = vsel %vm687, %v1869, 0
        %v1888 = vsel %vm687, %v1870, 0
        %v1891 = vsel %vm687, %v1871, 0
        %1893 = vmatprep.subr.mxu0 %v1874
        %1894 = vmatpush1.msra.mxu0 %v1873
        %1895 = vmatprep.subr.mxu0 %v1876
        %1896 = vmatpush1.msra.mxu0 %v1875
        %1897 = vmatprep.subr.mxu0 %v1878
        %1898 = vmatpush1.msra.mxu0 %v1877
        %1899 = vmatprep.subr.mxu0 %v1880
        %1900 = vmatpush1.msra.mxu0 %v1879
        %1901 = vmatprep.subr.mxu0 0.0
        %1902 = vmatpush1.msra.mxu0 0.0
        %1903 = vmatprep.subr.mxu0 0.0
        %1904 = vmatpush1.msra.mxu0 0.0
        %1905 = vmatprep.subr.mxu0 0.0
        %1906 = vmatpush1.msra.mxu0 0.0
        %1907 = vmatprep.subr.mxu0 0.0
        %1908 = vmatpush1.msra.mxu0 0.0
        %1909 = vmatprep.subr.mxu0 0.0
        %1910 = vmatpush1.msra.mxu0 0.0
        %1911 = vmatprep.subr.mxu0 0.0
        %1912 = vmatpush1.msra.mxu0 0.0
        %1913 = vmatprep.subr.mxu0 0.0
        %1914 = vmatpush1.msra.mxu0 0.0
        %1915 = vmatprep.subr.mxu0 0.0
        %1916 = vmatpush1.msra.mxu0 0.0
        %1917 = vmatprep.subr.mxu0 0.0
        %1918 = vmatpush1.msra.mxu0 0.0
        %1919 = vmatprep.subr.mxu0 0.0
        %1920 = vmatpush1.msra.mxu0 0.0
        %1921 = vmatprep.subr.mxu0 0.0
        %1922 = vmatpush1.msra.mxu0 0.0
        %1923 = vmatprep.subr.mxu0 0.0
        %1924 = vmatpush1.msra.mxu0 0.0
        %1925 = vmatprep.subr.mxu0 0.0
        %1926 = vmatpush1.msra.mxu0 0.0
        %1927 = vmatprep.subr.mxu0 0.0
        %1928 = vmatpush1.msra.mxu0 0.0
        %1929 = vmatprep.subr.mxu0 0.0
        %1930 = vmatpush1.msra.mxu0 0.0
        %1931 = vmatprep.subr.mxu0 0.0
        %1932 = vmatpush1.msra.mxu0 0.0
        %1933 = vmatprep.subr.mxu0 0.0
        %1934 = vmatpush1.msra.mxu0 0.0
        %1935 = vmatprep.subr.mxu0 0.0
        %1936 = vmatpush1.msra.mxu0 0.0
        %1937 = vmatprep.subr.mxu0 0.0
        %1938 = vmatpush1.msra.mxu0 0.0
        %1939 = vmatprep.subr.mxu0 0.0
        %1940 = vmatpush1.msra.mxu0 0.0
        %1941 = vmatprep.subr.mxu0 0.0
        %1942 = vmatpush1.msra.mxu0 0.0
        %1943 = vmatprep.subr.mxu0 0.0
        %1944 = vmatpush1.msra.mxu0 0.0
        %1945 = vmatprep.subr.mxu0 0.0
        %1946 = vmatpush1.msra.mxu0 0.0
        %1947 = vmatprep.subr.mxu0 0.0
        %1948 = vmatpush1.msra.mxu0 0.0
        %1949 = vmatprep.subr.mxu0 0.0
        %1950 = vmatpush1.msra.mxu0 0.0
        %1951 = vmatprep.subr.mxu0 0.0
        %1952 = vmatpush1.msra.mxu0 0.0
        %1953 = vmatprep.subr.mxu0 0.0
        %1954 = vmatpush1.msra.mxu0 0.0
        %1955 = vmatprep.subr.mxu0 0.0
        %1956 = vmatpush1.msra.mxu0 0.0
        %1957 = vmatprep.mubr.f32.mxu0 0.0
        %1958 = vmatmul.mubr.f32.gmra.mrb[0].mxu0 %v1882
        %v1959 = vpop.f32.mrb[0].mxu0
        %v1960 = vadd.f32 0.0, %v1959
        %v1961 = vpop.f32.mrb[0].mxu0
        %v1962 = vadd.f32 0.0, %v1961
        %1963 = vmatprep.mubr.f32.mxu0 0.0
        %1964 = vmatmul.mubr.f32.gmra.mrb[0].mxu0 %v1885
        %v1965 = vpop.f32.mrb[0].mxu0
        %v1966 = vadd.f32 0.0, %v1965
        %v1967 = vpop.f32.mrb[0].mxu0
        %v1968 = vadd.f32 0.0, %v1967
        %1969 = vmatprep.mubr.f32.mxu0 0.0
        %1970 = vmatmul.mubr.f32.gmra.mrb[0].mxu0 %v1888
        %v1971 = vpop.f32.mrb[0].mxu0
        %v1972 = vadd.f32 0.0, %v1971
        %v1973 = vpop.f32.mrb[0].mxu0
        %v1974 = vadd.f32 0.0, %v1973
        %1975 = vmatprep.mubr.f32.mxu0 0.0
        %1976 = vmatmul.mubr.f32.gmra.mrb[0].mxu0 %v1891
        %v1977 = vpop.f32.mrb[0].mxu0
        %v1978 = vadd.f32 0.0, %v1977
        %v1979 = vpop.f32.mrb[0].mxu0
        %v1980 = vadd.f32 0.0, %v1979
        %1981 = vdwg.mxu0
        %v1982 = vadd.f32 %v1859, %v1960
        %v1983 = vadd.f32 %v1860, %v1962
        %v1984 = vadd.f32 %v1861, %v1966
        %v1985 = vadd.f32 %v1862, %v1968
        %v1986 = vadd.f32 %v1863, %v1972
        %v1987 = vadd.f32 %v1864, %v1974
        %v1988 = vadd.f32 %v1865, %v1978
        %v1989 = vadd.f32 %v1866, %v1980
        %v1990 = vld [vmem:[%s1867 + $0x1] sm:$0xff]
        %v1991 = vld [vmem:[%s1867 + $0x9] sm:$0xff]
        %v1992 = vld [vmem:[%s1867 + $0x11] sm:$0xff]
        %v1993 = vld [vmem:[%s1867 + $0x19] sm:$0xf]
        %s1994 = scalar_lea.vmem [#allocation5], 704
        %v1995 = vld [vmem:[%s1994] sm:$0xff]
        %v1996 = vld [vmem:[%s1994 + $0x8] sm:$0xff]
        %v1997 = vld [vmem:[%s1994 + $0x10] sm:$0xff]
        %v1998 = vld [vmem:[%s1994 + $0x18] sm:$0xff]
        %v1999 = vld [vmem:[%s1994 + $0x20] sm:$0xff]
        %v2000 = vld [vmem:[%s1994 + $0x28] sm:$0xff]
        %v2001 = vld [vmem:[%s1994 + $0x30] sm:$0xff]
        %v2002 = vld [vmem:[%s1994 + $0x38] sm:$0xff]
        %v2004 = vsel %vm687, %v1990, 0
        %v2007 = vsel %vm687, %v1991, 0
        %v2010 = vsel %vm687, %v1992, 0
        %v2013 = vsel %vm687, %v1993, 0
        %2015 = vmatprep.subr.mxu0 %v1996
        %2016 = vmatpush1.msra.mxu0 %v1995
        %2017 = vmatprep.subr.mxu0 %v1998
        %2018 = vmatpush1.msra.mxu0 %v1997
        %2019 = vmatprep.subr.mxu0 %v2000
        %2020 = vmatpush1.msra.mxu0 %v1999
        %2021 = vmatprep.subr.mxu0 %v2002
        %2022 = vmatpush1.msra.mxu0 %v2001
        %2023 = vmatprep.subr.mxu0 0.0
        %2024 = vmatpush1.msra.mxu0 0.0
        %2025 = vmatprep.subr.mxu0 0.0
        %2026 = vmatpush1.msra.mxu0 0.0
        %2027 = vmatprep.subr.mxu0 0.0
        %2028 = vmatpush1.msra.mxu0 0.0
        %2029 = vmatprep.subr.mxu0 0.0
        %2030 = vmatpush1.msra.mxu0 0.0
        %2031 = vmatprep.subr.mxu0 0.0
        %2032 = vmatpush1.msra.mxu0 0.0
        %2033 = vmatprep.subr.mxu0 0.0
        %2034 = vmatpush1.msra.mxu0 0.0
        %2035 = vmatprep.subr.mxu0 0.0
        %2036 = vmatpush1.msra.mxu0 0.0
        %2037 = vmatprep.subr.mxu0 0.0
        %2038 = vmatpush1.msra.mxu0 0.0
        %2039 = vmatprep.subr.mxu0 0.0
        %2040 = vmatpush1.msra.mxu0 0.0
        %2041 = vmatprep.subr.mxu0 0.0
        %2042 = vmatpush1.msra.mxu0 0.0
        %2043 = vmatprep.subr.mxu0 0.0
        %2044 = vmatpush1.msra.mxu0 0.0
        %2045 = vmatprep.subr.mxu0 0.0
        %2046 = vmatpush1.msra.mxu0 0.0
        %2047 = vmatprep.subr.mxu0 0.0
        %2048 = vmatpush1.msra.mxu0 0.0
        %2049 = vmatprep.subr.mxu0 0.0
        %2050 = vmatpush1.msra.mxu0 0.0
        %2051 = vmatprep.subr.mxu0 0.0
        %2052 = vmatpush1.msra.mxu0 0.0
        %2053 = vmatprep.subr.mxu0 0.0
        %2054 = vmatpush1.msra.mxu0 0.0
        %2055 = vmatprep.subr.mxu0 0.0
        %2056 = vmatpush1.msra.mxu0 0.0
        %2057 = vmatprep.subr.mxu0 0.0
        %2058 = vmatpush1.msra.mxu0 0.0
        %2059 = vmatprep.subr.mxu0 0.0
        %2060 = vmatpush1.msra.mxu0 0.0
        %2061 = vmatprep.subr.mxu0 0.0
        %2062 = vmatpush1.msra.mxu0 0.0
        %2063 = vmatprep.subr.mxu0 0.0
        %2064 = vmatpush1.msra.mxu0 0.0
        %2065 = vmatprep.subr.mxu0 0.0
        %2066 = vmatpush1.msra.mxu0 0.0
        %2067 = vmatprep.subr.mxu0 0.0
        %2068 = vmatpush1.msra.mxu0 0.0
        %2069 = vmatprep.subr.mxu0 0.0
        %2070 = vmatpush1.msra.mxu0 0.0
        %2071 = vmatprep.subr.mxu0 0.0
        %2072 = vmatpush1.msra.mxu0 0.0
        %2073 = vmatprep.subr.mxu0 0.0
        %2074 = vmatpush1.msra.mxu0 0.0
        %2075 = vmatprep.subr.mxu0 0.0
        %2076 = vmatpush1.msra.mxu0 0.0
        %2077 = vmatprep.subr.mxu0 0.0
        %2078 = vmatpush1.msra.mxu0 0.0
        %2079 = vmatprep.mubr.f32.mxu0 0.0
        %2080 = vmatmul.mubr.f32.gmra.mrb[0].mxu0 %v2004
        %v2081 = vpop.f32.mrb[0].mxu0
        %v2082 = vadd.f32 0.0, %v2081
        %v2083 = vpop.f32.mrb[0].mxu0
        %v2084 = vadd.f32 0.0, %v2083
        %2085 = vmatprep.mubr.f32.mxu0 0.0
        %2086 = vmatmul.mubr.f32.gmra.mrb[0].mxu0 %v2007
        %v2087 = vpop.f32.mrb[0].mxu0
        %v2088 = vadd.f32 0.0, %v2087
        %v2089 = vpop.f32.mrb[0].mxu0
        %v2090 = vadd.f32 0.0, %v2089
        %2091 = vmatprep.mubr.f32.mxu0 0.0
        %2092 = vmatmul.mubr.f32.gmra.mrb[0].mxu0 %v2010
        %v2093 = vpop.f32.mrb[0].mxu0
        %v2094 = vadd.f32 0.0, %v2093
        %v2095 = vpop.f32.mrb[0].mxu0
        %v2096 = vadd.f32 0.0, %v2095
        %2097 = vmatprep.mubr.f32.mxu0 0.0
        %2098 = vmatmul.mubr.f32.gmra.mrb[0].mxu0 %v2013
        %v2099 = vpop.f32.mrb[0].mxu0
        %v2100 = vadd.f32 0.0, %v2099
        %v2101 = vpop.f32.mrb[0].mxu0
        %v2102 = vadd.f32 0.0, %v2101
        %2103 = vdwg.mxu0
        %v2104 = vadd.f32 %v1982, %v2082
        %v2105 = vadd.f32 %v1983, %v2084
        %v2106 = vadd.f32 %v1984, %v2088
        %v2107 = vadd.f32 %v1985, %v2090
        %v2108 = vadd.f32 %v1986, %v2094
        %v2109 = vadd.f32 %v1987, %v2096
        %v2110 = vadd.f32 %v1988, %v2100
        %v2111 = vadd.f32 %v1989, %v2102
        %v2112 = vld [vmem:[%s1867 + $0x2] sm:$0xff]
        %v2113 = vld [vmem:[%s1867 + $0xa] sm:$0xff]
        %v2114 = vld [vmem:[%s1867 + $0x12] sm:$0xff]
        %v2115 = vld [vmem:[%s1867 + $0x1a] sm:$0xf]
        %s2116 = scalar_lea.vmem [#allocation5], 768
        %v2117 = vld [vmem:[%s2116] sm:$0xff]
        %v2118 = vld [vmem:[%s2116 + $0x8] sm:$0xff]
        %v2119 = vld [vmem:[%s2116 + $0x10] sm:$0xff]
        %v2120 = vld [vmem:[%s2116 + $0x18] sm:$0xff]
        %v2121 = vld [vmem:[%s2116 + $0x20] sm:$0xff]
        %v2122 = vld [vmem:[%s2116 + $0x28] sm:$0xff]
        %v2123 = vld [vmem:[%s2116 + $0x30] sm:$0xff]
        %v2124 = vld [vmem:[%s2116 + $0x38] sm:$0xff]
        %v2126 = vsel %vm687, %v2112, 0
        %v2129 = vsel %vm687, %v2113, 0
        %v2132 = vsel %vm687, %v2114, 0
        %v2135 = vsel %vm687, %v2115, 0
        %2137 = vmatprep.subr.mxu0 %v2118
        %2138 = vmatpush1.msra.mxu0 %v2117
        %2139 = vmatprep.subr.mxu0 %v2120
        %2140 = vmatpush1.msra.mxu0 %v2119
        %2141 = vmatprep.subr.mxu0 %v2122
        %2142 = vmatpush1.msra.mxu0 %v2121
        %2143 = vmatprep.subr.mxu0 %v2124
        %2144 = vmatpush1.msra.mxu0 %v2123
        %2145 = vmatprep.subr.mxu0 0.0
        %2146 = vmatpush1.msra.mxu0 0.0
        %2147 = vmatprep.subr.mxu0 0.0
        %2148 = vmatpush1.msra.mxu0 0.0
        %2149 = vmatprep.subr.mxu0 0.0
        %2150 = vmatpush1.msra.mxu0 0.0
        %2151 = vmatprep.subr.mxu0 0.0
        %2152 = vmatpush1.msra.mxu0 0.0
        %2153 = vmatprep.subr.mxu0 0.0
        %2154 = vmatpush1.msra.mxu0 0.0
        %2155 = vmatprep.subr.mxu0 0.0
        %2156 = vmatpush1.msra.mxu0 0.0
        %2157 = vmatprep.subr.mxu0 0.0
        %2158 = vmatpush1.msra.mxu0 0.0
        %2159 = vmatprep.subr.mxu0 0.0
        %2160 = vmatpush1.msra.mxu0 0.0
        %2161 = vmatprep.subr.mxu0 0.0
        %2162 = vmatpush1.msra.mxu0 0.0
        %2163 = vmatprep.subr.mxu0 0.0
        %2164 = vmatpush1.msra.mxu0 0.0
        %2165 = vmatprep.subr.mxu0 0.0
        %2166 = vmatpush1.msra.mxu0 0.0
        %2167 = vmatprep.subr.mxu0 0.0
        %2168 = vmatpush1.msra.mxu0 0.0
        %2169 = vmatprep.subr.mxu0 0.0
        %2170 = vmatpush1.msra.mxu0 0.0
        %2171 = vmatprep.subr.mxu0 0.0
        %2172 = vmatpush1.msra.mxu0 0.0
        %2173 = vmatprep.subr.mxu0 0.0
        %2174 = vmatpush1.msra.mxu0 0.0
        %2175 = vmatprep.subr.mxu0 0.0
        %2176 = vmatpush1.msra.mxu0 0.0
        %2177 = vmatprep.subr.mxu0 0.0
        %2178 = vmatpush1.msra.mxu0 0.0
        %2179 = vmatprep.subr.mxu0 0.0
        %2180 = vmatpush1.msra.mxu0 0.0
        %2181 = vmatprep.subr.mxu0 0.0
        %2182 = vmatpush1.msra.mxu0 0.0
        %2183 = vmatprep.subr.mxu0 0.0
        %2184 = vmatpush1.msra.mxu0 0.0
        %2185 = vmatprep.subr.mxu0 0.0
        %2186 = vmatpush1.msra.mxu0 0.0
        %2187 = vmatprep.subr.mxu0 0.0
        %2188 = vmatpush1.msra.mxu0 0.0
        %2189 = vmatprep.subr.mxu0 0.0
        %2190 = vmatpush1.msra.mxu0 0.0
        %2191 = vmatprep.subr.mxu0 0.0
        %2192 = vmatpush1.msra.mxu0 0.0
        %2193 = vmatprep.subr.mxu0 0.0
        %2194 = vmatpush1.msra.mxu0 0.0
        %2195 = vmatprep.subr.mxu0 0.0
        %2196 = vmatpush1.msra.mxu0 0.0
        %2197 = vmatprep.subr.mxu0 0.0
        %2198 = vmatpush1.msra.mxu0 0.0
        %2199 = vmatprep.subr.mxu0 0.0
        %2200 = vmatpush1.msra.mxu0 0.0
        %2201 = vmatprep.mubr.f32.mxu0 0.0
        %2202 = vmatmul.mubr.f32.gmra.mrb[0].mxu0 %v2126
        %v2203 = vpop.f32.mrb[0].mxu0
        %v2204 = vadd.f32 0.0, %v2203
        %v2205 = vpop.f32.mrb[0].mxu0
        %v2206 = vadd.f32 0.0, %v2205
        %2207 = vmatprep.mubr.f32.mxu0 0.0
        %2208 = vmatmul.mubr.f32.gmra.mrb[0].mxu0 %v2129
        %v2209 = vpop.f32.mrb[0].mxu0
        %v2210 = vadd.f32 0.0, %v2209
        %v2211 = vpop.f32.mrb[0].mxu0
        %v2212 = vadd.f32 0.0, %v2211
        %2213 = vmatprep.mubr.f32.mxu0 0.0
        %2214 = vmatmul.mubr.f32.gmra.mrb[0].mxu0 %v2132
        %v2215 = vpop.f32.mrb[0].mxu0
        %v2216 = vadd.f32 0.0, %v2215
        %v2217 = vpop.f32.mrb[0].mxu0
        %v2218 = vadd.f32 0.0, %v2217
        %2219 = vmatprep.mubr.f32.mxu0 0.0
        %2220 = vmatmul.mubr.f32.gmra.mrb[0].mxu0 %v2135
        %v2221 = vpop.f32.mrb[0].mxu0
        %v2222 = vadd.f32 0.0, %v2221
        %v2223 = vpop.f32.mrb[0].mxu0
        %v2224 = vadd.f32 0.0, %v2223
        %2225 = vdwg.mxu0
        %v2226 = vadd.f32 %v2104, %v2204
        %v2227 = vadd.f32 %v2105, %v2206
        %v2228 = vadd.f32 %v2106, %v2210
        %v2229 = vadd.f32 %v2107, %v2212
        %v2230 = vadd.f32 %v2108, %v2216
        %v2231 = vadd.f32 %v2109, %v2218
        %v2232 = vadd.f32 %v2110, %v2222
        %v2233 = vadd.f32 %v2111, %v2224
        %v2234 = vld [vmem:[%s1867 + $0x3] sm:$0xff]
        %v2235 = vld [vmem:[%s1867 + $0xb] sm:$0xff]
        %v2236 = vld [vmem:[%s1867 + $0x13] sm:$0xff]
        %v2237 = vld [vmem:[%s1867 + $0x1b] sm:$0xf]
        %s2238 = scalar_lea.vmem [#allocation5], 832
        %v2239 = vld [vmem:[%s2238] sm:$0xff]
        %v2240 = vld [vmem:[%s2238 + $0x8] sm:$0xff]
        %v2241 = vld [vmem:[%s2238 + $0x10] sm:$0xff]
        %v2242 = vld [vmem:[%s2238 + $0x18] sm:$0xff]
        %v2243 = vld [vmem:[%s2238 + $0x20] sm:$0xff]
        %v2244 = vld [vmem:[%s2238 + $0x28] sm:$0xff]
        %v2245 = vld [vmem:[%s2238 + $0x30] sm:$0xff]
        %v2246 = vld [vmem:[%s2238 + $0x38] sm:$0xff]
        %v2248 = vsel %vm687, %v2234, 0
        %v2251 = vsel %vm687, %v2235, 0
        %v2254 = vsel %vm687, %v2236, 0
        %v2257 = vsel %vm687, %v2237, 0
        %2259 = vmatprep.subr.mxu0 %v2240
        %2260 = vmatpush1.msra.mxu0 %v2239
        %2261 = vmatprep.subr.mxu0 %v2242
        %2262 = vmatpush1.msra.mxu0 %v2241
        %2263 = vmatprep.subr.mxu0 %v2244
        %2264 = vmatpush1.msra.mxu0 %v2243
        %2265 = vmatprep.subr.mxu0 %v2246
        %2266 = vmatpush1.msra.mxu0 %v2245
        %2267 = vmatprep.subr.mxu0 0.0
        %2268 = vmatpush1.msra.mxu0 0.0
        %2269 = vmatprep.subr.mxu0 0.0
        %2270 = vmatpush1.msra.mxu0 0.0
        %2271 = vmatprep.subr.mxu0 0.0
        %2272 = vmatpush1.msra.mxu0 0.0
        %2273 = vmatprep.subr.mxu0 0.0
        %2274 = vmatpush1.msra.mxu0 0.0
        %2275 = vmatprep.subr.mxu0 0.0
        %2276 = vmatpush1.msra.mxu0 0.0
        %2277 = vmatprep.subr.mxu0 0.0
        %2278 = vmatpush1.msra.mxu0 0.0
        %2279 = vmatprep.subr.mxu0 0.0
        %2280 = vmatpush1.msra.mxu0 0.0
        %2281 = vmatprep.subr.mxu0 0.0
        %2282 = vmatpush1.msra.mxu0 0.0
        %2283 = vmatprep.subr.mxu0 0.0
        %2284 = vmatpush1.msra.mxu0 0.0
        %2285 = vmatprep.subr.mxu0 0.0
        %2286 = vmatpush1.msra.mxu0 0.0
        %2287 = vmatprep.subr.mxu0 0.0
        %2288 = vmatpush1.msra.mxu0 0.0
        %2289 = vmatprep.subr.mxu0 0.0
        %2290 = vmatpush1.msra.mxu0 0.0
        %2291 = vmatprep.subr.mxu0 0.0
        %2292 = vmatpush1.msra.mxu0 0.0
        %2293 = vmatprep.subr.mxu0 0.0
        %2294 = vmatpush1.msra.mxu0 0.0
        %2295 = vmatprep.subr.mxu0 0.0
        %2296 = vmatpush1.msra.mxu0 0.0
        %2297 = vmatprep.subr.mxu0 0.0
        %2298 = vmatpush1.msra.mxu0 0.0
        %2299 = vmatprep.subr.mxu0 0.0
        %2300 = vmatpush1.msra.mxu0 0.0
        %2301 = vmatprep.subr.mxu0 0.0
        %2302 = vmatpush1.msra.mxu0 0.0
        %2303 = vmatprep.subr.mxu0 0.0
        %2304 = vmatpush1.msra.mxu0 0.0
        %2305 = vmatprep.subr.mxu0 0.0
        %2306 = vmatpush1.msra.mxu0 0.0
        %2307 = vmatprep.subr.mxu0 0.0
        %2308 = vmatpush1.msra.mxu0 0.0
        %2309 = vmatprep.subr.mxu0 0.0
        %2310 = vmatpush1.msra.mxu0 0.0
        %2311 = vmatprep.subr.mxu0 0.0
        %2312 = vmatpush1.msra.mxu0 0.0
        %2313 = vmatprep.subr.mxu0 0.0
        %2314 = vmatpush1.msra.mxu0 0.0
        %2315 = vmatprep.subr.mxu0 0.0
        %2316 = vmatpush1.msra.mxu0 0.0
        %2317 = vmatprep.subr.mxu0 0.0
        %2318 = vmatpush1.msra.mxu0 0.0
        %2319 = vmatprep.subr.mxu0 0.0
        %2320 = vmatpush1.msra.mxu0 0.0
        %2321 = vmatprep.subr.mxu0 0.0
        %2322 = vmatpush1.msra.mxu0 0.0
        %2323 = vmatprep.mubr.f32.mxu0 0.0
        %2324 = vmatmul.mubr.f32.gmra.mrb[0].mxu0 %v2248
        %v2325 = vpop.f32.mrb[0].mxu0
        %v2326 = vadd.f32 0.0, %v2325
        %v2327 = vpop.f32.mrb[0].mxu0
        %v2328 = vadd.f32 0.0, %v2327
        %2329 = vmatprep.mubr.f32.mxu0 0.0
        %2330 = vmatmul.mubr.f32.gmra.mrb[0].mxu0 %v2251
        %v2331 = vpop.f32.mrb[0].mxu0
        %v2332 = vadd.f32 0.0, %v2331
        %v2333 = vpop.f32.mrb[0].mxu0
        %v2334 = vadd.f32 0.0, %v2333
        %2335 = vmatprep.mubr.f32.mxu0 0.0
        %2336 = vmatmul.mubr.f32.gmra.mrb[0].mxu0 %v2254
        %v2337 = vpop.f32.mrb[0].mxu0
        %v2338 = vadd.f32 0.0, %v2337
        %v2339 = vpop.f32.mrb[0].mxu0
        %v2340 = vadd.f32 0.0, %v2339
        %2341 = vmatprep.mubr.f32.mxu0 0.0
        %2342 = vmatmul.mubr.f32.gmra.mrb[0].mxu0 %v2257
        %v2343 = vpop.f32.mrb[0].mxu0
        %v2344 = vadd.f32 0.0, %v2343
        %v2345 = vpop.f32.mrb[0].mxu0
        %v2346 = vadd.f32 0.0, %v2345
        %2347 = vdwg.mxu0
        %v2348 = vadd.f32 %v2226, %v2326
        %v2349 = vadd.f32 %v2227, %v2328
        %v2350 = vadd.f32 %v2228, %v2332
        %v2351 = vadd.f32 %v2229, %v2334
        %v2352 = vadd.f32 %v2230, %v2338
        %v2353 = vadd.f32 %v2231, %v2340
        %v2354 = vadd.f32 %v2232, %v2344
        %v2355 = vadd.f32 %v2233, %v2346
        %v2356 = vld [vmem:[%s1867 + $0x4] sm:$0xff]
        %v2357 = vld [vmem:[%s1867 + $0xc] sm:$0xff]
        %v2358 = vld [vmem:[%s1867 + $0x14] sm:$0xff]
        %v2359 = vld [vmem:[%s1867 + $0x1c] sm:$0xf]
        %s2360 = scalar_lea.vmem [#allocation5], 896
        %v2361 = vld [vmem:[%s2360] sm:$0xff]
        %v2362 = vld [vmem:[%s2360 + $0x8] sm:$0xff]
        %v2363 = vld [vmem:[%s2360 + $0x10] sm:$0xff]
        %v2364 = vld [vmem:[%s2360 + $0x18] sm:$0xff]
        %v2365 = vld [vmem:[%s2360 + $0x20] sm:$0xff]
        %v2366 = vld [vmem:[%s2360 + $0x28] sm:$0xff]
        %v2367 = vld [vmem:[%s2360 + $0x30] sm:$0xff]
        %v2368 = vld [vmem:[%s2360 + $0x38] sm:$0xff]
        %v2370 = vsel %vm687, %v2356, 0
        %v2373 = vsel %vm687, %v2357, 0
        %v2376 = vsel %vm687, %v2358, 0
        %v2379 = vsel %vm687, %v2359, 0
        %2381 = vmatprep.subr.mxu0 %v2362
        %2382 = vmatpush1.msra.mxu0 %v2361
        %2383 = vmatprep.subr.mxu0 %v2364
        %2384 = vmatpush1.msra.mxu0 %v2363
        %2385 = vmatprep.subr.mxu0 %v2366
        %2386 = vmatpush1.msra.mxu0 %v2365
        %2387 = vmatprep.subr.mxu0 %v2368
        %2388 = vmatpush1.msra.mxu0 %v2367
        %2389 = vmatprep.subr.mxu0 0.0
        %2390 = vmatpush1.msra.mxu0 0.0
        %2391 = vmatprep.subr.mxu0 0.0
        %2392 = vmatpush1.msra.mxu0 0.0
        %2393 = vmatprep.subr.mxu0 0.0
        %2394 = vmatpush1.msra.mxu0 0.0
        %2395 = vmatprep.subr.mxu0 0.0
        %2396 = vmatpush1.msra.mxu0 0.0
        %2397 = vmatprep.subr.mxu0 0.0
        %2398 = vmatpush1.msra.mxu0 0.0
        %2399 = vmatprep.subr.mxu0 0.0
        %2400 = vmatpush1.msra.mxu0 0.0
        %2401 = vmatprep.subr.mxu0 0.0
        %2402 = vmatpush1.msra.mxu0 0.0
        %2403 = vmatprep.subr.mxu0 0.0
        %2404 = vmatpush1.msra.mxu0 0.0
        %2405 = vmatprep.subr.mxu0 0.0
        %2406 = vmatpush1.msra.mxu0 0.0
        %2407 = vmatprep.subr.mxu0 0.0
        %2408 = vmatpush1.msra.mxu0 0.0
        %2409 = vmatprep.subr.mxu0 0.0
        %2410 = vmatpush1.msra.mxu0 0.0
        %2411 = vmatprep.subr.mxu0 0.0
        %2412 = vmatpush1.msra.mxu0 0.0
        %2413 = vmatprep.subr.mxu0 0.0
        %2414 = vmatpush1.msra.mxu0 0.0
        %2415 = vmatprep.subr.mxu0 0.0
        %2416 = vmatpush1.msra.mxu0 0.0
        %2417 = vmatprep.subr.mxu0 0.0
        %2418 = vmatpush1.msra.mxu0 0.0
        %2419 = vmatprep.subr.mxu0 0.0
        %2420 = vmatpush1.msra.mxu0 0.0
        %2421 = vmatprep.subr.mxu0 0.0
        %2422 = vmatpush1.msra.mxu0 0.0
        %2423 = vmatprep.subr.mxu0 0.0
        %2424 = vmatpush1.msra.mxu0 0.0
        %2425 = vmatprep.subr.mxu0 0.0
        %2426 = vmatpush1.msra.mxu0 0.0
        %2427 = vmatprep.subr.mxu0 0.0
        %2428 = vmatpush1.msra.mxu0 0.0
        %2429 = vmatprep.subr.mxu0 0.0
        %2430 = vmatpush1.msra.mxu0 0.0
        %2431 = vmatprep.subr.mxu0 0.0
        %2432 = vmatpush1.msra.mxu0 0.0
        %2433 = vmatprep.subr.mxu0 0.0
        %2434 = vmatpush1.msra.mxu0 0.0
        %2435 = vmatprep.subr.mxu0 0.0
        %2436 = vmatpush1.msra.mxu0 0.0
        %2437 = vmatprep.subr.mxu0 0.0
        %2438 = vmatpush1.msra.mxu0 0.0
        %2439 = vmatprep.subr.mxu0 0.0
        %2440 = vmatpush1.msra.mxu0 0.0
        %2441 = vmatprep.subr.mxu0 0.0
        %2442 = vmatpush1.msra.mxu0 0.0
        %2443 = vmatprep.subr.mxu0 0.0
        %2444 = vmatpush1.msra.mxu0 0.0
        %2445 = vmatprep.mubr.f32.mxu0 0.0
        %2446 = vmatmul.mubr.f32.gmra.mrb[0].mxu0 %v2370
        %v2447 = vpop.f32.mrb[0].mxu0
        %v2448 = vadd.f32 0.0, %v2447
        %v2449 = vpop.f32.mrb[0].mxu0
        %v2450 = vadd.f32 0.0, %v2449
        %2451 = vmatprep.mubr.f32.mxu0 0.0
        %2452 = vmatmul.mubr.f32.gmra.mrb[0].mxu0 %v2373
        %v2453 = vpop.f32.mrb[0].mxu0
        %v2454 = vadd.f32 0.0, %v2453
        %v2455 = vpop.f32.mrb[0].mxu0
        %v2456 = vadd.f32 0.0, %v2455
        %2457 = vmatprep.mubr.f32.mxu0 0.0
        %2458 = vmatmul.mubr.f32.gmra.mrb[0].mxu0 %v2376
        %v2459 = vpop.f32.mrb[0].mxu0
        %v2460 = vadd.f32 0.0, %v2459
        %v2461 = vpop.f32.mrb[0].mxu0
        %v2462 = vadd.f32 0.0, %v2461
        %2463 = vmatprep.mubr.f32.mxu0 0.0
        %2464 = vmatmul.mubr.f32.gmra.mrb[0].mxu0 %v2379
        %v2465 = vpop.f32.mrb[0].mxu0
        %v2466 = vadd.f32 0.0, %v2465
        %v2467 = vpop.f32.mrb[0].mxu0
        %v2468 = vadd.f32 0.0, %v2467
        %2469 = vdwg.mxu0
        %v2470 = vadd.f32 %v2348, %v2448
        %v2471 = vadd.f32 %v2349, %v2450
        %v2472 = vadd.f32 %v2350, %v2454
        %v2473 = vadd.f32 %v2351, %v2456
        %v2474 = vadd.f32 %v2352, %v2460
        %v2475 = vadd.f32 %v2353, %v2462
        %v2476 = vadd.f32 %v2354, %v2466
        %v2477 = vadd.f32 %v2355, %v2468
        %v2478 = vld [vmem:[#allocation7] sm:$0x3]
        %v2480 = vlaneseq
        %v2481 = vshrl.u32 %v2480, 7
        %v2482 = vsub.s32 0, %v2481
        %v2483 = vrot.slane %v2478, %v2482
        %v2484 = vlaneseq
        %v2485 = vshrl.u32 %v2484, 7
        %v2486 = vsub.s32 1, %v2485
        %v2487 = vrot.slane %v2478, %v2486
        %v2490 = vadd.f32 %v2470, %v2483
        %v2491 = vadd.f32 %v2471, %v2487
        %v2492 = vadd.f32 %v2472, %v2483
        %v2493 = vadd.f32 %v2473, %v2487
        %v2494 = vadd.f32 %v2474, %v2483
        %v2495 = vadd.f32 %v2475, %v2487
        %v2496 = vadd.f32 %v2476, %v2483
        %v2497 = vadd.f32 %v2477, %v2487
        %v2498 = vmax.f32 %v2490, 0.0
        %v2499 = vmax.f32 %v2491, 0.0
        %v2500 = vmax.f32 %v2492, 0.0
        %v2501 = vmax.f32 %v2493, 0.0
        %v2502 = vmax.f32 %v2494, 0.0
        %v2503 = vmax.f32 %v2495, 0.0
        %v2504 = vmax.f32 %v2496, 0.0
        %v2505 = vmax.f32 %v2497, 0.0
        %v2506 = vmax.f32 %v2498, %v2499
        %v2507 = vmax.f32 %v2500, %v2501
        %v2508 = vmax.f32 %v2502, %v2503
        %v2509 = vmax.f32 %v2504, %v2505
        %v2510 = vld [vmem:[%s3] sm:$0xff]
        %v2511 = vld [vmem:[%s3 + $0x8] sm:$0x3f]
        %vm2512 = vcmask 228352
        %v2514 = vsel %vm2512, %v2510, 0
        %v2517 = vsel %vm2512, %v2511, 0
        %vm2519 = vcmask 1043456
        %v2521 = vsel %vm2519, %v2509, 0
        %2523 = vmatprep.subr.mxu0 0.0
        %2524 = vmatpush1.msra.mxu0 %v2506
        %2525 = vmatprep.subr.mxu0 0.0
        %2526 = vmatpush1.msra.mxu0 %v2507
        %2527 = vmatprep.subr.mxu0 0.0
        %2528 = vmatpush1.msra.mxu0 %v2508
        %2529 = vmatprep.subr.mxu0 0.0
        %2530 = vmatpush1.msra.mxu0 %v2521
        %2531 = vmatprep.subr.mxu0 0.0
        %2532 = vmatpush1.msra.mxu0 0.0
        %2533 = vmatprep.subr.mxu0 0.0
        %2534 = vmatpush1.msra.mxu0 0.0
        %2535 = vmatprep.subr.mxu0 0.0
        %2536 = vmatpush1.msra.mxu0 0.0
        %2537 = vmatprep.subr.mxu0 0.0
        %2538 = vmatpush1.msra.mxu0 0.0
        %2539 = vmatprep.subr.mxu0 0.0
        %2540 = vmatpush1.msra.mxu0 0.0
        %2541 = vmatprep.subr.mxu0 0.0
        %2542 = vmatpush1.msra.mxu0 0.0
        %2543 = vmatprep.subr.mxu0 0.0
        %2544 = vmatpush1.msra.mxu0 0.0
        %2545 = vmatprep.subr.mxu0 0.0
        %2546 = vmatpush1.msra.mxu0 0.0
        %2547 = vmatprep.subr.mxu0 0.0
        %2548 = vmatpush1.msra.mxu0 0.0
        %2549 = vmatprep.subr.mxu0 0.0
        %2550 = vmatpush1.msra.mxu0 0.0
        %2551 = vmatprep.subr.mxu0 0.0
        %2552 = vmatpush1.msra.mxu0 0.0
        %2553 = vmatprep.subr.mxu0 0.0
        %2554 = vmatpush1.msra.mxu0 0.0
        %2555 = vmatprep.subr.mxu0 0.0
        %2556 = vmatpush1.msra.mxu0 0.0
        %2557 = vmatprep.subr.mxu0 0.0
        %2558 = vmatpush1.msra.mxu0 0.0
        %2559 = vmatprep.subr.mxu0 0.0
        %2560 = vmatpush1.msra.mxu0 0.0
        %2561 = vmatprep.subr.mxu0 0.0
        %2562 = vmatpush1.msra.mxu0 0.0
        %2563 = vmatprep.subr.mxu0 0.0
        %2564 = vmatpush1.msra.mxu0 0.0
        %2565 = vmatprep.subr.mxu0 0.0
        %2566 = vmatpush1.msra.mxu0 0.0
        %2567 = vmatprep.subr.mxu0 0.0
        %2568 = vmatpush1.msra.mxu0 0.0
        %2569 = vmatprep.subr.mxu0 0.0
        %2570 = vmatpush1.msra.mxu0 0.0
        %2571 = vmatprep.subr.mxu0 0.0
        %2572 = vmatpush1.msra.mxu0 0.0
        %2573 = vmatprep.subr.mxu0 0.0
        %2574 = vmatpush1.msra.mxu0 0.0
        %2575 = vmatprep.subr.mxu0 0.0
        %2576 = vmatpush1.msra.mxu0 0.0
        %2577 = vmatprep.subr.mxu0 0.0
        %2578 = vmatpush1.msra.mxu0 0.0
        %2579 = vmatprep.subr.mxu0 0.0
        %2580 = vmatpush1.msra.mxu0 0.0
        %2581 = vmatprep.subr.mxu0 0.0
        %2582 = vmatpush1.msra.mxu0 0.0
        %2583 = vmatprep.subr.mxu0 0.0
        %2584 = vmatpush1.msra.mxu0 0.0
        %2585 = vmatprep.subr.mxu0 0.0
        %2586 = vmatpush1.msra.mxu0 0.0
        %2587 = vmatprep.mubr.f32.mxu0 0.0
        %2588 = vmatmul.mubr.f32.gmra.mrb[0].mxu0 %v2514
        %v2589 = vpop.f32.mrb[0].mxu0
        %v2590 = vadd.f32 0.0, %v2589
        %v2591 = vpop.f32.mrb[0].mxu0
        %2592 = vmatprep.mubr.f32.mxu0 0.0
        %2593 = vmatmul.mubr.f32.gmra.mrb[0].mxu0 %v2517
        %v2594 = vpop.f32.mrb[0].mxu0
        %v2595 = vadd.f32 0.0, %v2594
        %v2596 = vpop.f32.mrb[0].mxu0
        %2597 = vdwg.mxu0
        %v2598 = vld [vmem:[#allocation8] sm:$0xff]
        %v2599 = vld [vmem:[#allocation8 + $0x8] sm:$0x3f]
        %v2601 = vsel %vm2512, %v2598, 0
        %v2604 = vsel %vm2512, %v2599, 0
        %2606 = vmatprep.subr.mxu0 0.0
        %2607 = vmatpush1.msra.mxu0 %v2506
        %2608 = vmatprep.subr.mxu0 0.0
        %2609 = vmatpush1.msra.mxu0 %v2507
        %2610 = vmatprep.subr.mxu0 0.0
        %2611 = vmatpush1.msra.mxu0 %v2508
        %2612 = vmatprep.subr.mxu0 0.0
        %2613 = vmatpush1.msra.mxu0 %v2521
        %2614 = vmatprep.subr.mxu0 0.0
        %2615 = vmatpush1.msra.mxu0 0.0
        %2616 = vmatprep.subr.mxu0 0.0
        %2617 = vmatpush1.msra.mxu0 0.0
        %2618 = vmatprep.subr.mxu0 0.0
        %2619 = vmatpush1.msra.mxu0 0.0
        %2620 = vmatprep.subr.mxu0 0.0
        %2621 = vmatpush1.msra.mxu0 0.0
        %2622 = vmatprep.subr.mxu0 0.0
        %2623 = vmatpush1.msra.mxu0 0.0
        %2624 = vmatprep.subr.mxu0 0.0
        %2625 = vmatpush1.msra.mxu0 0.0
        %2626 = vmatprep.subr.mxu0 0.0
        %2627 = vmatpush1.msra.mxu0 0.0
        %2628 = vmatprep.subr.mxu0 0.0
        %2629 = vmatpush1.msra.mxu0 0.0
        %2630 = vmatprep.subr.mxu0 0.0
        %2631 = vmatpush1.msra.mxu0 0.0
        %2632 = vmatprep.subr.mxu0 0.0
        %2633 = vmatpush1.msra.mxu0 0.0
        %2634 = vmatprep.subr.mxu0 0.0
        %2635 = vmatpush1.msra.mxu0 0.0
        %2636 = vmatprep.subr.mxu0 0.0
        %2637 = vmatpush1.msra.mxu0 0.0
        %2638 = vmatprep.subr.mxu0 0.0
        %2639 = vmatpush1.msra.mxu0 0.0
        %2640 = vmatprep.subr.mxu0 0.0
        %2641 = vmatpush1.msra.mxu0 0.0
        %2642 = vmatprep.subr.mxu0 0.0
        %2643 = vmatpush1.msra.mxu0 0.0
        %2644 = vmatprep.subr.mxu0 0.0
        %2645 = vmatpush1.msra.mxu0 0.0
        %2646 = vmatprep.subr.mxu0 0.0
        %2647 = vmatpush1.msra.mxu0 0.0
        %2648 = vmatprep.subr.mxu0 0.0
        %2649 = vmatpush1.msra.mxu0 0.0
        %2650 = vmatprep.subr.mxu0 0.0
        %2651 = vmatpush1.msra.mxu0 0.0
        %2652 = vmatprep.subr.mxu0 0.0
        %2653 = vmatpush1.msra.mxu0 0.0
        %2654 = vmatprep.subr.mxu0 0.0
        %2655 = vmatpush1.msra.mxu0 0.0
        %2656 = vmatprep.subr.mxu0 0.0
        %2657 = vmatpush1.msra.mxu0 0.0
        %2658 = vmatprep.subr.mxu0 0.0
        %2659 = vmatpush1.msra.mxu0 0.0
        %2660 = vmatprep.subr.mxu0 0.0
        %2661 = vmatpush1.msra.mxu0 0.0
        %2662 = vmatprep.subr.mxu0 0.0
        %2663 = vmatpush1.msra.mxu0 0.0
        %2664 = vmatprep.subr.mxu0 0.0
        %2665 = vmatpush1.msra.mxu0 0.0
        %2666 = vmatprep.subr.mxu0 0.0
        %2667 = vmatpush1.msra.mxu0 0.0
        %2668 = vmatprep.subr.mxu0 0.0
        %2669 = vmatpush1.msra.mxu0 0.0
        %2670 = vmatprep.mubr.f32.mxu0 0.0
        %2671 = vmatmul.mubr.f32.gmra.mrb[0].mxu0 %v2601
        %v2672 = vpop.f32.mrb[0].mxu0
        %v2673 = vadd.f32 0.0, %v2672
        %v2674 = vpop.f32.mrb[0].mxu0
        %2675 = vmatprep.mubr.f32.mxu0 0.0
        %2676 = vmatmul.mubr.f32.gmra.mrb[0].mxu0 %v2604
        %v2677 = vpop.f32.mrb[0].mxu0
        %v2678 = vadd.f32 0.0, %v2677
        %v2679 = vpop.f32.mrb[0].mxu0
        %2680 = vdwg.mxu0
        %v2681 = vmax.f32 %v2590, %v2673
        %v2682 = vmax.f32 %v2595, %v2678
        %v2683 = vld [vmem:[#allocation10] sm:$0xff]
        %v2684 = vld [vmem:[#allocation10 + $0x8] sm:$0xff]
        %v2685 = vld [vmem:[#allocation10 + $0x10] sm:$0xff]
        %v2686 = vld [vmem:[#allocation10 + $0x18] sm:$0xff]
        %v2687 = vld [vmem:[#allocation10 + $0x20] sm:$0xff]
        %v2688 = vld [vmem:[#allocation10 + $0x28] sm:$0xff]
        %v2689 = vld [vmem:[#allocation10 + $0x30] sm:$0xff]
        %v2690 = vld [vmem:[#allocation10 + $0x38] sm:$0xff]
        %v2691 = vld [vmem:[#allocation10 + $0x40] sm:$0xff]
        %v2692 = vld [vmem:[#allocation10 + $0x48] sm:$0xff]
        %v2693 = vld [vmem:[#allocation10 + $0x50] sm:$0xff]
        %v2694 = vld [vmem:[#allocation10 + $0x58] sm:$0xff]
        %v2695 = vld [vmem:[#allocation10 + $0x60] sm:$0xff]
        %v2696 = vld [vmem:[#allocation10 + $0x68] sm:$0xff]
        %v2697 = vld [vmem:[#allocation10 + $0x70] sm:$0xff]
        %v2698 = vld [vmem:[#allocation10 + $0x78] sm:$0xff]
        %v2699 = vld [vmem:[#allocation10 + $0x80] sm:$0xff]
        %v2700 = vld [vmem:[#allocation10 + $0x88] sm:$0xff]
        %v2701 = vld [vmem:[#allocation10 + $0x90] sm:$0xff]
        %v2702 = vld [vmem:[#allocation10 + $0x98] sm:$0xff]
        %v2703 = vld [vmem:[#allocation10 + $0xa0] sm:$0xff]
        %v2704 = vld [vmem:[#allocation10 + $0xa8] sm:$0xff]
        %v2705 = vld [vmem:[#allocation10 + $0xb0] sm:$0xff]
        %v2706 = vld [vmem:[#allocation10 + $0xb8] sm:$0xff]
        %v2707 = vld [vmem:[#allocation10 + $0xc0] sm:$0xff]
        %v2708 = vld [vmem:[#allocation10 + $0xc8] sm:$0xff]
        %v2709 = vld [vmem:[#allocation10 + $0xd0] sm:$0xff]
        %v2710 = vld [vmem:[#allocation10 + $0xd8] sm:$0xff]
        %v2711 = vld [vmem:[#allocation10 + $0xe0] sm:$0xff]
        %v2712 = vld [vmem:[#allocation10 + $0xe8] sm:$0xff]
        %v2713 = vld [vmem:[#allocation10 + $0xf0] sm:$0xff]
        %v2714 = vld [vmem:[#allocation10 + $0xf8] sm:$0xff]
        %s2715 = scalar_lea.vmem [#allocation10], 256
        %v2716 = vld [vmem:[%s2715] sm:$0xff]
        %v2717 = vld [vmem:[%s2715 + $0x8] sm:$0xff]
        %v2718 = vld [vmem:[%s2715 + $0x10] sm:$0xff]
        %v2719 = vld [vmem:[%s2715 + $0x18] sm:$0xff]
        %v2720 = vld [vmem:[%s2715 + $0x20] sm:$0xff]
        %v2721 = vld [vmem:[%s2715 + $0x28] sm:$0xff]
        %v2722 = vld [vmem:[%s2715 + $0x30] sm:$0xff]
        %v2723 = vld [vmem:[%s2715 + $0x38] sm:$0xff]
        %v2724 = vld [vmem:[%s2715 + $0x40] sm:$0xff]
        %v2725 = vld [vmem:[%s2715 + $0x48] sm:$0xff]
        %v2726 = vld [vmem:[%s2715 + $0x50] sm:$0xff]
        %v2727 = vld [vmem:[%s2715 + $0x58] sm:$0xff]
        %v2728 = vld [vmem:[%s2715 + $0x60] sm:$0xff]
        %v2729 = vld [vmem:[%s2715 + $0x68] sm:$0xff]
        %v2730 = vld [vmem:[%s2715 + $0x70] sm:$0xff]
        %v2731 = vld [vmem:[%s2715 + $0x78] sm:$0xff]
        %v2732 = vld [vmem:[%s2715 + $0x80] sm:$0xff]
        %v2733 = vld [vmem:[%s2715 + $0x88] sm:$0xff]
        %v2734 = vld [vmem:[%s2715 + $0x90] sm:$0xff]
        %v2735 = vld [vmem:[%s2715 + $0x98] sm:$0xff]
        %v2736 = vld [vmem:[%s2715 + $0xa0] sm:$0xff]
        %v2737 = vld [vmem:[%s2715 + $0xa8] sm:$0xff]
        %v2738 = vld [vmem:[%s2715 + $0xb0] sm:$0xff]
        %v2739 = vld [vmem:[%s2715 + $0xb8] sm:$0xff]
        %v2740 = vld [vmem:[%s2715 + $0xc0] sm:$0xff]
        %v2741 = vld [vmem:[%s2715 + $0xc8] sm:$0xff]
        %v2742 = vld [vmem:[%s2715 + $0xd0] sm:$0xff]
        %v2743 = vld [vmem:[%s2715 + $0xd8] sm:$0xff]
        %v2744 = vld [vmem:[%s2715 + $0xe0] sm:$0xff]
        %v2745 = vld [vmem:[%s2715 + $0xe8] sm:$0xff]
        %v2746 = vld [vmem:[%s2715 + $0xf0] sm:$0xff]
        %v2747 = vld [vmem:[%s2715 + $0xf8] sm:$0xff]
        %vm2750 = vcmask 1046528
        %v2751 = vrot.slane %v2681, 1
        %v2752 = vrot.slane %v2682, 1
        %v2753 = vsel %vm2750, %v2751, %v2752
        %2756 = vmatprep.subr.mxu0 %v2717
        %2757 = vmatpush1.msra.mxu0 %v2716
        %2758 = vmatprep.subr.mxu0 %v2719
        %2759 = vmatpush1.msra.mxu0 %v2718
        %2760 = vmatprep.subr.mxu0 %v2721
        %2761 = vmatpush1.msra.mxu0 %v2720
        %2762 = vmatprep.subr.mxu0 %v2723
        %2763 = vmatpush1.msra.mxu0 %v2722
        %2764 = vmatprep.subr.mxu0 %v2725
        %2765 = vmatpush1.msra.mxu0 %v2724
        %2766 = vmatprep.subr.mxu0 %v2727
        %2767 = vmatpush1.msra.mxu0 %v2726
        %2768 = vmatprep.subr.mxu0 %v2729
        %2769 = vmatpush1.msra.mxu0 %v2728
        %2770 = vmatprep.subr.mxu0 %v2731
        %2771 = vmatpush1.msra.mxu0 %v2730
        %2772 = vmatprep.subr.mxu0 %v2733
        %2773 = vmatpush1.msra.mxu0 %v2732
        %2774 = vmatprep.subr.mxu0 %v2735
        %2775 = vmatpush1.msra.mxu0 %v2734
        %2776 = vmatprep.subr.mxu0 %v2737
        %2777 = vmatpush1.msra.mxu0 %v2736
        %2778 = vmatprep.subr.mxu0 %v2739
        %2779 = vmatpush1.msra.mxu0 %v2738
        %2780 = vmatprep.subr.mxu0 %v2741
        %2781 = vmatpush1.msra.mxu0 %v2740
        %2782 = vmatprep.subr.mxu0 %v2743
        %2783 = vmatpush1.msra.mxu0 %v2742
        %2784 = vmatprep.subr.mxu0 %v2745
        %2785 = vmatpush1.msra.mxu0 %v2744
        %2786 = vmatprep.subr.mxu0 %v2747
        %2787 = vmatpush1.msra.mxu0 %v2746
        %2788 = vmatprep.subr.mxu0 0.0
        %2789 = vmatpush1.msra.mxu0 0.0
        %2790 = vmatprep.subr.mxu0 0.0
        %2791 = vmatpush1.msra.mxu0 0.0
        %2792 = vmatprep.subr.mxu0 0.0
        %2793 = vmatpush1.msra.mxu0 0.0
        %2794 = vmatprep.subr.mxu0 0.0
        %2795 = vmatpush1.msra.mxu0 0.0
        %2796 = vmatprep.subr.mxu0 0.0
        %2797 = vmatpush1.msra.mxu0 0.0
        %2798 = vmatprep.subr.mxu0 0.0
        %2799 = vmatpush1.msra.mxu0 0.0
        %2800 = vmatprep.subr.mxu0 0.0
        %2801 = vmatpush1.msra.mxu0 0.0
        %2802 = vmatprep.subr.mxu0 0.0
        %2803 = vmatpush1.msra.mxu0 0.0
        %2804 = vmatprep.subr.mxu0 0.0
        %2805 = vmatpush1.msra.mxu0 0.0
        %2806 = vmatprep.subr.mxu0 0.0
        %2807 = vmatpush1.msra.mxu0 0.0
        %2808 = vmatprep.subr.mxu0 0.0
        %2809 = vmatpush1.msra.mxu0 0.0
        %2810 = vmatprep.subr.mxu0 0.0
        %2811 = vmatpush1.msra.mxu0 0.0
        %2812 = vmatprep.subr.mxu0 0.0
        %2813 = vmatpush1.msra.mxu0 0.0
        %2814 = vmatprep.subr.mxu0 0.0
        %2815 = vmatpush1.msra.mxu0 0.0
        %2816 = vmatprep.subr.mxu0 0.0
        %2817 = vmatpush1.msra.mxu0 0.0
        %2818 = vmatprep.subr.mxu0 0.0
        %2819 = vmatpush1.msra.mxu0 0.0
        %2820 = vmatprep.mubr.f32.mxu0 0.0
        %2821 = vmatmul.mubr.f32.gmra.mrb[0].mxu0 %v2753
        %v2822 = vpop.f32.mrb[0].mxu0
        %v2823 = vadd.f32 0.0, %v2822
        %v2824 = vpop.f32.mrb[0].mxu0
        %v2825 = vadd.f32 0.0, %v2824
        %2826 = vmatprep.mubr.f32.mxu0 0.0
        %2827 = vmatmul.mubr.f32.gmra.mrb[0].mxu0 %v2752
        %v2828 = vpop.f32.mrb[0].mxu0
        %v2829 = vadd.f32 0.0, %v2828
        %v2830 = vpop.f32.mrb[0].mxu0
        %v2831 = vadd.f32 0.0, %v2830
        %2832 = vdwg.mxu0
        %2833 = vmatprep.subr.mxu0 %v2684
        %2834 = vmatpush1.msra.mxu0 %v2683
        %2835 = vmatprep.subr.mxu0 %v2686
        %2836 = vmatpush1.msra.mxu0 %v2685
        %2837 = vmatprep.subr.mxu0 %v2688
        %2838 = vmatpush1.msra.mxu0 %v2687
        %2839 = vmatprep.subr.mxu0 %v2690
        %2840 = vmatpush1.msra.mxu0 %v2689
        %2841 = vmatprep.subr.mxu0 %v2692
        %2842 = vmatpush1.msra.mxu0 %v2691
        %2843 = vmatprep.subr.mxu0 %v2694
        %2844 = vmatpush1.msra.mxu0 %v2693
        %2845 = vmatprep.subr.mxu0 %v2696
        %2846 = vmatpush1.msra.mxu0 %v2695
        %2847 = vmatprep.subr.mxu0 %v2698
        %2848 = vmatpush1.msra.mxu0 %v2697
        %2849 = vmatprep.subr.mxu0 %v2700
        %2850 = vmatpush1.msra.mxu0 %v2699
        %2851 = vmatprep.subr.mxu0 %v2702
        %2852 = vmatpush1.msra.mxu0 %v2701
        %2853 = vmatprep.subr.mxu0 %v2704
        %2854 = vmatpush1.msra.mxu0 %v2703
        %2855 = vmatprep.subr.mxu0 %v2706
        %2856 = vmatpush1.msra.mxu0 %v2705
        %2857 = vmatprep.subr.mxu0 %v2708
        %2858 = vmatpush1.msra.mxu0 %v2707
        %2859 = vmatprep.subr.mxu0 %v2710
        %2860 = vmatpush1.msra.mxu0 %v2709
        %2861 = vmatprep.subr.mxu0 %v2712
        %2862 = vmatpush1.msra.mxu0 %v2711
        %2863 = vmatprep.subr.mxu0 %v2714
        %2864 = vmatpush1.msra.mxu0 %v2713
        %2865 = vmatprep.subr.mxu0 0.0
        %2866 = vmatpush1.msra.mxu0 0.0
        %2867 = vmatprep.subr.mxu0 0.0
        %2868 = vmatpush1.msra.mxu0 0.0
        %2869 = vmatprep.subr.mxu0 0.0
        %2870 = vmatpush1.msra.mxu0 0.0
        %2871 = vmatprep.subr.mxu0 0.0
        %2872 = vmatpush1.msra.mxu0 0.0
        %2873 = vmatprep.subr.mxu0 0.0
        %2874 = vmatpush1.msra.mxu0 0.0
        %2875 = vmatprep.subr.mxu0 0.0
        %2876 = vmatpush1.msra.mxu0 0.0
        %2877 = vmatprep.subr.mxu0 0.0
        %2878 = vmatpush1.msra.mxu0 0.0
        %2879 = vmatprep.subr.mxu0 0.0
        %2880 = vmatpush1.msra.mxu0 0.0
        %2881 = vmatprep.subr.mxu0 0.0
        %2882 = vmatpush1.msra.mxu0 0.0
        %2883 = vmatprep.subr.mxu0 0.0
        %2884 = vmatpush1.msra.mxu0 0.0
        %2885 = vmatprep.subr.mxu0 0.0
        %2886 = vmatpush1.msra.mxu0 0.0
        %2887 = vmatprep.subr.mxu0 0.0
        %2888 = vmatpush1.msra.mxu0 0.0
        %2889 = vmatprep.subr.mxu0 0.0
        %2890 = vmatpush1.msra.mxu0 0.0
        %2891 = vmatprep.subr.mxu0 0.0
        %2892 = vmatpush1.msra.mxu0 0.0
        %2893 = vmatprep.subr.mxu0 0.0
        %2894 = vmatpush1.msra.mxu0 0.0
        %2895 = vmatprep.subr.mxu0 0.0
        %2896 = vmatpush1.msra.mxu0 0.0
        %2897 = vmatprep.mubr.f32.mxu0 0.0
        %2898 = vmatmul.mubr.f32.gmra.mrb[0].mxu0 %v2681
        %v2899 = vpop.f32.mrb[0].mxu0
        %v2900 = vadd.f32 %v2823, %v2899
        %v2901 = vpop.f32.mrb[0].mxu0
        %v2902 = vadd.f32 %v2825, %v2901
        %2903 = vmatprep.mubr.f32.mxu0 0.0
        %2904 = vmatmul.mubr.f32.gmra.mrb[0].mxu0 %v2682
        %v2905 = vpop.f32.mrb[0].mxu0
        %v2906 = vadd.f32 %v2829, %v2905
        %v2907 = vpop.f32.mrb[0].mxu0
        %v2908 = vadd.f32 %v2831, %v2907
        %2909 = vdwg.mxu0
        %s2910 = scalar_lea.vmem [#allocation10], 512
        %v2911 = vld [vmem:[%s2910] sm:$0xff]
        %v2912 = vld [vmem:[%s2910 + $0x8] sm:$0xff]
        %v2913 = vld [vmem:[%s2910 + $0x10] sm:$0xff]
        %v2914 = vld [vmem:[%s2910 + $0x18] sm:$0xff]
        %v2915 = vld [vmem:[%s2910 + $0x20] sm:$0xff]
        %v2916 = vld [vmem:[%s2910 + $0x28] sm:$0xff]
        %v2917 = vld [vmem:[%s2910 + $0x30] sm:$0xff]
        %v2918 = vld [vmem:[%s2910 + $0x38] sm:$0xff]
        %v2919 = vld [vmem:[%s2910 + $0x40] sm:$0xff]
        %v2920 = vld [vmem:[%s2910 + $0x48] sm:$0xff]
        %v2921 = vld [vmem:[%s2910 + $0x50] sm:$0xff]
        %v2922 = vld [vmem:[%s2910 + $0x58] sm:$0xff]
        %v2923 = vld [vmem:[%s2910 + $0x60] sm:$0xff]
        %v2924 = vld [vmem:[%s2910 + $0x68] sm:$0xff]
        %v2925 = vld [vmem:[%s2910 + $0x70] sm:$0xff]
        %v2926 = vld [vmem:[%s2910 + $0x78] sm:$0xff]
        %v2927 = vld [vmem:[%s2910 + $0x80] sm:$0xff]
        %v2928 = vld [vmem:[%s2910 + $0x88] sm:$0xff]
        %v2929 = vld [vmem:[%s2910 + $0x90] sm:$0xff]
        %v2930 = vld [vmem:[%s2910 + $0x98] sm:$0xff]
        %v2931 = vld [vmem:[%s2910 + $0xa0] sm:$0xff]
        %v2932 = vld [vmem:[%s2910 + $0xa8] sm:$0xff]
        %v2933 = vld [vmem:[%s2910 + $0xb0] sm:$0xff]
        %v2934 = vld [vmem:[%s2910 + $0xb8] sm:$0xff]
        %v2935 = vld [vmem:[%s2910 + $0xc0] sm:$0xff]
        %v2936 = vld [vmem:[%s2910 + $0xc8] sm:$0xff]
        %v2937 = vld [vmem:[%s2910 + $0xd0] sm:$0xff]
        %v2938 = vld [vmem:[%s2910 + $0xd8] sm:$0xff]
        %v2939 = vld [vmem:[%s2910 + $0xe0] sm:$0xff]
        %v2940 = vld [vmem:[%s2910 + $0xe8] sm:$0xff]
        %v2941 = vld [vmem:[%s2910 + $0xf0] sm:$0xff]
        %v2942 = vld [vmem:[%s2910 + $0xf8] sm:$0xff]
        %vm2943 = vcmask 1045504
        %v2944 = vrot.slane %v2681, 2
        %v2945 = vrot.slane %v2682, 2
        %v2946 = vsel %vm2943, %v2944, %v2945
        %2949 = vmatprep.subr.mxu0 %v2912
        %2950 = vmatpush1.msra.mxu0 %v2911
        %2951 = vmatprep.subr.mxu0 %v2914
        %2952 = vmatpush1.msra.mxu0 %v2913
        %2953 = vmatprep.subr.mxu0 %v2916
        %2954 = vmatpush1.msra.mxu0 %v2915
        %2955 = vmatprep.subr.mxu0 %v2918
        %2956 = vmatpush1.msra.mxu0 %v2917
        %2957 = vmatprep.subr.mxu0 %v2920
        %2958 = vmatpush1.msra.mxu0 %v2919
        %2959 = vmatprep.subr.mxu0 %v2922
        %2960 = vmatpush1.msra.mxu0 %v2921
        %2961 = vmatprep.subr.mxu0 %v2924
        %2962 = vmatpush1.msra.mxu0 %v2923
        %2963 = vmatprep.subr.mxu0 %v2926
        %2964 = vmatpush1.msra.mxu0 %v2925
        %2965 = vmatprep.subr.mxu0 %v2928
        %2966 = vmatpush1.msra.mxu0 %v2927
        %2967 = vmatprep.subr.mxu0 %v2930
        %2968 = vmatpush1.msra.mxu0 %v2929
        %2969 = vmatprep.subr.mxu0 %v2932
        %2970 = vmatpush1.msra.mxu0 %v2931
        %2971 = vmatprep.subr.mxu0 %v2934
        %2972 = vmatpush1.msra.mxu0 %v2933
        %2973 = vmatprep.subr.mxu0 %v2936
        %2974 = vmatpush1.msra.mxu0 %v2935
        %2975 = vmatprep.subr.mxu0 %v2938
        %2976 = vmatpush1.msra.mxu0 %v2937
        %2977 = vmatprep.subr.mxu0 %v2940
        %2978 = vmatpush1.msra.mxu0 %v2939
        %2979 = vmatprep.subr.mxu0 %v2942
        %2980 = vmatpush1.msra.mxu0 %v2941
        %2981 = vmatprep.subr.mxu0 0.0
        %2982 = vmatpush1.msra.mxu0 0.0
        %2983 = vmatprep.subr.mxu0 0.0
        %2984 = vmatpush1.msra.mxu0 0.0
        %2985 = vmatprep.subr.mxu0 0.0
        %2986 = vmatpush1.msra.mxu0 0.0
        %2987 = vmatprep.subr.mxu0 0.0
        %2988 = vmatpush1.msra.mxu0 0.0
        %2989 = vmatprep.subr.mxu0 0.0
        %2990 = vmatpush1.msra.mxu0 0.0
        %2991 = vmatprep.subr.mxu0 0.0
        %2992 = vmatpush1.msra.mxu0 0.0
        %2993 = vmatprep.subr.mxu0 0.0
        %2994 = vmatpush1.msra.mxu0 0.0
        %2995 = vmatprep.subr.mxu0 0.0
        %2996 = vmatpush1.msra.mxu0 0.0
        %2997 = vmatprep.subr.mxu0 0.0
        %2998 = vmatpush1.msra.mxu0 0.0
        %2999 = vmatprep.subr.mxu0 0.0
        %3000 = vmatpush1.msra.mxu0 0.0
        %3001 = vmatprep.subr.mxu0 0.0
        %3002 = vmatpush1.msra.mxu0 0.0
        %3003 = vmatprep.subr.mxu0 0.0
        %3004 = vmatpush1.msra.mxu0 0.0
        %3005 = vmatprep.subr.mxu0 0.0
        %3006 = vmatpush1.msra.mxu0 0.0
        %3007 = vmatprep.subr.mxu0 0.0
        %3008 = vmatpush1.msra.mxu0 0.0
        %3009 = vmatprep.subr.mxu0 0.0
        %3010 = vmatpush1.msra.mxu0 0.0
        %3011 = vmatprep.subr.mxu0 0.0
        %3012 = vmatpush1.msra.mxu0 0.0
        %3013 = vmatprep.mubr.f32.mxu0 0.0
        %3014 = vmatmul.mubr.f32.gmra.mrb[0].mxu0 %v2946
        %v3015 = vpop.f32.mrb[0].mxu0
        %v3016 = vadd.f32 0.0, %v3015
        %v3017 = vpop.f32.mrb[0].mxu0
        %v3018 = vadd.f32 0.0, %v3017
        %3019 = vmatprep.mubr.f32.mxu0 0.0
        %3020 = vmatmul.mubr.f32.gmra.mrb[0].mxu0 %v2945
        %v3021 = vpop.f32.mrb[0].mxu0
        %v3022 = vadd.f32 0.0, %v3021
        %v3023 = vpop.f32.mrb[0].mxu0
        %v3024 = vadd.f32 0.0, %v3023
        %3025 = vdwg.mxu0
        %v3026 = vadd.f32 %v2900, %v3016
        %v3027 = vadd.f32 %v2902, %v3018
        %v3028 = vadd.f32 %v2906, %v3022
        %v3029 = vadd.f32 %v2908, %v3024
        %s3030 = scalar_lea.vmem [#allocation10], 768
        %v3031 = vld [vmem:[%s3030] sm:$0xff]
        %v3032 = vld [vmem:[%s3030 + $0x8] sm:$0xff]
        %v3033 = vld [vmem:[%s3030 + $0x10] sm:$0xff]
        %v3034 = vld [vmem:[%s3030 + $0x18] sm:$0xff]
        %v3035 = vld [vmem:[%s3030 + $0x20] sm:$0xff]
        %v3036 = vld [vmem:[%s3030 + $0x28] sm:$0xff]
        %v3037 = vld [vmem:[%s3030 + $0x30] sm:$0xff]
        %v3038 = vld [vmem:[%s3030 + $0x38] sm:$0xff]
        %v3039 = vld [vmem:[%s3030 + $0x40] sm:$0xff]
        %v3040 = vld [vmem:[%s3030 + $0x48] sm:$0xff]
        %v3041 = vld [vmem:[%s3030 + $0x50] sm:$0xff]
        %v3042 = vld [vmem:[%s3030 + $0x58] sm:$0xff]
        %v3043 = vld [vmem:[%s3030 + $0x60] sm:$0xff]
        %v3044 = vld [vmem:[%s3030 + $0x68] sm:$0xff]
        %v3045 = vld [vmem:[%s3030 + $0x70] sm:$0xff]
        %v3046 = vld [vmem:[%s3030 + $0x78] sm:$0xff]
        %v3047 = vld [vmem:[%s3030 + $0x80] sm:$0xff]
        %v3048 = vld [vmem:[%s3030 + $0x88] sm:$0xff]
        %v3049 = vld [vmem:[%s3030 + $0x90] sm:$0xff]
        %v3050 = vld [vmem:[%s3030 + $0x98] sm:$0xff]
        %v3051 = vld [vmem:[%s3030 + $0xa0] sm:$0xff]
        %v3052 = vld [vmem:[%s3030 + $0xa8] sm:$0xff]
        %v3053 = vld [vmem:[%s3030 + $0xb0] sm:$0xff]
        %v3054 = vld [vmem:[%s3030 + $0xb8] sm:$0xff]
        %v3055 = vld [vmem:[%s3030 + $0xc0] sm:$0xff]
        %v3056 = vld [vmem:[%s3030 + $0xc8] sm:$0xff]
        %v3057 = vld [vmem:[%s3030 + $0xd0] sm:$0xff]
        %v3058 = vld [vmem:[%s3030 + $0xd8] sm:$0xff]
        %v3059 = vld [vmem:[%s3030 + $0xe0] sm:$0xff]
        %v3060 = vld [vmem:[%s3030 + $0xe8] sm:$0xff]
        %v3061 = vld [vmem:[%s3030 + $0xf0] sm:$0xff]
        %v3062 = vld [vmem:[%s3030 + $0xf8] sm:$0xff]
        %vm3063 = vcmask 1044480
        %v3064 = vrot.slane %v2681, 3
        %v3065 = vrot.slane %v2682, 3
        %v3066 = vsel %vm3063, %v3064, %v3065
        %3069 = vmatprep.subr.mxu0 %v3032
        %3070 = vmatpush1.msra.mxu0 %v3031
        %3071 = vmatprep.subr.mxu0 %v3034
        %3072 = vmatpush1.msra.mxu0 %v3033
        %3073 = vmatprep.subr.mxu0 %v3036
        %3074 = vmatpush1.msra.mxu0 %v3035
        %3075 = vmatprep.subr.mxu0 %v3038
        %3076 = vmatpush1.msra.mxu0 %v3037
        %3077 = vmatprep.subr.mxu0 %v3040
        %3078 = vmatpush1.msra.mxu0 %v3039
        %3079 = vmatprep.subr.mxu0 %v3042
        %3080 = vmatpush1.msra.mxu0 %v3041
        %3081 = vmatprep.subr.mxu0 %v3044
        %3082 = vmatpush1.msra.mxu0 %v3043
        %3083 = vmatprep.subr.mxu0 %v3046
        %3084 = vmatpush1.msra.mxu0 %v3045
        %3085 = vmatprep.subr.mxu0 %v3048
        %3086 = vmatpush1.msra.mxu0 %v3047
        %3087 = vmatprep.subr.mxu0 %v3050
        %3088 = vmatpush1.msra.mxu0 %v3049
        %3089 = vmatprep.subr.mxu0 %v3052
        %3090 = vmatpush1.msra.mxu0 %v3051
        %3091 = vmatprep.subr.mxu0 %v3054
        %3092 = vmatpush1.msra.mxu0 %v3053
        %3093 = vmatprep.subr.mxu0 %v3056
        %3094 = vmatpush1.msra.mxu0 %v3055
        %3095 = vmatprep.subr.mxu0 %v3058
        %3096 = vmatpush1.msra.mxu0 %v3057
        %3097 = vmatprep.subr.mxu0 %v3060
        %3098 = vmatpush1.msra.mxu0 %v3059
        %3099 = vmatprep.subr.mxu0 %v3062
        %3100 = vmatpush1.msra.mxu0 %v3061
        %3101 = vmatprep.subr.mxu0 0.0
        %3102 = vmatpush1.msra.mxu0 0.0
        %3103 = vmatprep.subr.mxu0 0.0
        %3104 = vmatpush1.msra.mxu0 0.0
        %3105 = vmatprep.subr.mxu0 0.0
        %3106 = vmatpush1.msra.mxu0 0.0
        %3107 = vmatprep.subr.mxu0 0.0
        %3108 = vmatpush1.msra.mxu0 0.0
        %3109 = vmatprep.subr.mxu0 0.0
        %3110 = vmatpush1.msra.mxu0 0.0
        %3111 = vmatprep.subr.mxu0 0.0
        %3112 = vmatpush1.msra.mxu0 0.0
        %3113 = vmatprep.subr.mxu0 0.0
        %3114 = vmatpush1.msra.mxu0 0.0
        %3115 = vmatprep.subr.mxu0 0.0
        %3116 = vmatpush1.msra.mxu0 0.0
        %3117 = vmatprep.subr.mxu0 0.0
        %3118 = vmatpush1.msra.mxu0 0.0
        %3119 = vmatprep.subr.mxu0 0.0
        %3120 = vmatpush1.msra.mxu0 0.0
        %3121 = vmatprep.subr.mxu0 0.0
        %3122 = vmatpush1.msra.mxu0 0.0
        %3123 = vmatprep.subr.mxu0 0.0
        %3124 = vmatpush1.msra.mxu0 0.0
        %3125 = vmatprep.subr.mxu0 0.0
        %3126 = vmatpush1.msra.mxu0 0.0
        %3127 = vmatprep.subr.mxu0 0.0
        %3128 = vmatpush1.msra.mxu0 0.0
        %3129 = vmatprep.subr.mxu0 0.0
        %3130 = vmatpush1.msra.mxu0 0.0
        %3131 = vmatprep.subr.mxu0 0.0
        %3132 = vmatpush1.msra.mxu0 0.0
        %3133 = vmatprep.mubr.f32.mxu0 0.0
        %3134 = vmatmul.mubr.f32.gmra.mrb[0].mxu0 %v3066
        %v3135 = vpop.f32.mrb[0].mxu0
        %v3136 = vadd.f32 0.0, %v3135
        %v3137 = vpop.f32.mrb[0].mxu0
        %v3138 = vadd.f32 0.0, %v3137
        %3139 = vmatprep.mubr.f32.mxu0 0.0
        %3140 = vmatmul.mubr.f32.gmra.mrb[0].mxu0 %v3065
        %v3141 = vpop.f32.mrb[0].mxu0
        %v3142 = vadd.f32 0.0, %v3141
        %v3143 = vpop.f32.mrb[0].mxu0
        %v3144 = vadd.f32 0.0, %v3143
        %3145 = vdwg.mxu0
        %v3146 = vadd.f32 %v3026, %v3136
        %v3147 = vadd.f32 %v3027, %v3138
        %v3148 = vadd.f32 %v3028, %v3142
        %v3149 = vadd.f32 %v3029, %v3144
        %s3150 = scalar_lea.vmem [#allocation10], 1024
        %v3151 = vld [vmem:[%s3150] sm:$0xff]
        %v3152 = vld [vmem:[%s3150 + $0x8] sm:$0xff]
        %v3153 = vld [vmem:[%s3150 + $0x10] sm:$0xff]
        %v3154 = vld [vmem:[%s3150 + $0x18] sm:$0xff]
        %v3155 = vld [vmem:[%s3150 + $0x20] sm:$0xff]
        %v3156 = vld [vmem:[%s3150 + $0x28] sm:$0xff]
        %v3157 = vld [vmem:[%s3150 + $0x30] sm:$0xff]
        %v3158 = vld [vmem:[%s3150 + $0x38] sm:$0xff]
        %v3159 = vld [vmem:[%s3150 + $0x40] sm:$0xff]
        %v3160 = vld [vmem:[%s3150 + $0x48] sm:$0xff]
        %v3161 = vld [vmem:[%s3150 + $0x50] sm:$0xff]
        %v3162 = vld [vmem:[%s3150 + $0x58] sm:$0xff]
        %v3163 = vld [vmem:[%s3150 + $0x60] sm:$0xff]
        %v3164 = vld [vmem:[%s3150 + $0x68] sm:$0xff]
        %v3165 = vld [vmem:[%s3150 + $0x70] sm:$0xff]
        %v3166 = vld [vmem:[%s3150 + $0x78] sm:$0xff]
        %v3167 = vld [vmem:[%s3150 + $0x80] sm:$0xff]
        %v3168 = vld [vmem:[%s3150 + $0x88] sm:$0xff]
        %v3169 = vld [vmem:[%s3150 + $0x90] sm:$0xff]
        %v3170 = vld [vmem:[%s3150 + $0x98] sm:$0xff]
        %v3171 = vld [vmem:[%s3150 + $0xa0] sm:$0xff]
        %v3172 = vld [vmem:[%s3150 + $0xa8] sm:$0xff]
        %v3173 = vld [vmem:[%s3150 + $0xb0] sm:$0xff]
        %v3174 = vld [vmem:[%s3150 + $0xb8] sm:$0xff]
        %v3175 = vld [vmem:[%s3150 + $0xc0] sm:$0xff]
        %v3176 = vld [vmem:[%s3150 + $0xc8] sm:$0xff]
        %v3177 = vld [vmem:[%s3150 + $0xd0] sm:$0xff]
        %v3178 = vld [vmem:[%s3150 + $0xd8] sm:$0xff]
        %v3179 = vld [vmem:[%s3150 + $0xe0] sm:$0xff]
        %v3180 = vld [vmem:[%s3150 + $0xe8] sm:$0xff]
        %v3181 = vld [vmem:[%s3150 + $0xf0] sm:$0xff]
        %v3182 = vld [vmem:[%s3150 + $0xf8] sm:$0xff]
        %v3183 = vrot.slane %v2681, 4
        %v3184 = vrot.slane %v2682, 4
        %v3185 = vsel %vm2519, %v3183, %v3184
        %3188 = vmatprep.subr.mxu0 %v3152
        %3189 = vmatpush1.msra.mxu0 %v3151
        %3190 = vmatprep.subr.mxu0 %v3154
        %3191 = vmatpush1.msra.mxu0 %v3153
        %3192 = vmatprep.subr.mxu0 %v3156
        %3193 = vmatpush1.msra.mxu0 %v3155
        %3194 = vmatprep.subr.mxu0 %v3158
        %3195 = vmatpush1.msra.mxu0 %v3157
        %3196 = vmatprep.subr.mxu0 %v3160
        %3197 = vmatpush1.msra.mxu0 %v3159
        %3198 = vmatprep.subr.mxu0 %v3162
        %3199 = vmatpush1.msra.mxu0 %v3161
        %3200 = vmatprep.subr.mxu0 %v3164
        %3201 = vmatpush1.msra.mxu0 %v3163
        %3202 = vmatprep.subr.mxu0 %v3166
        %3203 = vmatpush1.msra.mxu0 %v3165
        %3204 = vmatprep.subr.mxu0 %v3168
        %3205 = vmatpush1.msra.mxu0 %v3167
        %3206 = vmatprep.subr.mxu0 %v3170
        %3207 = vmatpush1.msra.mxu0 %v3169
        %3208 = vmatprep.subr.mxu0 %v3172
        %3209 = vmatpush1.msra.mxu0 %v3171
        %3210 = vmatprep.subr.mxu0 %v3174
        %3211 = vmatpush1.msra.mxu0 %v3173
        %3212 = vmatprep.subr.mxu0 %v3176
        %3213 = vmatpush1.msra.mxu0 %v3175
        %3214 = vmatprep.subr.mxu0 %v3178
        %3215 = vmatpush1.msra.mxu0 %v3177
        %3216 = vmatprep.subr.mxu0 %v3180
        %3217 = vmatpush1.msra.mxu0 %v3179
        %3218 = vmatprep.subr.mxu0 %v3182
        %3219 = vmatpush1.msra.mxu0 %v3181
        %3220 = vmatprep.subr.mxu0 0.0
        %3221 = vmatpush1.msra.mxu0 0.0
        %3222 = vmatprep.subr.mxu0 0.0
        %3223 = vmatpush1.msra.mxu0 0.0
        %3224 = vmatprep.subr.mxu0 0.0
        %3225 = vmatpush1.msra.mxu0 0.0
        %3226 = vmatprep.subr.mxu0 0.0
        %3227 = vmatpush1.msra.mxu0 0.0
        %3228 = vmatprep.subr.mxu0 0.0
        %3229 = vmatpush1.msra.mxu0 0.0
        %3230 = vmatprep.subr.mxu0 0.0
        %3231 = vmatpush1.msra.mxu0 0.0
        %3232 = vmatprep.subr.mxu0 0.0
        %3233 = vmatpush1.msra.mxu0 0.0
        %3234 = vmatprep.subr.mxu0 0.0
        %3235 = vmatpush1.msra.mxu0 0.0
        %3236 = vmatprep.subr.mxu0 0.0
        %3237 = vmatpush1.msra.mxu0 0.0
        %3238 = vmatprep.subr.mxu0 0.0
        %3239 = vmatpush1.msra.mxu0 0.0
        %3240 = vmatprep.subr.mxu0 0.0
        %3241 = vmatpush1.msra.mxu0 0.0
        %3242 = vmatprep.subr.mxu0 0.0
        %3243 = vmatpush1.msra.mxu0 0.0
        %3244 = vmatprep.subr.mxu0 0.0
        %3245 = vmatpush1.msra.mxu0 0.0
        %3246 = vmatprep.subr.mxu0 0.0
        %3247 = vmatpush1.msra.mxu0 0.0
        %3248 = vmatprep.subr.mxu0 0.0
        %3249 = vmatpush1.msra.mxu0 0.0
        %3250 = vmatprep.subr.mxu0 0.0
        %3251 = vmatpush1.msra.mxu0 0.0
        %3252 = vmatprep.mubr.f32.mxu0 0.0
        %3253 = vmatmul.mubr.f32.gmra.mrb[0].mxu0 %v3185
        %v3254 = vpop.f32.mrb[0].mxu0
        %v3255 = vadd.f32 0.0, %v3254
        %v3256 = vpop.f32.mrb[0].mxu0
        %v3257 = vadd.f32 0.0, %v3256
        %3258 = vmatprep.mubr.f32.mxu0 0.0
        %3259 = vmatmul.mubr.f32.gmra.mrb[0].mxu0 %v3184
        %v3260 = vpop.f32.mrb[0].mxu0
        %v3261 = vadd.f32 0.0, %v3260
        %v3262 = vpop.f32.mrb[0].mxu0
        %v3263 = vadd.f32 0.0, %v3262
        %3264 = vdwg.mxu0
        %v3265 = vadd.f32 %v3146, %v3255
        %v3266 = vadd.f32 %v3147, %v3257
        %v3267 = vadd.f32 %v3148, %v3261
        %v3268 = vadd.f32 %v3149, %v3263
        %v3269 = vld [vmem:[%s6] sm:$0x3]
        %v3271 = vlaneseq
        %v3272 = vshrl.u32 %v3271, 7
        %v3273 = vsub.s32 0, %v3272
        %v3274 = vrot.slane %v3269, %v3273
        %v3275 = vlaneseq
        %v3276 = vshrl.u32 %v3275, 7
        %v3277 = vsub.s32 1, %v3276
        %v3278 = vrot.slane %v3269, %v3277
        %v3281 = vadd.f32 %v3265, %v3274
        %v3282 = vadd.f32 %v3266, %v3278
        %v3283 = vadd.f32 %v3267, %v3274
        %v3284 = vadd.f32 %v3268, %v3278
        %v3285 = vmax.f32 %v3281, 0.0
        %v3286 = vmax.f32 %v3282, 0.0
        %v3287 = vmax.f32 %v3283, 0.0
        %v3288 = vmax.f32 %v3284, 0.0
        %v3289 = vmax.f32 %v3285, %v3286
        %v3290 = vmax.f32 %v3287, %v3288
        %v3291 = vld [vmem:[%s7] sm:$0x1f]
        %vm3292 = vcmask 80896
        %v3294 = vsel %vm3292, %v3291, 0
        %vm3296 = vcmask 1041408
        %v3298 = vsel %vm3296, %v3290, 0
        %3300 = vmatprep.subr.mxu0 0.0
        %3301 = vmatpush1.msra.mxu0 %v3289
        %3302 = vmatprep.subr.mxu0 0.0
        %3303 = vmatpush1.msra.mxu0 %v3298
        %3304 = vmatprep.subr.mxu0 0.0
        %3305 = vmatpush1.msra.mxu0 0.0
        %3306 = vmatprep.subr.mxu0 0.0
        %3307 = vmatpush1.msra.mxu0 0.0
        %3308 = vmatprep.subr.mxu0 0.0
        %3309 = vmatpush1.msra.mxu0 0.0
        %3310 = vmatprep.subr.mxu0 0.0
        %3311 = vmatpush1.msra.mxu0 0.0
        %3312 = vmatprep.subr.mxu0 0.0
        %3313 = vmatpush1.msra.mxu0 0.0
        %3314 = vmatprep.subr.mxu0 0.0
        %3315 = vmatpush1.msra.mxu0 0.0
        %3316 = vmatprep.subr.mxu0 0.0
        %3317 = vmatpush1.msra.mxu0 0.0
        %3318 = vmatprep.subr.mxu0 0.0
        %3319 = vmatpush1.msra.mxu0 0.0
        %3320 = vmatprep.subr.mxu0 0.0
        %3321 = vmatpush1.msra.mxu0 0.0
        %3322 = vmatprep.subr.mxu0 0.0
        %3323 = vmatpush1.msra.mxu0 0.0
        %3324 = vmatprep.subr.mxu0 0.0
        %3325 = vmatpush1.msra.mxu0 0.0
        %3326 = vmatprep.subr.mxu0 0.0
        %3327 = vmatpush1.msra.mxu0 0.0
        %3328 = vmatprep.subr.mxu0 0.0
        %3329 = vmatpush1.msra.mxu0 0.0
        %3330 = vmatprep.subr.mxu0 0.0
        %3331 = vmatpush1.msra.mxu0 0.0
        %3332 = vmatprep.subr.mxu0 0.0
        %3333 = vmatpush1.msra.mxu0 0.0
        %3334 = vmatprep.subr.mxu0 0.0
        %3335 = vmatpush1.msra.mxu0 0.0
        %3336 = vmatprep.subr.mxu0 0.0
        %3337 = vmatpush1.msra.mxu0 0.0
        %3338 = vmatprep.subr.mxu0 0.0
        %3339 = vmatpush1.msra.mxu0 0.0
        %3340 = vmatprep.subr.mxu0 0.0
        %3341 = vmatpush1.msra.mxu0 0.0
        %3342 = vmatprep.subr.mxu0 0.0
        %3343 = vmatpush1.msra.mxu0 0.0
        %3344 = vmatprep.subr.mxu0 0.0
        %3345 = vmatpush1.msra.mxu0 0.0
        %3346 = vmatprep.subr.mxu0 0.0
        %3347 = vmatpush1.msra.mxu0 0.0
        %3348 = vmatprep.subr.mxu0 0.0
        %3349 = vmatpush1.msra.mxu0 0.0
        %3350 = vmatprep.subr.mxu0 0.0
        %3351 = vmatpush1.msra.mxu0 0.0
        %3352 = vmatprep.subr.mxu0 0.0
        %3353 = vmatpush1.msra.mxu0 0.0
        %3354 = vmatprep.subr.mxu0 0.0
        %3355 = vmatpush1.msra.mxu0 0.0
        %3356 = vmatprep.subr.mxu0 0.0
        %3357 = vmatpush1.msra.mxu0 0.0
        %3358 = vmatprep.subr.mxu0 0.0
        %3359 = vmatpush1.msra.mxu0 0.0
        %3360 = vmatprep.subr.mxu0 0.0
        %3361 = vmatpush1.msra.mxu0 0.0
        %3362 = vmatprep.subr.mxu0 0.0
        %3363 = vmatpush1.msra.mxu0 0.0
        %3364 = vmatprep.mubr.f32.mxu0 0.0
        %3365 = vmatmul.mubr.f32.gmra.mrb[0].mxu0 %v3294
        %v3366 = vpop.f32.mrb[0].mxu0
        %v3367 = vadd.f32 0.0, %v3366
        %v3368 = vpop.f32.mrb[0].mxu0
        %3369 = vdwg.mxu0
        %v3370 = vld [vmem:[#allocation11] sm:$0x1f]
        %v3372 = vsel %vm3292, %v3370, 0
        %3374 = vmatprep.subr.mxu0 0.0
        %3375 = vmatpush1.msra.mxu0 %v3289
        %3376 = vmatprep.subr.mxu0 0.0
        %3377 = vmatpush1.msra.mxu0 %v3298
        %3378 = vmatprep.subr.mxu0 0.0
        %3379 = vmatpush1.msra.mxu0 0.0
        %3380 = vmatprep.subr.mxu0 0.0
        %3381 = vmatpush1.msra.mxu0 0.0
        %3382 = vmatprep.subr.mxu0 0.0
        %3383 = vmatpush1.msra.mxu0 0.0
        %3384 = vmatprep.subr.mxu0 0.0
        %3385 = vmatpush1.msra.mxu0 0.0
        %3386 = vmatprep.subr.mxu0 0.0
        %3387 = vmatpush1.msra.mxu0 0.0
        %3388 = vmatprep.subr.mxu0 0.0
        %3389 = vmatpush1.msra.mxu0 0.0
        %3390 = vmatprep.subr.mxu0 0.0
        %3391 = vmatpush1.msra.mxu0 0.0
        %3392 = vmatprep.subr.mxu0 0.0
        %3393 = vmatpush1.msra.mxu0 0.0
        %3394 = vmatprep.subr.mxu0 0.0
        %3395 = vmatpush1.msra.mxu0 0.0
        %3396 = vmatprep.subr.mxu0 0.0
        %3397 = vmatpush1.msra.mxu0 0.0
        %3398 = vmatprep.subr.mxu0 0.0
        %3399 = vmatpush1.msra.mxu0 0.0
        %3400 = vmatprep.subr.mxu0 0.0
        %3401 = vmatpush1.msra.mxu0 0.0
        %3402 = vmatprep.subr.mxu0 0.0
        %3403 = vmatpush1.msra.mxu0 0.0
        %3404 = vmatprep.subr.mxu0 0.0
        %3405 = vmatpush1.msra.mxu0 0.0
        %3406 = vmatprep.subr.mxu0 0.0
        %3407 = vmatpush1.msra.mxu0 0.0
        %3408 = vmatprep.subr.mxu0 0.0
        %3409 = vmatpush1.msra.mxu0 0.0
        %3410 = vmatprep.subr.mxu0 0.0
        %3411 = vmatpush1.msra.mxu0 0.0
        %3412 = vmatprep.subr.mxu0 0.0
        %3413 = vmatpush1.msra.mxu0 0.0
        %3414 = vmatprep.subr.mxu0 0.0
        %3415 = vmatpush1.msra.mxu0 0.0
        %3416 = vmatprep.subr.mxu0 0.0
        %3417 = vmatpush1.msra.mxu0 0.0
        %3418 = vmatprep.subr.mxu0 0.0
        %3419 = vmatpush1.msra.mxu0 0.0
        %3420 = vmatprep.subr.mxu0 0.0
        %3421 = vmatpush1.msra.mxu0 0.0
        %3422 = vmatprep.subr.mxu0 0.0
        %3423 = vmatpush1.msra.mxu0 0.0
        %3424 = vmatprep.subr.mxu0 0.0
        %3425 = vmatpush1.msra.mxu0 0.0
        %3426 = vmatprep.subr.mxu0 0.0
        %3427 = vmatpush1.msra.mxu0 0.0
        %3428 = vmatprep.subr.mxu0 0.0
        %3429 = vmatpush1.msra.mxu0 0.0
        %3430 = vmatprep.subr.mxu0 0.0
        %3431 = vmatpush1.msra.mxu0 0.0
        %3432 = vmatprep.subr.mxu0 0.0
        %3433 = vmatpush1.msra.mxu0 0.0
        %3434 = vmatprep.subr.mxu0 0.0
        %3435 = vmatpush1.msra.mxu0 0.0
        %3436 = vmatprep.subr.mxu0 0.0
        %3437 = vmatpush1.msra.mxu0 0.0
        %3438 = vmatprep.mubr.f32.mxu0 0.0
        %3439 = vmatmul.mubr.f32.gmra.mrb[0].mxu0 %v3372
        %v3440 = vpop.f32.mrb[0].mxu0
        %v3441 = vadd.f32 0.0, %v3440
        %v3442 = vpop.f32.mrb[0].mxu0
        %3443 = vdwg.mxu0
        %v3444 = vmax.f32 %v3367, %v3441
        %v3445 = vld [vmem:[#allocation13] sm:$0xff]
        %v3446 = vld [vmem:[#allocation13 + $0x8] sm:$0xff]
        %v3447 = vld [vmem:[#allocation13 + $0x10] sm:$0xff]
        %v3448 = vld [vmem:[#allocation13 + $0x18] sm:$0xff]
        %v3449 = vld [vmem:[#allocation13 + $0x20] sm:$0xff]
        %v3450 = vld [vmem:[#allocation13 + $0x28] sm:$0xff]
        %v3451 = vld [vmem:[#allocation13 + $0x30] sm:$0xff]
        %v3452 = vld [vmem:[#allocation13 + $0x38] sm:$0xff]
        %v3453 = vld [vmem:[#allocation13 + $0x40] sm:$0xff]
        %v3454 = vld [vmem:[#allocation13 + $0x48] sm:$0xff]
        %v3455 = vld [vmem:[#allocation13 + $0x50] sm:$0xff]
        %v3456 = vld [vmem:[#allocation13 + $0x58] sm:$0xff]
        %v3457 = vld [vmem:[#allocation13 + $0x60] sm:$0xff]
        %v3458 = vld [vmem:[#allocation13 + $0x68] sm:$0xff]
        %v3459 = vld [vmem:[#allocation13 + $0x70] sm:$0xff]
        %v3460 = vld [vmem:[#allocation13 + $0x78] sm:$0xff]
        %s3461 = scalar_lea.vmem [#allocation13], 128
        %v3462 = vld [vmem:[%s3461] sm:$0xff]
        %v3463 = vld [vmem:[%s3461 + $0x8] sm:$0xff]
        %v3464 = vld [vmem:[%s3461 + $0x10] sm:$0xff]
        %v3465 = vld [vmem:[%s3461 + $0x18] sm:$0xff]
        %v3466 = vld [vmem:[%s3461 + $0x20] sm:$0xff]
        %v3467 = vld [vmem:[%s3461 + $0x28] sm:$0xff]
        %v3468 = vld [vmem:[%s3461 + $0x30] sm:$0xff]
        %v3469 = vld [vmem:[%s3461 + $0x38] sm:$0xff]
        %v3470 = vld [vmem:[%s3461 + $0x40] sm:$0xff]
        %v3471 = vld [vmem:[%s3461 + $0x48] sm:$0xff]
        %v3472 = vld [vmem:[%s3461 + $0x50] sm:$0xff]
        %v3473 = vld [vmem:[%s3461 + $0x58] sm:$0xff]
        %v3474 = vld [vmem:[%s3461 + $0x60] sm:$0xff]
        %v3475 = vld [vmem:[%s3461 + $0x68] sm:$0xff]
        %v3476 = vld [vmem:[%s3461 + $0x70] sm:$0xff]
        %v3477 = vld [vmem:[%s3461 + $0x78] sm:$0xff]
        %v3479 = vrot.slane %v3444, 1
        %3481 = vmatprep.subr.mxu0 0.0
        %3482 = vmatpush1.msra.mxu0 %v3462
        %3483 = vmatprep.subr.mxu0 0.0
        %3484 = vmatpush1.msra.mxu0 %v3463
        %3485 = vmatprep.subr.mxu0 0.0
        %3486 = vmatpush1.msra.mxu0 %v3464
        %3487 = vmatprep.subr.mxu0 0.0
        %3488 = vmatpush1.msra.mxu0 %v3465
        %3489 = vmatprep.subr.mxu0 0.0
        %3490 = vmatpush1.msra.mxu0 %v3466
        %3491 = vmatprep.subr.mxu0 0.0
        %3492 = vmatpush1.msra.mxu0 %v3467
        %3493 = vmatprep.subr.mxu0 0.0
        %3494 = vmatpush1.msra.mxu0 %v3468
        %3495 = vmatprep.subr.mxu0 0.0
        %3496 = vmatpush1.msra.mxu0 %v3469
        %3497 = vmatprep.subr.mxu0 0.0
        %3498 = vmatpush1.msra.mxu0 %v3470
        %3499 = vmatprep.subr.mxu0 0.0
        %3500 = vmatpush1.msra.mxu0 %v3471
        %3501 = vmatprep.subr.mxu0 0.0
        %3502 = vmatpush1.msra.mxu0 %v3472
        %3503 = vmatprep.subr.mxu0 0.0
        %3504 = vmatpush1.msra.mxu0 %v3473
        %3505 = vmatprep.subr.mxu0 0.0
        %3506 = vmatpush1.msra.mxu0 %v3474
        %3507 = vmatprep.subr.mxu0 0.0
        %3508 = vmatpush1.msra.mxu0 %v3475
        %3509 = vmatprep.subr.mxu0 0.0
        %3510 = vmatpush1.msra.mxu0 %v3476
        %3511 = vmatprep.subr.mxu0 0.0
        %3512 = vmatpush1.msra.mxu0 %v3477
        %3513 = vmatprep.subr.mxu0 0.0
        %3514 = vmatpush1.msra.mxu0 0.0
        %3515 = vmatprep.subr.mxu0 0.0
        %3516 = vmatpush1.msra.mxu0 0.0
        %3517 = vmatprep.subr.mxu0 0.0
        %3518 = vmatpush1.msra.mxu0 0.0
        %3519 = vmatprep.subr.mxu0 0.0
        %3520 = vmatpush1.msra.mxu0 0.0
        %3521 = vmatprep.subr.mxu0 0.0
        %3522 = vmatpush1.msra.mxu0 0.0
        %3523 = vmatprep.subr.mxu0 0.0
        %3524 = vmatpush1.msra.mxu0 0.0
        %3525 = vmatprep.subr.mxu0 0.0
        %3526 = vmatpush1.msra.mxu0 0.0
        %3527 = vmatprep.subr.mxu0 0.0
        %3528 = vmatpush1.msra.mxu0 0.0
        %3529 = vmatprep.subr.mxu0 0.0
        %3530 = vmatpush1.msra.mxu0 0.0
        %3531 = vmatprep.subr.mxu0 0.0
        %3532 = vmatpush1.msra.mxu0 0.0
        %3533 = vmatprep.subr.mxu0 0.0
        %3534 = vmatpush1.msra.mxu0 0.0
        %3535 = vmatprep.subr.mxu0 0.0
        %3536 = vmatpush1.msra.mxu0 0.0
        %3537 = vmatprep.subr.mxu0 0.0
        %3538 = vmatpush1.msra.mxu0 0.0
        %3539 = vmatprep.subr.mxu0 0.0
        %3540 = vmatpush1.msra.mxu0 0.0
        %3541 = vmatprep.subr.mxu0 0.0
        %3542 = vmatpush1.msra.mxu0 0.0
        %3543 = vmatprep.subr.mxu0 0.0
        %3544 = vmatpush1.msra.mxu0 0.0
        %3545 = vmatprep.mubr.f32.mxu0 0.0
        %3546 = vmatmul.mubr.f32.gmra.mrb[0].mxu0 %v3479
        %v3547 = vpop.f32.mrb[0].mxu0
        %v3548 = vadd.f32 0.0, %v3547
        %v3549 = vpop.f32.mrb[0].mxu0
        %3550 = vdwg.mxu0
        %3551 = vmatprep.subr.mxu0 0.0
        %3552 = vmatpush1.msra.mxu0 %v3445
        %3553 = vmatprep.subr.mxu0 0.0
        %3554 = vmatpush1.msra.mxu0 %v3446
        %3555 = vmatprep.subr.mxu0 0.0
        %3556 = vmatpush1.msra.mxu0 %v3447
        %3557 = vmatprep.subr.mxu0 0.0
        %3558 = vmatpush1.msra.mxu0 %v3448
        %3559 = vmatprep.subr.mxu0 0.0
        %3560 = vmatpush1.msra.mxu0 %v3449
        %3561 = vmatprep.subr.mxu0 0.0
        %3562 = vmatpush1.msra.mxu0 %v3450
        %3563 = vmatprep.subr.mxu0 0.0
        %3564 = vmatpush1.msra.mxu0 %v3451
        %3565 = vmatprep.subr.mxu0 0.0
        %3566 = vmatpush1.msra.mxu0 %v3452
        %3567 = vmatprep.subr.mxu0 0.0
        %3568 = vmatpush1.msra.mxu0 %v3453
        %3569 = vmatprep.subr.mxu0 0.0
        %3570 = vmatpush1.msra.mxu0 %v3454
        %3571 = vmatprep.subr.mxu0 0.0
        %3572 = vmatpush1.msra.mxu0 %v3455
        %3573 = vmatprep.subr.mxu0 0.0
        %3574 = vmatpush1.msra.mxu0 %v3456
        %3575 = vmatprep.subr.mxu0 0.0
        %3576 = vmatpush1.msra.mxu0 %v3457
        %3577 = vmatprep.subr.mxu0 0.0
        %3578 = vmatpush1.msra.mxu0 %v3458
        %3579 = vmatprep.subr.mxu0 0.0
        %3580 = vmatpush1.msra.mxu0 %v3459
        %3581 = vmatprep.subr.mxu0 0.0
        %3582 = vmatpush1.msra.mxu0 %v3460
        %3583 = vmatprep.subr.mxu0 0.0
        %3584 = vmatpush1.msra.mxu0 0.0
        %3585 = vmatprep.subr.mxu0 0.0
        %3586 = vmatpush1.msra.mxu0 0.0
        %3587 = vmatprep.subr.mxu0 0.0
        %3588 = vmatpush1.msra.mxu0 0.0
        %3589 = vmatprep.subr.mxu0 0.0
        %3590 = vmatpush1.msra.mxu0 0.0
        %3591 = vmatprep.subr.mxu0 0.0
        %3592 = vmatpush1.msra.mxu0 0.0
        %3593 = vmatprep.subr.mxu0 0.0
        %3594 = vmatpush1.msra.mxu0 0.0
        %3595 = vmatprep.subr.mxu0 0.0
        %3596 = vmatpush1.msra.mxu0 0.0
        %3597 = vmatprep.subr.mxu0 0.0
        %3598 = vmatpush1.msra.mxu0 0.0
        %3599 = vmatprep.subr.mxu0 0.0
        %3600 = vmatpush1.msra.mxu0 0.0
        %3601 = vmatprep.subr.mxu0 0.0
        %3602 = vmatpush1.msra.mxu0 0.0
        %3603 = vmatprep.subr.mxu0 0.0
        %3604 = vmatpush1.msra.mxu0 0.0
        %3605 = vmatprep.subr.mxu0 0.0
        %3606 = vmatpush1.msra.mxu0 0.0
        %3607 = vmatprep.subr.mxu0 0.0
        %3608 = vmatpush1.msra.mxu0 0.0
        %3609 = vmatprep.subr.mxu0 0.0
        %3610 = vmatpush1.msra.mxu0 0.0
        %3611 = vmatprep.subr.mxu0 0.0
        %3612 = vmatpush1.msra.mxu0 0.0
        %3613 = vmatprep.subr.mxu0 0.0
        %3614 = vmatpush1.msra.mxu0 0.0
        %3615 = vmatprep.mubr.f32.mxu0 0.0
        %3616 = vmatmul.mubr.f32.gmra.mrb[0].mxu0 %v3444
        %v3617 = vpop.f32.mrb[0].mxu0
        %v3618 = vadd.f32 %v3548, %v3617
        %v3619 = vpop.f32.mrb[0].mxu0
        %3620 = vdwg.mxu0
        %s3621 = scalar_lea.vmem [#allocation13], 256
        %v3622 = vld [vmem:[%s3621] sm:$0xff]
        %v3623 = vld [vmem:[%s3621 + $0x8] sm:$0xff]
        %v3624 = vld [vmem:[%s3621 + $0x10] sm:$0xff]
        %v3625 = vld [vmem:[%s3621 + $0x18] sm:$0xff]
        %v3626 = vld [vmem:[%s3621 + $0x20] sm:$0xff]
        %v3627 = vld [vmem:[%s3621 + $0x28] sm:$0xff]
        %v3628 = vld [vmem:[%s3621 + $0x30] sm:$0xff]
        %v3629 = vld [vmem:[%s3621 + $0x38] sm:$0xff]
        %v3630 = vld [vmem:[%s3621 + $0x40] sm:$0xff]
        %v3631 = vld [vmem:[%s3621 + $0x48] sm:$0xff]
        %v3632 = vld [vmem:[%s3621 + $0x50] sm:$0xff]
        %v3633 = vld [vmem:[%s3621 + $0x58] sm:$0xff]
        %v3634 = vld [vmem:[%s3621 + $0x60] sm:$0xff]
        %v3635 = vld [vmem:[%s3621 + $0x68] sm:$0xff]
        %v3636 = vld [vmem:[%s3621 + $0x70] sm:$0xff]
        %v3637 = vld [vmem:[%s3621 + $0x78] sm:$0xff]
        %v3638 = vrot.slane %v3444, 2
        %3640 = vmatprep.subr.mxu0 0.0
        %3641 = vmatpush1.msra.mxu0 %v3622
        %3642 = vmatprep.subr.mxu0 0.0
        %3643 = vmatpush1.msra.mxu0 %v3623
        %3644 = vmatprep.subr.mxu0 0.0
        %3645 = vmatpush1.msra.mxu0 %v3624
        %3646 = vmatprep.subr.mxu0 0.0
        %3647 = vmatpush1.msra.mxu0 %v3625
        %3648 = vmatprep.subr.mxu0 0.0
        %3649 = vmatpush1.msra.mxu0 %v3626
        %3650 = vmatprep.subr.mxu0 0.0
        %3651 = vmatpush1.msra.mxu0 %v3627
        %3652 = vmatprep.subr.mxu0 0.0
        %3653 = vmatpush1.msra.mxu0 %v3628
        %3654 = vmatprep.subr.mxu0 0.0
        %3655 = vmatpush1.msra.mxu0 %v3629
        %3656 = vmatprep.subr.mxu0 0.0
        %3657 = vmatpush1.msra.mxu0 %v3630
        %3658 = vmatprep.subr.mxu0 0.0
        %3659 = vmatpush1.msra.mxu0 %v3631
        %3660 = vmatprep.subr.mxu0 0.0
        %3661 = vmatpush1.msra.mxu0 %v3632
        %3662 = vmatprep.subr.mxu0 0.0
        %3663 = vmatpush1.msra.mxu0 %v3633
        %3664 = vmatprep.subr.mxu0 0.0
        %3665 = vmatpush1.msra.mxu0 %v3634
        %3666 = vmatprep.subr.mxu0 0.0
        %3667 = vmatpush1.msra.mxu0 %v3635
        %3668 = vmatprep.subr.mxu0 0.0
        %3669 = vmatpush1.msra.mxu0 %v3636
        %3670 = vmatprep.subr.mxu0 0.0
        %3671 = vmatpush1.msra.mxu0 %v3637
        %3672 = vmatprep.subr.mxu0 0.0
        %3673 = vmatpush1.msra.mxu0 0.0
        %3674 = vmatprep.subr.mxu0 0.0
        %3675 = vmatpush1.msra.mxu0 0.0
        %3676 = vmatprep.subr.mxu0 0.0
        %3677 = vmatpush1.msra.mxu0 0.0
        %3678 = vmatprep.subr.mxu0 0.0
        %3679 = vmatpush1.msra.mxu0 0.0
        %3680 = vmatprep.subr.mxu0 0.0
        %3681 = vmatpush1.msra.mxu0 0.0
        %3682 = vmatprep.subr.mxu0 0.0
        %3683 = vmatpush1.msra.mxu0 0.0
        %3684 = vmatprep.subr.mxu0 0.0
        %3685 = vmatpush1.msra.mxu0 0.0
        %3686 = vmatprep.subr.mxu0 0.0
        %3687 = vmatpush1.msra.mxu0 0.0
        %3688 = vmatprep.subr.mxu0 0.0
        %3689 = vmatpush1.msra.mxu0 0.0
        %3690 = vmatprep.subr.mxu0 0.0
        %3691 = vmatpush1.msra.mxu0 0.0
        %3692 = vmatprep.subr.mxu0 0.0
        %3693 = vmatpush1.msra.mxu0 0.0
        %3694 = vmatprep.subr.mxu0 0.0
        %3695 = vmatpush1.msra.mxu0 0.0
        %3696 = vmatprep.subr.mxu0 0.0
        %3697 = vmatpush1.msra.mxu0 0.0
        %3698 = vmatprep.subr.mxu0 0.0
        %3699 = vmatpush1.msra.mxu0 0.0
        %3700 = vmatprep.subr.mxu0 0.0
        %3701 = vmatpush1.msra.mxu0 0.0
        %3702 = vmatprep.subr.mxu0 0.0
        %3703 = vmatpush1.msra.mxu0 0.0
        %3704 = vmatprep.mubr.f32.mxu0 0.0
        %3705 = vmatmul.mubr.f32.gmra.mrb[0].mxu0 %v3638
        %v3706 = vpop.f32.mrb[0].mxu0
        %v3707 = vadd.f32 0.0, %v3706
        %v3708 = vpop.f32.mrb[0].mxu0
        %3709 = vdwg.mxu0
        %v3710 = vadd.f32 %v3618, %v3707
        %s3711 = scalar_lea.vmem [#allocation13], 384
        %v3712 = vld [vmem:[%s3711] sm:$0xff]
        %v3713 = vld [vmem:[%s3711 + $0x8] sm:$0xff]
        %v3714 = vld [vmem:[%s3711 + $0x10] sm:$0xff]
        %v3715 = vld [vmem:[%s3711 + $0x18] sm:$0xff]
        %v3716 = vld [vmem:[%s3711 + $0x20] sm:$0xff]
        %v3717 = vld [vmem:[%s3711 + $0x28] sm:$0xff]
        %v3718 = vld [vmem:[%s3711 + $0x30] sm:$0xff]
        %v3719 = vld [vmem:[%s3711 + $0x38] sm:$0xff]
        %v3720 = vld [vmem:[%s3711 + $0x40] sm:$0xff]
        %v3721 = vld [vmem:[%s3711 + $0x48] sm:$0xff]
        %v3722 = vld [vmem:[%s3711 + $0x50] sm:$0xff]
        %v3723 = vld [vmem:[%s3711 + $0x58] sm:$0xff]
        %v3724 = vld [vmem:[%s3711 + $0x60] sm:$0xff]
        %v3725 = vld [vmem:[%s3711 + $0x68] sm:$0xff]
        %v3726 = vld [vmem:[%s3711 + $0x70] sm:$0xff]
        %v3727 = vld [vmem:[%s3711 + $0x78] sm:$0xff]
        %v3728 = vrot.slane %v3444, 3
        %3730 = vmatprep.subr.mxu0 0.0
        %3731 = vmatpush1.msra.mxu0 %v3712
        %3732 = vmatprep.subr.mxu0 0.0
        %3733 = vmatpush1.msra.mxu0 %v3713
        %3734 = vmatprep.subr.mxu0 0.0
        %3735 = vmatpush1.msra.mxu0 %v3714
        %3736 = vmatprep.subr.mxu0 0.0
        %3737 = vmatpush1.msra.mxu0 %v3715
        %3738 = vmatprep.subr.mxu0 0.0
        %3739 = vmatpush1.msra.mxu0 %v3716
        %3740 = vmatprep.subr.mxu0 0.0
        %3741 = vmatpush1.msra.mxu0 %v3717
        %3742 = vmatprep.subr.mxu0 0.0
        %3743 = vmatpush1.msra.mxu0 %v3718
        %3744 = vmatprep.subr.mxu0 0.0
        %3745 = vmatpush1.msra.mxu0 %v3719
        %3746 = vmatprep.subr.mxu0 0.0
        %3747 = vmatpush1.msra.mxu0 %v3720
        %3748 = vmatprep.subr.mxu0 0.0
        %3749 = vmatpush1.msra.mxu0 %v3721
        %3750 = vmatprep.subr.mxu0 0.0
        %3751 = vmatpush1.msra.mxu0 %v3722
        %3752 = vmatprep.subr.mxu0 0.0
        %3753 = vmatpush1.msra.mxu0 %v3723
        %3754 = vmatprep.subr.mxu0 0.0
        %3755 = vmatpush1.msra.mxu0 %v3724
        %3756 = vmatprep.subr.mxu0 0.0
        %3757 = vmatpush1.msra.mxu0 %v3725
        %3758 = vmatprep.subr.mxu0 0.0
        %3759 = vmatpush1.msra.mxu0 %v3726
        %3760 = vmatprep.subr.mxu0 0.0
        %3761 = vmatpush1.msra.mxu0 %v3727
        %3762 = vmatprep.subr.mxu0 0.0
        %3763 = vmatpush1.msra.mxu0 0.0
        %3764 = vmatprep.subr.mxu0 0.0
        %3765 = vmatpush1.msra.mxu0 0.0
        %3766 = vmatprep.subr.mxu0 0.0
        %3767 = vmatpush1.msra.mxu0 0.0
        %3768 = vmatprep.subr.mxu0 0.0
        %3769 = vmatpush1.msra.mxu0 0.0
        %3770 = vmatprep.subr.mxu0 0.0
        %3771 = vmatpush1.msra.mxu0 0.0
        %3772 = vmatprep.subr.mxu0 0.0
        %3773 = vmatpush1.msra.mxu0 0.0
        %3774 = vmatprep.subr.mxu0 0.0
        %3775 = vmatpush1.msra.mxu0 0.0
        %3776 = vmatprep.subr.mxu0 0.0
        %3777 = vmatpush1.msra.mxu0 0.0
        %3778 = vmatprep.subr.mxu0 0.0
        %3779 = vmatpush1.msra.mxu0 0.0
        %3780 = vmatprep.subr.mxu0 0.0
        %3781 = vmatpush1.msra.mxu0 0.0
        %3782 = vmatprep.subr.mxu0 0.0
        %3783 = vmatpush1.msra.mxu0 0.0
        %3784 = vmatprep.subr.mxu0 0.0
        %3785 = vmatpush1.msra.mxu0 0.0
        %3786 = vmatprep.subr.mxu0 0.0
        %3787 = vmatpush1.msra.mxu0 0.0
        %3788 = vmatprep.subr.mxu0 0.0
        %3789 = vmatpush1.msra.mxu0 0.0
        %3790 = vmatprep.subr.mxu0 0.0
        %3791 = vmatpush1.msra.mxu0 0.0
        %3792 = vmatprep.subr.mxu0 0.0
        %3793 = vmatpush1.msra.mxu0 0.0
        %3794 = vmatprep.mubr.f32.mxu0 0.0
        %3795 = vmatmul.mubr.f32.gmra.mrb[0].mxu0 %v3728
        %v3796 = vpop.f32.mrb[0].mxu0
        %v3797 = vadd.f32 0.0, %v3796
        %v3798 = vpop.f32.mrb[0].mxu0
        %3799 = vdwg.mxu0
        %v3800 = vadd.f32 %v3710, %v3797
        %s3801 = scalar_lea.vmem [#allocation13], 512
        %v3802 = vld [vmem:[%s3801] sm:$0xff]
        %v3803 = vld [vmem:[%s3801 + $0x8] sm:$0xff]
        %v3804 = vld [vmem:[%s3801 + $0x10] sm:$0xff]
        %v3805 = vld [vmem:[%s3801 + $0x18] sm:$0xff]
        %v3806 = vld [vmem:[%s3801 + $0x20] sm:$0xff]
        %v3807 = vld [vmem:[%s3801 + $0x28] sm:$0xff]
        %v3808 = vld [vmem:[%s3801 + $0x30] sm:$0xff]
        %v3809 = vld [vmem:[%s3801 + $0x38] sm:$0xff]
        %v3810 = vld [vmem:[%s3801 + $0x40] sm:$0xff]
        %v3811 = vld [vmem:[%s3801 + $0x48] sm:$0xff]
        %v3812 = vld [vmem:[%s3801 + $0x50] sm:$0xff]
        %v3813 = vld [vmem:[%s3801 + $0x58] sm:$0xff]
        %v3814 = vld [vmem:[%s3801 + $0x60] sm:$0xff]
        %v3815 = vld [vmem:[%s3801 + $0x68] sm:$0xff]
        %v3816 = vld [vmem:[%s3801 + $0x70] sm:$0xff]
        %v3817 = vld [vmem:[%s3801 + $0x78] sm:$0xff]
        %v3818 = vrot.slane %v3444, 4
        %3820 = vmatprep.subr.mxu0 0.0
        %3821 = vmatpush1.msra.mxu0 %v3802
        %3822 = vmatprep.subr.mxu0 0.0
        %3823 = vmatpush1.msra.mxu0 %v3803
        %3824 = vmatprep.subr.mxu0 0.0
        %3825 = vmatpush1.msra.mxu0 %v3804
        %3826 = vmatprep.subr.mxu0 0.0
        %3827 = vmatpush1.msra.mxu0 %v3805
        %3828 = vmatprep.subr.mxu0 0.0
        %3829 = vmatpush1.msra.mxu0 %v3806
        %3830 = vmatprep.subr.mxu0 0.0
        %3831 = vmatpush1.msra.mxu0 %v3807
        %3832 = vmatprep.subr.mxu0 0.0
        %3833 = vmatpush1.msra.mxu0 %v3808
        %3834 = vmatprep.subr.mxu0 0.0
        %3835 = vmatpush1.msra.mxu0 %v3809
        %3836 = vmatprep.subr.mxu0 0.0
        %3837 = vmatpush1.msra.mxu0 %v3810
        %3838 = vmatprep.subr.mxu0 0.0
        %3839 = vmatpush1.msra.mxu0 %v3811
        %3840 = vmatprep.subr.mxu0 0.0
        %3841 = vmatpush1.msra.mxu0 %v3812
        %3842 = vmatprep.subr.mxu0 0.0
        %3843 = vmatpush1.msra.mxu0 %v3813
        %3844 = vmatprep.subr.mxu0 0.0
        %3845 = vmatpush1.msra.mxu0 %v3814
        %3846 = vmatprep.subr.mxu0 0.0
        %3847 = vmatpush1.msra.mxu0 %v3815
        %3848 = vmatprep.subr.mxu0 0.0
        %3849 = vmatpush1.msra.mxu0 %v3816
        %3850 = vmatprep.subr.mxu0 0.0
        %3851 = vmatpush1.msra.mxu0 %v3817
        %3852 = vmatprep.subr.mxu0 0.0
        %3853 = vmatpush1.msra.mxu0 0.0
        %3854 = vmatprep.subr.mxu0 0.0
        %3855 = vmatpush1.msra.mxu0 0.0
        %3856 = vmatprep.subr.mxu0 0.0
        %3857 = vmatpush1.msra.mxu0 0.0
        %3858 = vmatprep.subr.mxu0 0.0
        %3859 = vmatpush1.msra.mxu0 0.0
        %3860 = vmatprep.subr.mxu0 0.0
        %3861 = vmatpush1.msra.mxu0 0.0
        %3862 = vmatprep.subr.mxu0 0.0
        %3863 = vmatpush1.msra.mxu0 0.0
        %3864 = vmatprep.subr.mxu0 0.0
        %3865 = vmatpush1.msra.mxu0 0.0
        %3866 = vmatprep.subr.mxu0 0.0
        %3867 = vmatpush1.msra.mxu0 0.0
        %3868 = vmatprep.subr.mxu0 0.0
        %3869 = vmatpush1.msra.mxu0 0.0
        %3870 = vmatprep.subr.mxu0 0.0
        %3871 = vmatpush1.msra.mxu0 0.0
        %3872 = vmatprep.subr.mxu0 0.0
        %3873 = vmatpush1.msra.mxu0 0.0
        %3874 = vmatprep.subr.mxu0 0.0
        %3875 = vmatpush1.msra.mxu0 0.0
        %3876 = vmatprep.subr.mxu0 0.0
        %3877 = vmatpush1.msra.mxu0 0.0
        %3878 = vmatprep.subr.mxu0 0.0
        %3879 = vmatpush1.msra.mxu0 0.0
        %3880 = vmatprep.subr.mxu0 0.0
        %3881 = vmatpush1.msra.mxu0 0.0
        %3882 = vmatprep.subr.mxu0 0.0
        %3883 = vmatpush1.msra.mxu0 0.0
        %3884 = vmatprep.mubr.f32.mxu0 0.0
        %3885 = vmatmul.mubr.f32.gmra.mrb[0].mxu0 %v3818
        %v3886 = vpop.f32.mrb[0].mxu0
        %v3887 = vadd.f32 0.0, %v3886
        %v3888 = vpop.f32.mrb[0].mxu0
        %3889 = vdwg.mxu0
        %v3890 = vadd.f32 %v3800, %v3887
        %v3891 = vld [vmem:[#allocation14] sm:$0x1]
        %v3892 = vadd.f32 %v3890, %v3891
        %v3893 = vmax.f32 %v3892, 0.0
        %v3894 = vld [vmem:[#allocation16] sm:$0xff]
        %v3895 = vld [vmem:[#allocation16 + $0x8] sm:$0xff]
        %v3896 = vld [vmem:[#allocation16 + $0x10] sm:$0xff]
        %v3897 = vld [vmem:[#allocation16 + $0x18] sm:$0xff]
        %v3898 = vld [vmem:[#allocation16 + $0x20] sm:$0xff]
        %v3899 = vld [vmem:[#allocation16 + $0x28] sm:$0xff]
        %v3900 = vld [vmem:[#allocation16 + $0x30] sm:$0xff]
        %v3901 = vld [vmem:[#allocation16 + $0x38] sm:$0xff]
        %v3902 = vld [vmem:[#allocation16 + $0x40] sm:$0xff]
        %v3903 = vld [vmem:[#allocation16 + $0x48] sm:$0xff]
        %v3904 = vld [vmem:[#allocation16 + $0x50] sm:$0xff]
        %v3905 = vld [vmem:[#allocation16 + $0x58] sm:$0xff]
        %v3906 = vld [vmem:[#allocation16 + $0x60] sm:$0xff]
        %v3907 = vld [vmem:[#allocation16 + $0x68] sm:$0xff]
        %v3908 = vld [vmem:[#allocation16 + $0x70] sm:$0xff]
        %v3909 = vld [vmem:[#allocation16 + $0x78] sm:$0xff]
        %v3910 = vld [vmem:[#allocation17] sm:$0x1]
        %3911 = vmatprep.subr.mxu0 0.0
        %3912 = vmatpush1.msra.mxu0 %v3894
        %3913 = vmatprep.subr.mxu0 0.0
        %3914 = vmatpush1.msra.mxu0 %v3895
        %3915 = vmatprep.subr.mxu0 0.0
        %3916 = vmatpush1.msra.mxu0 %v3896
        %3917 = vmatprep.subr.mxu0 0.0
        %3918 = vmatpush1.msra.mxu0 %v3897
        %3919 = vmatprep.subr.mxu0 0.0
        %3920 = vmatpush1.msra.mxu0 %v3898
        %3921 = vmatprep.subr.mxu0 0.0
        %3922 = vmatpush1.msra.mxu0 %v3899
        %3923 = vmatprep.subr.mxu0 0.0
        %3924 = vmatpush1.msra.mxu0 %v3900
        %3925 = vmatprep.subr.mxu0 0.0
        %3926 = vmatpush1.msra.mxu0 %v3901
        %3927 = vmatprep.subr.mxu0 0.0
        %3928 = vmatpush1.msra.mxu0 %v3902
        %3929 = vmatprep.subr.mxu0 0.0
        %3930 = vmatpush1.msra.mxu0 %v3903
        %3931 = vmatprep.subr.mxu0 0.0
        %3932 = vmatpush1.msra.mxu0 %v3904
        %3933 = vmatprep.subr.mxu0 0.0
        %3934 = vmatpush1.msra.mxu0 %v3905
        %3935 = vmatprep.subr.mxu0 0.0
        %3936 = vmatpush1.msra.mxu0 %v3906
        %3937 = vmatprep.subr.mxu0 0.0
        %3938 = vmatpush1.msra.mxu0 %v3907
        %3939 = vmatprep.subr.mxu0 0.0
        %3940 = vmatpush1.msra.mxu0 %v3908
        %3941 = vmatprep.subr.mxu0 0.0
        %3942 = vmatpush1.msra.mxu0 %v3909
        %3943 = vmatprep.subr.mxu0 0.0
        %3944 = vmatpush1.msra.mxu0 0.0
        %3945 = vmatprep.subr.mxu0 0.0
        %3946 = vmatpush1.msra.mxu0 0.0
        %3947 = vmatprep.subr.mxu0 0.0
        %3948 = vmatpush1.msra.mxu0 0.0
        %3949 = vmatprep.subr.mxu0 0.0
        %3950 = vmatpush1.msra.mxu0 0.0
        %3951 = vmatprep.subr.mxu0 0.0
        %3952 = vmatpush1.msra.mxu0 0.0
        %3953 = vmatprep.subr.mxu0 0.0
        %3954 = vmatpush1.msra.mxu0 0.0
        %3955 = vmatprep.subr.mxu0 0.0
        %3956 = vmatpush1.msra.mxu0 0.0
        %3957 = vmatprep.subr.mxu0 0.0
        %3958 = vmatpush1.msra.mxu0 0.0
        %3959 = vmatprep.subr.mxu0 0.0
        %3960 = vmatpush1.msra.mxu0 0.0
        %3961 = vmatprep.subr.mxu0 0.0
        %3962 = vmatpush1.msra.mxu0 0.0
        %3963 = vmatprep.subr.mxu0 0.0
        %3964 = vmatpush1.msra.mxu0 0.0
        %3965 = vmatprep.subr.mxu0 0.0
        %3966 = vmatpush1.msra.mxu0 0.0
        %3967 = vmatprep.subr.mxu0 0.0
        %3968 = vmatpush1.msra.mxu0 0.0
        %3969 = vmatprep.subr.mxu0 0.0
        %3970 = vmatpush1.msra.mxu0 0.0
        %3971 = vmatprep.subr.mxu0 0.0
        %3972 = vmatpush1.msra.mxu0 0.0
        %3973 = vmatprep.subr.mxu0 0.0
        %3974 = vmatpush1.msra.mxu0 0.0
        %3975 = vmatprep.mubr.f32.mxu0 0.0
        %3976 = vmatmul.mubr.f32.gmra.mrb[0].mxu0 %v3893
        %v3977 = vpop.f32.mrb[0].mxu0
        %v3978 = vadd.f32 %v3910, %v3977
        %v3979 = vpop.f32.mrb[0].mxu0
        %3980 = vdwg.mxu0
        %v3981 = vmax.f32 %v3978, 0.0
        %v3982 = vld [vmem:[#allocation19] sm:$0xff]
        %v3983 = vld [vmem:[#allocation19 + $0x8] sm:$0xff]
        %v3984 = vld [vmem:[#allocation19 + $0x10] sm:$0xff]
        %v3985 = vld [vmem:[#allocation19 + $0x18] sm:$0xff]
        %v3986 = vld [vmem:[#allocation19 + $0x20] sm:$0xff]
        %v3987 = vld [vmem:[#allocation19 + $0x28] sm:$0xff]
        %v3988 = vld [vmem:[#allocation19 + $0x30] sm:$0xff]
        %v3989 = vld [vmem:[#allocation19 + $0x38] sm:$0xff]
        %v3990 = vld [vmem:[#allocation19 + $0x40] sm:$0xff]
        %v3991 = vld [vmem:[#allocation19 + $0x48] sm:$0xff]
        %v3992 = vld [vmem:[#allocation19 + $0x50] sm:$0xff]
        %v3993 = vld [vmem:[#allocation19 + $0x58] sm:$0xff]
        %v3994 = vld [vmem:[#allocation19 + $0x60] sm:$0xff]
        %v3995 = vld [vmem:[#allocation19 + $0x68] sm:$0xff]
        %v3996 = vld [vmem:[#allocation19 + $0x70] sm:$0xff]
        %v3997 = vld [vmem:[#allocation19 + $0x78] sm:$0xff]
        %v3998 = vld [vmem:[#allocation20] sm:$0x1]
        %3999 = vmatprep.subr.mxu0 0.0
        %4000 = vmatpush1.msra.mxu0 %v3982
        %4001 = vmatprep.subr.mxu0 0.0
        %4002 = vmatpush1.msra.mxu0 %v3983
        %4003 = vmatprep.subr.mxu0 0.0
        %4004 = vmatpush1.msra.mxu0 %v3984
        %4005 = vmatprep.subr.mxu0 0.0
        %4006 = vmatpush1.msra.mxu0 %v3985
        %4007 = vmatprep.subr.mxu0 0.0
        %4008 = vmatpush1.msra.mxu0 %v3986
        %4009 = vmatprep.subr.mxu0 0.0
        %4010 = vmatpush1.msra.mxu0 %v3987
        %4011 = vmatprep.subr.mxu0 0.0
        %4012 = vmatpush1.msra.mxu0 %v3988
        %4013 = vmatprep.subr.mxu0 0.0
        %4014 = vmatpush1.msra.mxu0 %v3989
        %4015 = vmatprep.subr.mxu0 0.0
        %4016 = vmatpush1.msra.mxu0 %v3990
        %4017 = vmatprep.subr.mxu0 0.0
        %4018 = vmatpush1.msra.mxu0 %v3991
        %4019 = vmatprep.subr.mxu0 0.0
        %4020 = vmatpush1.msra.mxu0 %v3992
        %4021 = vmatprep.subr.mxu0 0.0
        %4022 = vmatpush1.msra.mxu0 %v3993
        %4023 = vmatprep.subr.mxu0 0.0
        %4024 = vmatpush1.msra.mxu0 %v3994
        %4025 = vmatprep.subr.mxu0 0.0
        %4026 = vmatpush1.msra.mxu0 %v3995
        %4027 = vmatprep.subr.mxu0 0.0
        %4028 = vmatpush1.msra.mxu0 %v3996
        %4029 = vmatprep.subr.mxu0 0.0
        %4030 = vmatpush1.msra.mxu0 %v3997
        %4031 = vmatprep.subr.mxu0 0.0
        %4032 = vmatpush1.msra.mxu0 0.0
        %4033 = vmatprep.subr.mxu0 0.0
        %4034 = vmatpush1.msra.mxu0 0.0
        %4035 = vmatprep.subr.mxu0 0.0
        %4036 = vmatpush1.msra.mxu0 0.0
        %4037 = vmatprep.subr.mxu0 0.0
        %4038 = vmatpush1.msra.mxu0 0.0
        %4039 = vmatprep.subr.mxu0 0.0
        %4040 = vmatpush1.msra.mxu0 0.0
        %4041 = vmatprep.subr.mxu0 0.0
        %4042 = vmatpush1.msra.mxu0 0.0
        %4043 = vmatprep.subr.mxu0 0.0
        %4044 = vmatpush1.msra.mxu0 0.0
        %4045 = vmatprep.subr.mxu0 0.0
        %4046 = vmatpush1.msra.mxu0 0.0
        %4047 = vmatprep.subr.mxu0 0.0
        %4048 = vmatpush1.msra.mxu0 0.0
        %4049 = vmatprep.subr.mxu0 0.0
        %4050 = vmatpush1.msra.mxu0 0.0
        %4051 = vmatprep.subr.mxu0 0.0
        %4052 = vmatpush1.msra.mxu0 0.0
        %4053 = vmatprep.subr.mxu0 0.0
        %4054 = vmatpush1.msra.mxu0 0.0
        %4055 = vmatprep.subr.mxu0 0.0
        %4056 = vmatpush1.msra.mxu0 0.0
        %4057 = vmatprep.subr.mxu0 0.0
        %4058 = vmatpush1.msra.mxu0 0.0
        %4059 = vmatprep.subr.mxu0 0.0
        %4060 = vmatpush1.msra.mxu0 0.0
        %4061 = vmatprep.subr.mxu0 0.0
        %4062 = vmatpush1.msra.mxu0 0.0
        %4063 = vmatprep.mubr.f32.mxu0 0.0
        %4064 = vmatmul.mubr.f32.gmra.mrb[0].mxu0 %v3981
        %v4065 = vpop.f32.mrb[0].mxu0
        %v4066 = vadd.f32 %v3998, %v4065
        %v4067 = vpop.f32.mrb[0].mxu0
        %4068 = vdwg.mxu0
        %4069 = vst [vmem:[%s661] sm:$0x1] %v4066
        %s4070 = sand.u32 %s366, 1
        %s4071 = scalar_lea.sflag [#allocation4], %s4070
        %s4072 = sand.u32 %s366, 1
        %s4073 = scalar_lea.vmem [#allocation22], %s4072
        // Predicated region
        $region129: #{net_forward.1} parent=79 // pred_check
          %p4074 = pneg %p376
        $region130: #{net_forward.1} parent=79 // pred_check_branch
          %4076 = sbr.rel (%p4074) target = $region132
        $region131: #{net_forward.1} parent=79 // pred_region
          %s4078 = ssub.s32 16, 16
          %4079 = vsyncadd %s4071, %s4078
          %s4080 = smul.addr %s38, 16
          %s4081 = scalar_lea.hbm %s15, %s4080
          %s4083 = sshll.u32 %s4073, 4
          %s4084 = int_to_ptr.vmem [resolvable:$true] %s4083
          %4086 = dma.vmem_to_hbm [thread:$0]  %s4084, 16, %s4081, %s4071
        $region132: #{net_forward.1} parent=79 // pred_fallthru
          _
      $region80: #{net_forward.1} parent=5 // pred_fallthru
        _
      %p4087 = scmp.le.s32.totalorder 2, %s33
      // Predicated region
      $region133: #{net_forward.1} parent=5 // pred_check
        %p4088 = pneg %p4087
      $region134: #{net_forward.1} parent=5 // pred_check_branch
        %4090 = sbr.rel (%p4088) target = $region136
      $region135: #{net_forward.1} parent=5 // pred_region
        %s4091 = ssub.s32 %s33, 2
        // Predicated region
        $region137: #{net_forward.1} parent=135 // pred_check
          %p4092 = pneg %p382
        $region138: #{net_forward.1} parent=135 // pred_check_branch
          %4094 = sbr.rel (%p4092) target = $region140
        $region139: #{net_forward.1} parent=135 // pred_region
          %s4095 = sand.u32 %s367, 1
          %s4096 = scalar_lea.sflag [#allocation4], %s4095
          %s4097 = sand.u32 %s367, 1
          %s4098 = scalar_lea.vmem [#allocation22], %s4097
          %4099 = dma.done %s4096, 16
        $region140: #{net_forward.1} parent=135 // pred_fallthru
          _
      $region136: #{net_forward.1} parent=5 // pred_fallthru
        _
    $region6: #{net_forward.1} parent=1 // loop_footer
      %s37 = sadd.s32 1, %s33
    $region7: #{net_forward.1} parent=1 // loop_footer_branch
      %32 = sbr.rel target = $region3
    $region8: #{net_forward.1} parent=1 // loop_exit
      _
    %4100 = vsyncpa [#allocation3], 1
    %s4101 = scalar_lea.sflag [#allocation3], 1
    %4102 = vsyncpa %s4101, 1
    %4103 = vsyncpa [#allocation6], 1
    %4104 = vsyncpa [#allocation9], 1
    %4105 = vsyncpa [#allocation12], 1
    %4106 = vsyncpa [#allocation15], 1
    %4107 = vsyncpa [#allocation18], 1
    %4108 = vsyncpa [#allocation21], 1
    %4109 = vsyncpa [#allocation4], 1
    %s4110 = scalar_lea.sflag [#allocation4], 1
    %4111 = vsyncpa %s4110, 1

</llo_original>
